<compile_context>
chip_gen: v7x
topology: tpu7x:2x2x1
jax: 0.10.0
libtpu: 0.0.40
codegen_flags: <defaults>
</compile_context>

<pallas_src>
import math
import numpy as np
import jax
import jax.numpy as jnp
from jax import lax
from jax.experimental import pallas as pl
from jax.experimental.pallas import tpu as pltpu


# ----------------------------------------------------------------------------
# Fused Pallas kernel: L stacked LSTM layers + output Linear, all in VMEM.
# ----------------------------------------------------------------------------
def make_fused_rnn_kernel(S, B, E, H, V, L):
    """Builds a kernel operating on a time-major flattened input (S*B, E).

    Ref layout (positional):
      in : x2d, (wih_T, whh_T, b)*L, wout_T, bout
      out: out2d (S*B, V), h_n (L, B, H), c_n (L, B, H)
      scr: gx (S*B, 4H), y (S*B, H)
    Weight gate order is (i, f, o, g)  [reordered host-side from PyTorch's
    (i, f, g, o)] so sigmoid applies to one contiguous [:, :3H] slab.
    """

    def kernel(*refs):
        x_ref = refs[0]
        layer_refs = [(refs[1 + 3 * l], refs[2 + 3 * l], refs[3 + 3 * l])
                      for l in range(L)]
        wout_ref = refs[1 + 3 * L]
        bout_ref = refs[2 + 3 * L]
        out_ref = refs[3 + 3 * L]
        h_out_ref = refs[4 + 3 * L]
        c_out_ref = refs[5 + 3 * L]
        gx_scr = refs[6 + 3 * L]
        y_scr = refs[7 + 3 * L]

        cur = x_ref[...]                                     # (S*B, Din)

        for l, (wih_ref, whh_ref, b_ref) in enumerate(layer_refs):
            # Hoisted input projection for ALL timesteps: one big MXU call.
            gx_scr[...] = (jnp.dot(cur, wih_ref[...],
                                   preferred_element_type=jnp.float32)
                           + b_ref[...])                     # (S*B, 4H)

            # Recurrent state lives in vregs (1 vreg each at B=8, H=128).
            h = jnp.zeros((B, H), jnp.float32)
            c = jnp.zeros((B, H), jnp.float32)

            # Statically unrolled recurrence: only h @ Whh^T per step.
            for t in range(S):
                gates = (gx_scr[t * B:(t + 1) * B, :]
                         + jnp.dot(h, whh_ref[...],
                                   preferred_element_type=jnp.float32))
                sig = jax.nn.sigmoid(gates[:, :3 * H])       # i, f, o together
                i_g = sig[:, 0 * H:1 * H]
                f_g = sig[:, 1 * H:2 * H]
                o_g = sig[:, 2 * H:3 * H]
                g_g = jnp.tanh(gates[:, 3 * H:4 * H])
                c = f_g * c + i_g * g_g
                h = o_g * jnp.tanh(c)
                y_scr[t * B:(t + 1) * B, :] = h              # lane-dense store

            h_out_ref[l, :, :] = h
            c_out_ref[l, :, :] = c
            cur = y_scr[...]                                 # next layer input

        # Output projection fused in: (S*B, H) @ (H, V) + b.
        out_ref[...] = (jnp.dot(cur, wout_ref[...],
                                preferred_element_type=jnp.float32)
                        + bout_ref[...])

    return kernel


def fused_rnn_call(x2d, prepared_lstm, wout_t, bout_row, *, S, B, H, V):
    L = len(prepared_lstm)
    E = x2d.shape[1]
    kernel = make_fused_rnn_kernel(S, B, E, H, V, L)

    args = [x2d]
    for (wih_t, whh_t, b_row) in prepared_lstm:
        args += [wih_t, whh_t, b_row]
    args += [wout_t, bout_row]

    return pl.pallas_call(
        kernel,
        out_shape=(jax.ShapeDtypeStruct((S * B, V), jnp.float32),
                   jax.ShapeDtypeStruct((L, B, H), jnp.float32),
                   jax.ShapeDtypeStruct((L, B, H), jnp.float32)),
        scratch_shapes=[pltpu.VMEM((S * B, 4 * H), jnp.float32),   # gates_x
                        pltpu.VMEM((S * B, H), jnp.float32)],      # inter-layer y
    )(*args)


# ----------------------------------------------------------------------------
# Host-side parameter preparation (done ONCE, not per forward call).
# ----------------------------------------------------------------------------
def _reorder_gates(w4h, H):
    """Permute the 4H gate axis from PyTorch (i,f,g,o) to (i,f,o,g)."""
    i, f, g, o = jnp.split(w4h, 4, axis=0)
    return jnp.concatenate([i, f, o, g], axis=0)


def prepare_params(lstm_params, w_out, b_out):
    """lstm_params: list of (W_ih (4H,Din), W_hh (4H,H), b (4H,)) PyTorch layout."""
    prepared = []
    for (wih, whh, b) in lstm_params:
        H = whh.shape[1]
        wih_t = _reorder_gates(wih, H).T          # (Din, 4H), gate order i,f,o,g
        whh_t = _reorder_gates(whh, H).T          # (H, 4H)
        b_row = _reorder_gates(b, H).reshape(1, -1)
        prepared.append((wih_t, whh_t, b_row))
    return prepared, w_out.T, b_out.reshape(1, -1)


# ----------------------------------------------------------------------------
# Forward (equivalent of RNN.forward((tokens,)) with default flags).
# ----------------------------------------------------------------------------
def rnn_forward(tokens, emb_table, prepared_lstm, wout_t, bout_row):
    B, S = tokens.shape
    E = emb_table.shape[1]
    H = prepared_lstm[0][1].shape[0]
    V = wout_t.shape[1]

    # Embedding gather directly in time-major order → (S, B, E), flattened to a
    # lane-dense (S*B, E) slab; no separate transpose op on the activations.
    x2d = emb_table[tokens.T].reshape(S * B, E)

    out2d, h_n, c_n = fused_rnn_call(x2d, prepared_lstm, wout_t, bout_row,
                                     S=S, B=B, H=H, V=V)

    out = out2d.reshape(S, B, V).transpose(1, 0, 2)   # (B, S, V)
    return (h_n, c_n), out


# ----------------------------------------------------------------------------
# Pure-JAX reference (PyTorch gate order, un-permuted weights).
# ----------------------------------------------------------------------------
def rnn_reference(tokens, emb_table, lstm_params, w_out, b_out):
    x = emb_table[tokens]                          # (B, S, E)
    B, S, _ = x.shape
    H = lstm_params[0][1].shape[1]
    inp = x
    hs, cs = [], []
    for (wih, whh, b) in lstm_params:
        h = jnp.zeros((B, H), jnp.float32)
        c = jnp.zeros((B, H), jnp.float32)
        ys = []
        for t in range(S):
            g = inp[:, t, :] @ wih.T + h @ whh.T + b
            i_g = jax.nn.sigmoid(g[:, 0 * H:1 * H])
            f_g = jax.nn.sigmoid(g[:, 1 * H:2 * H])
            g_g = jnp.tanh(g[:, 2 * H:3 * H])
            o_g = jax.nn.sigmoid(g[:, 3 * H:4 * H])
            c = f_g * c + i_g * g_g
            h = o_g * jnp.tanh(c)
            ys.append(h)
        inp = jnp.stack(ys, axis=1)
        hs.append(h)
        cs.append(c)
    out = inp.reshape(B * S, H) @ w_out.T + b_out
    return (jnp.stack(hs), jnp.stack(cs)), out.reshape(B, S, -1)


# ----------------------------------------------------------------------------
if __name__ == "__main__":
    B, S = 8, 8
    E, H, V, L = 32, 128, 128, 2          # embed, hidden, voc, num_layers
    PAD = 0

    key = jax.random.PRNGKey(0)
    keys = jax.random.split(key, 16)
    k = 1.0 / math.sqrt(H)

    # Embedding table (padding_idx row zeroed, as nn.Embedding does).
    emb_table = jax.random.normal(keys[0], (V, E), jnp.float32)
    emb_table = emb_table.at[PAD].set(0.0)

    # LSTM parameters, PyTorch layout W_ih:(4H,Din), W_hh:(4H,H), biases:(4H,)
    lstm_params = []
    for l in range(L):
        Din = E if l == 0 else H
        wih = jax.random.uniform(keys[1 + 4 * l], (4 * H, Din),
                                 jnp.float32, -k, k)
        whh = jax.random.uniform(keys[2 + 4 * l], (4 * H, H),
                                 jnp.float32, -k, k)
        bih = jax.random.uniform(keys[3 + 4 * l], (4 * H,), jnp.float32, -k, k)
        bhh = jax.random.uniform(keys[4 + 4 * l], (4 * H,), jnp.float32, -k, k)
        lstm_params.append((wih, whh, bih + bhh))

    # Output projection Linear(H -> V).
    w_out = jax.random.uniform(keys[10], (V, H), jnp.float32, -k, k)
    b_out = jax.random.uniform(keys[11], (V,), jnp.float32, -k, k)

    # Token ids (B, S), avoiding the padding index.
    tokens = jax.random.randint(keys[12], (B, S), 1, V, dtype=jnp.int32)

    # Canonical (pre-transposed / gate-reordered) parameter layout, built once.
    prepared_lstm, wout_t, bout_row = prepare_params(lstm_params, w_out, b_out)

    fwd = jax.jit(lambda toks: rnn_forward(toks, emb_table, prepared_lstm,
                                           wout_t, bout_row))
    (h_n, c_n), out = fwd(tokens)
    jax.block_until_ready(out)

    (h_ref, c_ref), out_ref = rnn_reference(tokens, emb_table, lstm_params,
                                            w_out, b_out)

    np.testing.assert_allclose(np.asarray(out), np.asarray(out_ref),
                               rtol=1e-4, atol=1e-4)
    np.testing.assert_allclose(np.asarray(h_n), np.asarray(h_ref),
                               rtol=1e-4, atol=1e-4)
    np.testing.assert_allclose(np.asarray(c_n), np.asarray(c_ref),
                               rtol=1e-4, atol=1e-4)

    assert out.shape == (B, S, V) and h_n.shape == (L, B, H)
    print("KERNEL_OK")
</pallas_src>

<mosaic_0001>
module attributes {stable_mosaic.version = 11 : i64} {
  func.func @kernel(%arg0: memref<64x32xf32, #tpu.memory_space<vmem>>, %arg1: memref<32x512xf32, #tpu.memory_space<vmem>>, %arg2: memref<128x512xf32, #tpu.memory_space<vmem>>, %arg3: memref<1x512xf32, #tpu.memory_space<vmem>>, %arg4: memref<128x512xf32, #tpu.memory_space<vmem>>, %arg5: memref<128x512xf32, #tpu.memory_space<vmem>>, %arg6: memref<1x512xf32, #tpu.memory_space<vmem>>, %arg7: memref<128x128xf32, #tpu.memory_space<vmem>>, %arg8: memref<1x128xf32, #tpu.memory_space<vmem>>, %arg9: memref<64x128xf32, #tpu.memory_space<vmem>>, %arg10: memref<2x8x128xf32, #tpu.memory_space<vmem>>, %arg11: memref<2x8x128xf32, #tpu.memory_space<vmem>>, %arg12: memref<64x512xf32, #tpu.memory_space<vmem>>, %arg13: memref<64x128xf32, #tpu.memory_space<vmem>>) attributes {dimension_semantics = [], scalar_prefetch = 0 : i64, scratch_operands = 2 : i64, tpu.core_type = #tpu.core_type<tc>} {
    %c0 = arith.constant 0 : index
    %c0_0 = arith.constant 0 : index
    %0 = vector.load %arg0[%c0, %c0_0] : memref<64x32xf32, #tpu.memory_space<vmem>>, vector<64x32xf32>
    %c0_1 = arith.constant 0 : index
    %c0_2 = arith.constant 0 : index
    %1 = vector.load %arg1[%c0_1, %c0_2] : memref<32x512xf32, #tpu.memory_space<vmem>>, vector<32x512xf32>
    %cst = arith.constant dense<0.000000e+00> : vector<64x512xf32>
    %2 = tpu.matmul %0, %1, %cst {dimension_numbers = #tpu.dot_dimension_numbers<[1], [0], [0], [1], [0, 0, 1, 1], [], []>} : vector<64x32xf32>, vector<32x512xf32>, vector<64x512xf32> -> vector<64x512xf32>
    %c0_3 = arith.constant 0 : index
    %c0_4 = arith.constant 0 : index
    %3 = vector.load %arg3[%c0_3, %c0_4] : memref<1x512xf32, #tpu.memory_space<vmem>>, vector<1x512xf32>
    %4 = vector.broadcast %3 : vector<1x512xf32> to vector<64x512xf32>
    %5 = arith.addf %2, %4 : vector<64x512xf32>
    %c0_5 = arith.constant 0 : index
    %c0_6 = arith.constant 0 : index
    %6 = vector.load %arg12[%c0_5, %c0_6] : memref<64x512xf32, #tpu.memory_space<vmem>>, vector<64x512xf32>
    tpu.vector_store %arg12[%c0_5, %c0_6], %5 {strides = array<i32>} : memref<64x512xf32, #tpu.memory_space<vmem>>, vector<64x512xf32>,
    %cst_7 = arith.constant 0.000000e+00 : f32
    %7 = vector.broadcast %cst_7 : f32 to vector<8x128xf32>
    %cst_8 = arith.constant 0.000000e+00 : f32
    %8 = vector.broadcast %cst_8 : f32 to vector<8x128xf32>
    %c0_9 = arith.constant 0 : index
    %c0_10 = arith.constant 0 : index
    %9 = vector.load %arg12[%c0_9, %c0_10] : memref<64x512xf32, #tpu.memory_space<vmem>>, vector<8x512xf32>
    %c0_11 = arith.constant 0 : index
    %c0_12 = arith.constant 0 : index
    %10 = vector.load %arg2[%c0_11, %c0_12] : memref<128x512xf32, #tpu.memory_space<vmem>>, vector<128x512xf32>
    %cst_13 = arith.constant dense<0.000000e+00> : vector<8x512xf32>
    %11 = tpu.matmul %7, %10, %cst_13 {dimension_numbers = #tpu.dot_dimension_numbers<[1], [0], [0], [1], [0, 0, 1, 1], [], []>} : vector<8x128xf32>, vector<128x512xf32>, vector<8x512xf32> -> vector<8x512xf32>
    %12 = arith.addf %9, %11 : vector<8x512xf32>
    %13 = vector.extract_strided_slice %12 {offsets = [0, 0], sizes = [8, 384], strides = [1, 1]} : vector<8x512xf32> to vector<8x384xf32>
    %14 = arith.negf %13 : vector<8x384xf32>
    %15 = math.exp %14 : vector<8x384xf32>
    %cst_14 = arith.constant 1.000000e+00 : f32
    %16 = vector.broadcast %cst_14 : f32 to vector<8x384xf32>
    %17 = arith.addf %16, %15 : vector<8x384xf32>
    %18 = arith.divf %16, %17 : vector<8x384xf32>
    %19 = vector.extract_strided_slice %18 {offsets = [0, 0], sizes = [8, 128], strides = [1, 1]} : vector<8x384xf32> to vector<8x128xf32>
    %20 = vector.extract_strided_slice %18 {offsets = [0, 128], sizes = [8, 128], strides = [1, 1]} : vector<8x384xf32> to vector<8x128xf32>
    %21 = vector.extract_strided_slice %18 {offsets = [0, 256], sizes = [8, 128], strides = [1, 1]} : vector<8x384xf32> to vector<8x128xf32>
    %22 = vector.extract_strided_slice %12 {offsets = [0, 384], sizes = [8, 128], strides = [1, 1]} : vector<8x512xf32> to vector<8x128xf32>
    %23 = math.tanh %22 : vector<8x128xf32>
    %24 = arith.mulf %20, %8 : vector<8x128xf32>
    %25 = arith.mulf %19, %23 : vector<8x128xf32>
    %26 = arith.addf %24, %25 : vector<8x128xf32>
    %27 = math.tanh %26 : vector<8x128xf32>
    %28 = arith.mulf %21, %27 : vector<8x128xf32>
    %c0_15 = arith.constant 0 : index
    %c0_16 = arith.constant 0 : index
    %29 = vector.load %arg13[%c0_15, %c0_16] : memref<64x128xf32, #tpu.memory_space<vmem>>, vector<8x128xf32>
    tpu.vector_store %arg13[%c0_15, %c0_16], %28 {strides = array<i32>} : memref<64x128xf32, #tpu.memory_space<vmem>>, vector<8x128xf32>,
    %c8 = arith.constant 8 : index
    %c0_17 = arith.constant 0 : index
    %30 = vector.load %arg12[%c8, %c0_17] : memref<64x512xf32, #tpu.memory_space<vmem>>, vector<8x512xf32>
    %c0_18 = arith.constant 0 : index
    %c0_19 = arith.constant 0 : index
    %31 = vector.load %arg2[%c0_18, %c0_19] : memref<128x512xf32, #tpu.memory_space<vmem>>, vector<128x512xf32>
    %cst_20 = arith.constant dense<0.000000e+00> : vector<8x512xf32>
    %32 = tpu.matmul %28, %31, %cst_20 {dimension_numbers = #tpu.dot_dimension_numbers<[1], [0], [0], [1], [0, 0, 1, 1], [], []>} : vector<8x128xf32>, vector<128x512xf32>, vector<8x512xf32> -> vector<8x512xf32>
    %33 = arith.addf %30, %32 : vector<8x512xf32>
    %34 = vector.extract_strided_slice %33 {offsets = [0, 0], sizes = [8, 384], strides = [1, 1]} : vector<8x512xf32> to vector<8x384xf32>
    %35 = arith.negf %34 : vector<8x384xf32>
    %36 = math.exp %35 : vector<8x384xf32>
    %cst_21 = arith.constant 1.000000e+00 : f32
    %37 = vector.broadcast %cst_21 : f32 to vector<8x384xf32>
    %38 = arith.addf %37, %36 : vector<8x384xf32>
    %39 = arith.divf %37, %38 : vector<8x384xf32>
    %40 = vector.extract_strided_slice %39 {offsets = [0, 0], sizes = [8, 128], strides = [1, 1]} : vector<8x384xf32> to vector<8x128xf32>
    %41 = vector.extract_strided_slice %39 {offsets = [0, 128], sizes = [8, 128], strides = [1, 1]} : vector<8x384xf32> to vector<8x128xf32>
    %42 = vector.extract_strided_slice %39 {offsets = [0, 256], sizes = [8, 128], strides = [1, 1]} : vector<8x384xf32> to vector<8x128xf32>
    %43 = vector.extract_strided_slice %33 {offsets = [0, 384], sizes = [8, 128], strides = [1, 1]} : vector<8x512xf32> to vector<8x128xf32>
    %44 = math.tanh %43 : vector<8x128xf32>
    %45 = arith.mulf %41, %26 : vector<8x128xf32>
    %46 = arith.mulf %40, %44 : vector<8x128xf32>
    %47 = arith.addf %45, %46 : vector<8x128xf32>
    %48 = math.tanh %47 : vector<8x128xf32>
    %49 = arith.mulf %42, %48 : vector<8x128xf32>
    %c8_22 = arith.constant 8 : index
    %c0_23 = arith.constant 0 : index
    %50 = vector.load %arg13[%c8_22, %c0_23] : memref<64x128xf32, #tpu.memory_space<vmem>>, vector<8x128xf32>
    tpu.vector_store %arg13[%c8_22, %c0_23], %49 {strides = array<i32>} : memref<64x128xf32, #tpu.memory_space<vmem>>, vector<8x128xf32>,
    %c16 = arith.constant 16 : index
    %c0_24 = arith.constant 0 : index
    %51 = vector.load %arg12[%c16, %c0_24] : memref<64x512xf32, #tpu.memory_space<vmem>>, vector<8x512xf32>
    %c0_25 = arith.constant 0 : index
    %c0_26 = arith.constant 0 : index
    %52 = vector.load %arg2[%c0_25, %c0_26] : memref<128x512xf32, #tpu.memory_space<vmem>>, vector<128x512xf32>
    %cst_27 = arith.constant dense<0.000000e+00> : vector<8x512xf32>
    %53 = tpu.matmul %49, %52, %cst_27 {dimension_numbers = #tpu.dot_dimension_numbers<[1], [0], [0], [1], [0, 0, 1, 1], [], []>} : vector<8x128xf32>, vector<128x512xf32>, vector<8x512xf32> -> vector<8x512xf32>
    %54 = arith.addf %51, %53 : vector<8x512xf32>
    %55 = vector.extract_strided_slice %54 {offsets = [0, 0], sizes = [8, 384], strides = [1, 1]} : vector<8x512xf32> to vector<8x384xf32>
    %56 = arith.negf %55 : vector<8x384xf32>
    %57 = math.exp %56 : vector<8x384xf32>
    %cst_28 = arith.constant 1.000000e+00 : f32
    %58 = vector.broadcast %cst_28 : f32 to vector<8x384xf32>
    %59 = arith.addf %58, %57 : vector<8x384xf32>
    %60 = arith.divf %58, %59 : vector<8x384xf32>
    %61 = vector.extract_strided_slice %60 {offsets = [0, 0], sizes = [8, 128], strides = [1, 1]} : vector<8x384xf32> to vector<8x128xf32>
    %62 = vector.extract_strided_slice %60 {offsets = [0, 128], sizes = [8, 128], strides = [1, 1]} : vector<8x384xf32> to vector<8x128xf32>
    %63 = vector.extract_strided_slice %60 {offsets = [0, 256], sizes = [8, 128], strides = [1, 1]} : vector<8x384xf32> to vector<8x128xf32>
    %64 = vector.extract_strided_slice %54 {offsets = [0, 384], sizes = [8, 128], strides = [1, 1]} : vector<8x512xf32> to vector<8x128xf32>
    %65 = math.tanh %64 : vector<8x128xf32>
    %66 = arith.mulf %62, %47 : vector<8x128xf32>
    %67 = arith.mulf %61, %65 : vector<8x128xf32>
    %68 = arith.addf %66, %67 : vector<8x128xf32>
    %69 = math.tanh %68 : vector<8x128xf32>
    %70 = arith.mulf %63, %69 : vector<8x128xf32>
    %c16_29 = arith.constant 16 : index
    %c0_30 = arith.constant 0 : index
    %71 = vector.load %arg13[%c16_29, %c0_30] : memref<64x128xf32, #tpu.memory_space<vmem>>, vector<8x128xf32>
    tpu.vector_store %arg13[%c16_29, %c0_30], %70 {strides = array<i32>} : memref<64x128xf32, #tpu.memory_space<vmem>>, vector<8x128xf32>,
    %c24 = arith.constant 24 : index
    %c0_31 = arith.constant 0 : index
    %72 = vector.load %arg12[%c24, %c0_31] : memref<64x512xf32, #tpu.memory_space<vmem>>, vector<8x512xf32>
    %c0_32 = arith.constant 0 : index
    %c0_33 = arith.constant 0 : index
    %73 = vector.load %arg2[%c0_32, %c0_33] : memref<128x512xf32, #tpu.memory_space<vmem>>, vector<128x512xf32>
    %cst_34 = arith.constant dense<0.000000e+00> : vector<8x512xf32>
    %74 = tpu.matmul %70, %73, %cst_34 {dimension_numbers = #tpu.dot_dimension_numbers<[1], [0], [0], [1], [0, 0, 1, 1], [], []>} : vector<8x128xf32>, vector<128x512xf32>, vector<8x512xf32> -> vector<8x512xf32>
    %75 = arith.addf %72, %74 : vector<8x512xf32>
    %76 = vector.extract_strided_slice %75 {offsets = [0, 0], sizes = [8, 384], strides = [1, 1]} : vector<8x512xf32> to vector<8x384xf32>
    %77 = arith.negf %76 : vector<8x384xf32>
    %78 = math.exp %77 : vector<8x384xf32>
    %cst_35 = arith.constant 1.000000e+00 : f32
    %79 = vector.broadcast %cst_35 : f32 to vector<8x384xf32>
    %80 = arith.addf %79, %78 : vector<8x384xf32>
    %81 = arith.divf %79, %80 : vector<8x384xf32>
    %82 = vector.extract_strided_slice %81 {offsets = [0, 0], sizes = [8, 128], strides = [1, 1]} : vector<8x384xf32> to vector<8x128xf32>
    %83 = vector.extract_strided_slice %81 {offsets = [0, 128], sizes = [8, 128], strides = [1, 1]} : vector<8x384xf32> to vector<8x128xf32>
    %84 = vector.extract_strided_slice %81 {offsets = [0, 256], sizes = [8, 128], strides = [1, 1]} : vector<8x384xf32> to vector<8x128xf32>
    %85 = vector.extract_strided_slice %75 {offsets = [0, 384], sizes = [8, 128], strides = [1, 1]} : vector<8x512xf32> to vector<8x128xf32>
    %86 = math.tanh %85 : vector<8x128xf32>
    %87 = arith.mulf %83, %68 : vector<8x128xf32>
    %88 = arith.mulf %82, %86 : vector<8x128xf32>
    %89 = arith.addf %87, %88 : vector<8x128xf32>
    %90 = math.tanh %89 : vector<8x128xf32>
    %91 = arith.mulf %84, %90 : vector<8x128xf32>
    %c24_36 = arith.constant 24 : index
    %c0_37 = arith.constant 0 : index
    %92 = vector.load %arg13[%c24_36, %c0_37] : memref<64x128xf32, #tpu.memory_space<vmem>>, vector<8x128xf32>
    tpu.vector_store %arg13[%c24_36, %c0_37], %91 {strides = array<i32>} : memref<64x128xf32, #tpu.memory_space<vmem>>, vector<8x128xf32>,
    %c32 = arith.constant 32 : index
    %c0_38 = arith.constant 0 : index
    %93 = vector.load %arg12[%c32, %c0_38] : memref<64x512xf32, #tpu.memory_space<vmem>>, vector<8x512xf32>
    %c0_39 = arith.constant 0 : index
    %c0_40 = arith.constant 0 : index
    %94 = vector.load %arg2[%c0_39, %c0_40] : memref<128x512xf32, #tpu.memory_space<vmem>>, vector<128x512xf32>
    %cst_41 = arith.constant dense<0.000000e+00> : vector<8x512xf32>
    %95 = tpu.matmul %91, %94, %cst_41 {dimension_numbers = #tpu.dot_dimension_numbers<[1], [0], [0], [1], [0, 0, 1, 1], [], []>} : vector<8x128xf32>, vector<128x512xf32>, vector<8x512xf32> -> vector<8x512xf32>
    %96 = arith.addf %93, %95 : vector<8x512xf32>
    %97 = vector.extract_strided_slice %96 {offsets = [0, 0], sizes = [8, 384], strides = [1, 1]} : vector<8x512xf32> to vector<8x384xf32>
    %98 = arith.negf %97 : vector<8x384xf32>
    %99 = math.exp %98 : vector<8x384xf32>
    %cst_42 = arith.constant 1.000000e+00 : f32
    %100 = vector.broadcast %cst_42 : f32 to vector<8x384xf32>
    %101 = arith.addf %100, %99 : vector<8x384xf32>
    %102 = arith.divf %100, %101 : vector<8x384xf32>
    %103 = vector.extract_strided_slice %102 {offsets = [0, 0], sizes = [8, 128], strides = [1, 1]} : vector<8x384xf32> to vector<8x128xf32>
    %104 = vector.extract_strided_slice %102 {offsets = [0, 128], sizes = [8, 128], strides = [1, 1]} : vector<8x384xf32> to vector<8x128xf32>
    %105 = vector.extract_strided_slice %102 {offsets = [0, 256], sizes = [8, 128], strides = [1, 1]} : vector<8x384xf32> to vector<8x128xf32>
    %106 = vector.extract_strided_slice %96 {offsets = [0, 384], sizes = [8, 128], strides = [1, 1]} : vector<8x512xf32> to vector<8x128xf32>
    %107 = math.tanh %106 : vector<8x128xf32>
    %108 = arith.mulf %104, %89 : vector<8x128xf32>
    %109 = arith.mulf %103, %107 : vector<8x128xf32>
    %110 = arith.addf %108, %109 : vector<8x128xf32>
    %111 = math.tanh %110 : vector<8x128xf32>
    %112 = arith.mulf %105, %111 : vector<8x128xf32>
    %c32_43 = arith.constant 32 : index
    %c0_44 = arith.constant 0 : index
    %113 = vector.load %arg13[%c32_43, %c0_44] : memref<64x128xf32, #tpu.memory_space<vmem>>, vector<8x128xf32>
    tpu.vector_store %arg13[%c32_43, %c0_44], %112 {strides = array<i32>} : memref<64x128xf32, #tpu.memory_space<vmem>>, vector<8x128xf32>,
    %c40 = arith.constant 40 : index
    %c0_45 = arith.constant 0 : index
    %114 = vector.load %arg12[%c40, %c0_45] : memref<64x512xf32, #tpu.memory_space<vmem>>, vector<8x512xf32>
    %c0_46 = arith.constant 0 : index
    %c0_47 = arith.constant 0 : index
    %115 = vector.load %arg2[%c0_46, %c0_47] : memref<128x512xf32, #tpu.memory_space<vmem>>, vector<128x512xf32>
    %cst_48 = arith.constant dense<0.000000e+00> : vector<8x512xf32>
    %116 = tpu.matmul %112, %115, %cst_48 {dimension_numbers = #tpu.dot_dimension_numbers<[1], [0], [0], [1], [0, 0, 1, 1], [], []>} : vector<8x128xf32>, vector<128x512xf32>, vector<8x512xf32> -> vector<8x512xf32>
    %117 = arith.addf %114, %116 : vector<8x512xf32>
    %118 = vector.extract_strided_slice %117 {offsets = [0, 0], sizes = [8, 384], strides = [1, 1]} : vector<8x512xf32> to vector<8x384xf32>
    %119 = arith.negf %118 : vector<8x384xf32>
    %120 = math.exp %119 : vector<8x384xf32>
    %cst_49 = arith.constant 1.000000e+00 : f32
    %121 = vector.broadcast %cst_49 : f32 to vector<8x384xf32>
    %122 = arith.addf %121, %120 : vector<8x384xf32>
    %123 = arith.divf %121, %122 : vector<8x384xf32>
    %124 = vector.extract_strided_slice %123 {offsets = [0, 0], sizes = [8, 128], strides = [1, 1]} : vector<8x384xf32> to vector<8x128xf32>
    %125 = vector.extract_strided_slice %123 {offsets = [0, 128], sizes = [8, 128], strides = [1, 1]} : vector<8x384xf32> to vector<8x128xf32>
    %126 = vector.extract_strided_slice %123 {offsets = [0, 256], sizes = [8, 128], strides = [1, 1]} : vector<8x384xf32> to vector<8x128xf32>
    %127 = vector.extract_strided_slice %117 {offsets = [0, 384], sizes = [8, 128], strides = [1, 1]} : vector<8x512xf32> to vector<8x128xf32>
    %128 = math.tanh %127 : vector<8x128xf32>
    %129 = arith.mulf %125, %110 : vector<8x128xf32>
    %130 = arith.mulf %124, %128 : vector<8x128xf32>
    %131 = arith.addf %129, %130 : vector<8x128xf32>
    %132 = math.tanh %131 : vector<8x128xf32>
    %133 = arith.mulf %126, %132 : vector<8x128xf32>
    %c40_50 = arith.constant 40 : index
    %c0_51 = arith.constant 0 : index
    %134 = vector.load %arg13[%c40_50, %c0_51] : memref<64x128xf32, #tpu.memory_space<vmem>>, vector<8x128xf32>
    tpu.vector_store %arg13[%c40_50, %c0_51], %133 {strides = array<i32>} : memref<64x128xf32, #tpu.memory_space<vmem>>, vector<8x128xf32>,
    %c48 = arith.constant 48 : index
    %c0_52 = arith.constant 0 : index
    %135 = vector.load %arg12[%c48, %c0_52] : memref<64x512xf32, #tpu.memory_space<vmem>>, vector<8x512xf32>
    %c0_53 = arith.constant 0 : index
    %c0_54 = arith.constant 0 : index
    %136 = vector.load %arg2[%c0_53, %c0_54] : memref<128x512xf32, #tpu.memory_space<vmem>>, vector<128x512xf32>
    %cst_55 = arith.constant dense<0.000000e+00> : vector<8x512xf32>
    %137 = tpu.matmul %133, %136, %cst_55 {dimension_numbers = #tpu.dot_dimension_numbers<[1], [0], [0], [1], [0, 0, 1, 1], [], []>} : vector<8x128xf32>, vector<128x512xf32>, vector<8x512xf32> -> vector<8x512xf32>
    %138 = arith.addf %135, %137 : vector<8x512xf32>
    %139 = vector.extract_strided_slice %138 {offsets = [0, 0], sizes = [8, 384], strides = [1, 1]} : vector<8x512xf32> to vector<8x384xf32>
    %140 = arith.negf %139 : vector<8x384xf32>
    %141 = math.exp %140 : vector<8x384xf32>
    %cst_56 = arith.constant 1.000000e+00 : f32
    %142 = vector.broadcast %cst_56 : f32 to vector<8x384xf32>
    %143 = arith.addf %142, %141 : vector<8x384xf32>
    %144 = arith.divf %142, %143 : vector<8x384xf32>
    %145 = vector.extract_strided_slice %144 {offsets = [0, 0], sizes = [8, 128], strides = [1, 1]} : vector<8x384xf32> to vector<8x128xf32>
    %146 = vector.extract_strided_slice %144 {offsets = [0, 128], sizes = [8, 128], strides = [1, 1]} : vector<8x384xf32> to vector<8x128xf32>
    %147 = vector.extract_strided_slice %144 {offsets = [0, 256], sizes = [8, 128], strides = [1, 1]} : vector<8x384xf32> to vector<8x128xf32>
    %148 = vector.extract_strided_slice %138 {offsets = [0, 384], sizes = [8, 128], strides = [1, 1]} : vector<8x512xf32> to vector<8x128xf32>
    %149 = math.tanh %148 : vector<8x128xf32>
    %150 = arith.mulf %146, %131 : vector<8x128xf32>
    %151 = arith.mulf %145, %149 : vector<8x128xf32>
    %152 = arith.addf %150, %151 : vector<8x128xf32>
    %153 = math.tanh %152 : vector<8x128xf32>
    %154 = arith.mulf %147, %153 : vector<8x128xf32>
    %c48_57 = arith.constant 48 : index
    %c0_58 = arith.constant 0 : index
    %155 = vector.load %arg13[%c48_57, %c0_58] : memref<64x128xf32, #tpu.memory_space<vmem>>, vector<8x128xf32>
    tpu.vector_store %arg13[%c48_57, %c0_58], %154 {strides = array<i32>} : memref<64x128xf32, #tpu.memory_space<vmem>>, vector<8x128xf32>,
    %c56 = arith.constant 56 : index
    %c0_59 = arith.constant 0 : index
    %156 = vector.load %arg12[%c56, %c0_59] : memref<64x512xf32, #tpu.memory_space<vmem>>, vector<8x512xf32>
    %c0_60 = arith.constant 0 : index
    %c0_61 = arith.constant 0 : index
    %157 = vector.load %arg2[%c0_60, %c0_61] : memref<128x512xf32, #tpu.memory_space<vmem>>, vector<128x512xf32>
    %cst_62 = arith.constant dense<0.000000e+00> : vector<8x512xf32>
    %158 = tpu.matmul %154, %157, %cst_62 {dimension_numbers = #tpu.dot_dimension_numbers<[1], [0], [0], [1], [0, 0, 1, 1], [], []>} : vector<8x128xf32>, vector<128x512xf32>, vector<8x512xf32> -> vector<8x512xf32>
    %159 = arith.addf %156, %158 : vector<8x512xf32>
    %160 = vector.extract_strided_slice %159 {offsets = [0, 0], sizes = [8, 384], strides = [1, 1]} : vector<8x512xf32> to vector<8x384xf32>
    %161 = arith.negf %160 : vector<8x384xf32>
    %162 = math.exp %161 : vector<8x384xf32>
    %cst_63 = arith.constant 1.000000e+00 : f32
    %163 = vector.broadcast %cst_63 : f32 to vector<8x384xf32>
    %164 = arith.addf %163, %162 : vector<8x384xf32>
    %165 = arith.divf %163, %164 : vector<8x384xf32>
    %166 = vector.extract_strided_slice %165 {offsets = [0, 0], sizes = [8, 128], strides = [1, 1]} : vector<8x384xf32> to vector<8x128xf32>
    %167 = vector.extract_strided_slice %165 {offsets = [0, 128], sizes = [8, 128], strides = [1, 1]} : vector<8x384xf32> to vector<8x128xf32>
    %168 = vector.extract_strided_slice %165 {offsets = [0, 256], sizes = [8, 128], strides = [1, 1]} : vector<8x384xf32> to vector<8x128xf32>
    %169 = vector.extract_strided_slice %159 {offsets = [0, 384], sizes = [8, 128], strides = [1, 1]} : vector<8x512xf32> to vector<8x128xf32>
    %170 = math.tanh %169 : vector<8x128xf32>
    %171 = arith.mulf %167, %152 : vector<8x128xf32>
    %172 = arith.mulf %166, %170 : vector<8x128xf32>
    %173 = arith.addf %171, %172 : vector<8x128xf32>
    %174 = math.tanh %173 : vector<8x128xf32>
    %175 = arith.mulf %168, %174 : vector<8x128xf32>
    %c56_64 = arith.constant 56 : index
    %c0_65 = arith.constant 0 : index
    %176 = vector.load %arg13[%c56_64, %c0_65] : memref<64x128xf32, #tpu.memory_space<vmem>>, vector<8x128xf32>
    tpu.vector_store %arg13[%c56_64, %c0_65], %175 {strides = array<i32>} : memref<64x128xf32, #tpu.memory_space<vmem>>, vector<8x128xf32>,
    %c0_66 = arith.constant 0 : index
    %c0_67 = arith.constant 0 : index
    %c0_68 = arith.constant 0 : index
    %177 = vector.load %arg10[%c0_66, %c0_67, %c0_68] : memref<2x8x128xf32, #tpu.memory_space<vmem>>, vector<1x8x128xf32>
    %178 = vector.shape_cast %177 : vector<1x8x128xf32> to vector<8x128xf32>
    %179 = vector.shape_cast %175 : vector<8x128xf32> to vector<1x8x128xf32>
    tpu.vector_store %arg10[%c0_66, %c0_67, %c0_68], %179 {strides = array<i32>} : memref<2x8x128xf32, #tpu.memory_space<vmem>>, vector<1x8x128xf32>,
    %c0_69 = arith.constant 0 : index
    %c0_70 = arith.constant 0 : index
    %c0_71 = arith.constant 0 : index
    %180 = vector.load %arg11[%c0_69, %c0_70, %c0_71] : memref<2x8x128xf32, #tpu.memory_space<vmem>>, vector<1x8x128xf32>
    %181 = vector.shape_cast %180 : vector<1x8x128xf32> to vector<8x128xf32>
    %182 = vector.shape_cast %173 : vector<8x128xf32> to vector<1x8x128xf32>
    tpu.vector_store %arg11[%c0_69, %c0_70, %c0_71], %182 {strides = array<i32>} : memref<2x8x128xf32, #tpu.memory_space<vmem>>, vector<1x8x128xf32>,
    %c0_72 = arith.constant 0 : index
    %c0_73 = arith.constant 0 : index
    %183 = vector.load %arg13[%c0_72, %c0_73] : memref<64x128xf32, #tpu.memory_space<vmem>>, vector<64x128xf32>
    %c0_74 = arith.constant 0 : index
    %c0_75 = arith.constant 0 : index
    %184 = vector.load %arg4[%c0_74, %c0_75] : memref<128x512xf32, #tpu.memory_space<vmem>>, vector<128x512xf32>
    %cst_76 = arith.constant dense<0.000000e+00> : vector<64x512xf32>
    %185 = tpu.matmul %183, %184, %cst_76 {dimension_numbers = #tpu.dot_dimension_numbers<[1], [0], [0], [1], [0, 0, 1, 1], [], []>} : vector<64x128xf32>, vector<128x512xf32>, vector<64x512xf32> -> vector<64x512xf32>
    %c0_77 = arith.constant 0 : index
    %c0_78 = arith.constant 0 : index
    %186 = vector.load %arg6[%c0_77, %c0_78] : memref<1x512xf32, #tpu.memory_space<vmem>>, vector<1x512xf32>
    %187 = vector.broadcast %186 : vector<1x512xf32> to vector<64x512xf32>
    %188 = arith.addf %185, %187 : vector<64x512xf32>
    %c0_79 = arith.constant 0 : index
    %c0_80 = arith.constant 0 : index
    %189 = vector.load %arg12[%c0_79, %c0_80] : memref<64x512xf32, #tpu.memory_space<vmem>>, vector<64x512xf32>
    tpu.vector_store %arg12[%c0_79, %c0_80], %188 {strides = array<i32>} : memref<64x512xf32, #tpu.memory_space<vmem>>, vector<64x512xf32>,
    %cst_81 = arith.constant 0.000000e+00 : f32
    %190 = vector.broadcast %cst_81 : f32 to vector<8x128xf32>
    %cst_82 = arith.constant 0.000000e+00 : f32
    %191 = vector.broadcast %cst_82 : f32 to vector<8x128xf32>
    %c0_83 = arith.constant 0 : index
    %c0_84 = arith.constant 0 : index
    %192 = vector.load %arg12[%c0_83, %c0_84] : memref<64x512xf32, #tpu.memory_space<vmem>>, vector<8x512xf32>
    %c0_85 = arith.constant 0 : index
    %c0_86 = arith.constant 0 : index
    %193 = vector.load %arg5[%c0_85, %c0_86] : memref<128x512xf32, #tpu.memory_space<vmem>>, vector<128x512xf32>
    %cst_87 = arith.constant dense<0.000000e+00> : vector<8x512xf32>
    %194 = tpu.matmul %190, %193, %cst_87 {dimension_numbers = #tpu.dot_dimension_numbers<[1], [0], [0], [1], [0, 0, 1, 1], [], []>} : vector<8x128xf32>, vector<128x512xf32>, vector<8x512xf32> -> vector<8x512xf32>
    %195 = arith.addf %192, %194 : vector<8x512xf32>
    %196 = vector.extract_strided_slice %195 {offsets = [0, 0], sizes = [8, 384], strides = [1, 1]} : vector<8x512xf32> to vector<8x384xf32>
    %197 = arith.negf %196 : vector<8x384xf32>
    %198 = math.exp %197 : vector<8x384xf32>
    %cst_88 = arith.constant 1.000000e+00 : f32
    %199 = vector.broadcast %cst_88 : f32 to vector<8x384xf32>
    %200 = arith.addf %199, %198 : vector<8x384xf32>
    %201 = arith.divf %199, %200 : vector<8x384xf32>
    %202 = vector.extract_strided_slice %201 {offsets = [0, 0], sizes = [8, 128], strides = [1, 1]} : vector<8x384xf32> to vector<8x128xf32>
    %203 = vector.extract_strided_slice %201 {offsets = [0, 128], sizes = [8, 128], strides = [1, 1]} : vector<8x384xf32> to vector<8x128xf32>
    %204 = vector.extract_strided_slice %201 {offsets = [0, 256], sizes = [8, 128], strides = [1, 1]} : vector<8x384xf32> to vector<8x128xf32>
    %205 = vector.extract_strided_slice %195 {offsets = [0, 384], sizes = [8, 128], strides = [1, 1]} : vector<8x512xf32> to vector<8x128xf32>
    %206 = math.tanh %205 : vector<8x128xf32>
    %207 = arith.mulf %203, %191 : vector<8x128xf32>
    %208 = arith.mulf %202, %206 : vector<8x128xf32>
    %209 = arith.addf %207, %208 : vector<8x128xf32>
    %210 = math.tanh %209 : vector<8x128xf32>
    %211 = arith.mulf %204, %210 : vector<8x128xf32>
    %c0_89 = arith.constant 0 : index
    %c0_90 = arith.constant 0 : index
    %212 = vector.load %arg13[%c0_89, %c0_90] : memref<64x128xf32, #tpu.memory_space<vmem>>, vector<8x128xf32>
    tpu.vector_store %arg13[%c0_89, %c0_90], %211 {strides = array<i32>} : memref<64x128xf32, #tpu.memory_space<vmem>>, vector<8x128xf32>,
    %c8_91 = arith.constant 8 : index
    %c0_92 = arith.constant 0 : index
    %213 = vector.load %arg12[%c8_91, %c0_92] : memref<64x512xf32, #tpu.memory_space<vmem>>, vector<8x512xf32>
    %c0_93 = arith.constant 0 : index
    %c0_94 = arith.constant 0 : index
    %214 = vector.load %arg5[%c0_93, %c0_94] : memref<128x512xf32, #tpu.memory_space<vmem>>, vector<128x512xf32>
    %cst_95 = arith.constant dense<0.000000e+00> : vector<8x512xf32>
    %215 = tpu.matmul %211, %214, %cst_95 {dimension_numbers = #tpu.dot_dimension_numbers<[1], [0], [0], [1], [0, 0, 1, 1], [], []>} : vector<8x128xf32>, vector<128x512xf32>, vector<8x512xf32> -> vector<8x512xf32>
    %216 = arith.addf %213, %215 : vector<8x512xf32>
    %217 = vector.extract_strided_slice %216 {offsets = [0, 0], sizes = [8, 384], strides = [1, 1]} : vector<8x512xf32> to vector<8x384xf32>
    %218 = arith.negf %217 : vector<8x384xf32>
    %219 = math.exp %218 : vector<8x384xf32>
    %cst_96 = arith.constant 1.000000e+00 : f32
    %220 = vector.broadcast %cst_96 : f32 to vector<8x384xf32>
    %221 = arith.addf %220, %219 : vector<8x384xf32>
    %222 = arith.divf %220, %221 : vector<8x384xf32>
    %223 = vector.extract_strided_slice %222 {offsets = [0, 0], sizes = [8, 128], strides = [1, 1]} : vector<8x384xf32> to vector<8x128xf32>
    %224 = vector.extract_strided_slice %222 {offsets = [0, 128], sizes = [8, 128], strides = [1, 1]} : vector<8x384xf32> to vector<8x128xf32>
    %225 = vector.extract_strided_slice %222 {offsets = [0, 256], sizes = [8, 128], strides = [1, 1]} : vector<8x384xf32> to vector<8x128xf32>
    %226 = vector.extract_strided_slice %216 {offsets = [0, 384], sizes = [8, 128], strides = [1, 1]} : vector<8x512xf32> to vector<8x128xf32>
    %227 = math.tanh %226 : vector<8x128xf32>
    %228 = arith.mulf %224, %209 : vector<8x128xf32>
    %229 = arith.mulf %223, %227 : vector<8x128xf32>
    %230 = arith.addf %228, %229 : vector<8x128xf32>
    %231 = math.tanh %230 : vector<8x128xf32>
    %232 = arith.mulf %225, %231 : vector<8x128xf32>
    %c8_97 = arith.constant 8 : index
    %c0_98 = arith.constant 0 : index
    %233 = vector.load %arg13[%c8_97, %c0_98] : memref<64x128xf32, #tpu.memory_space<vmem>>, vector<8x128xf32>
    tpu.vector_store %arg13[%c8_97, %c0_98], %232 {strides = array<i32>} : memref<64x128xf32, #tpu.memory_space<vmem>>, vector<8x128xf32>,
    %c16_99 = arith.constant 16 : index
    %c0_100 = arith.constant 0 : index
    %234 = vector.load %arg12[%c16_99, %c0_100] : memref<64x512xf32, #tpu.memory_space<vmem>>, vector<8x512xf32>
    %c0_101 = arith.constant 0 : index
    %c0_102 = arith.constant 0 : index
    %235 = vector.load %arg5[%c0_101, %c0_102] : memref<128x512xf32, #tpu.memory_space<vmem>>, vector<128x512xf32>
    %cst_103 = arith.constant dense<0.000000e+00> : vector<8x512xf32>
    %236 = tpu.matmul %232, %235, %cst_103 {dimension_numbers = #tpu.dot_dimension_numbers<[1], [0], [0], [1], [0, 0, 1, 1], [], []>} : vector<8x128xf32>, vector<128x512xf32>, vector<8x512xf32> -> vector<8x512xf32>
    %237 = arith.addf %234, %236 : vector<8x512xf32>
    %238 = vector.extract_strided_slice %237 {offsets = [0, 0], sizes = [8, 384], strides = [1, 1]} : vector<8x512xf32> to vector<8x384xf32>
    %239 = arith.negf %238 : vector<8x384xf32>
    %240 = math.exp %239 : vector<8x384xf32>
    %cst_104 = arith.constant 1.000000e+00 : f32
    %241 = vector.broadcast %cst_104 : f32 to vector<8x384xf32>
    %242 = arith.addf %241, %240 : vector<8x384xf32>
    %243 = arith.divf %241, %242 : vector<8x384xf32>
    %244 = vector.extract_strided_slice %243 {offsets = [0, 0], sizes = [8, 128], strides = [1, 1]} : vector<8x384xf32> to vector<8x128xf32>
    %245 = vector.extract_strided_slice %243 {offsets = [0, 128], sizes = [8, 128], strides = [1, 1]} : vector<8x384xf32> to vector<8x128xf32>
    %246 = vector.extract_strided_slice %243 {offsets = [0, 256], sizes = [8, 128], strides = [1, 1]} : vector<8x384xf32> to vector<8x128xf32>
    %247 = vector.extract_strided_slice %237 {offsets = [0, 384], sizes = [8, 128], strides = [1, 1]} : vector<8x512xf32> to vector<8x128xf32>
    %248 = math.tanh %247 : vector<8x128xf32>
    %249 = arith.mulf %245, %230 : vector<8x128xf32>
    %250 = arith.mulf %244, %248 : vector<8x128xf32>
    %251 = arith.addf %249, %250 : vector<8x128xf32>
    %252 = math.tanh %251 : vector<8x128xf32>
    %253 = arith.mulf %246, %252 : vector<8x128xf32>
    %c16_105 = arith.constant 16 : index
    %c0_106 = arith.constant 0 : index
    %254 = vector.load %arg13[%c16_105, %c0_106] : memref<64x128xf32, #tpu.memory_space<vmem>>, vector<8x128xf32>
    tpu.vector_store %arg13[%c16_105, %c0_106], %253 {strides = array<i32>} : memref<64x128xf32, #tpu.memory_space<vmem>>, vector<8x128xf32>,
    %c24_107 = arith.constant 24 : index
    %c0_108 = arith.constant 0 : index
    %255 = vector.load %arg12[%c24_107, %c0_108] : memref<64x512xf32, #tpu.memory_space<vmem>>, vector<8x512xf32>
    %c0_109 = arith.constant 0 : index
    %c0_110 = arith.constant 0 : index
    %256 = vector.load %arg5[%c0_109, %c0_110] : memref<128x512xf32, #tpu.memory_space<vmem>>, vector<128x512xf32>
    %cst_111 = arith.constant dense<0.000000e+00> : vector<8x512xf32>
    %257 = tpu.matmul %253, %256, %cst_111 {dimension_numbers = #tpu.dot_dimension_numbers<[1], [0], [0], [1], [0, 0, 1, 1], [], []>} : vector<8x128xf32>, vector<128x512xf32>, vector<8x512xf32> -> vector<8x512xf32>
    %258 = arith.addf %255, %257 : vector<8x512xf32>
    %259 = vector.extract_strided_slice %258 {offsets = [0, 0], sizes = [8, 384], strides = [1, 1]} : vector<8x512xf32> to vector<8x384xf32>
    %260 = arith.negf %259 : vector<8x384xf32>
    %261 = math.exp %260 : vector<8x384xf32>
    %cst_112 = arith.constant 1.000000e+00 : f32
    %262 = vector.broadcast %cst_112 : f32 to vector<8x384xf32>
    %263 = arith.addf %262, %261 : vector<8x384xf32>
    %264 = arith.divf %262, %263 : vector<8x384xf32>
    %265 = vector.extract_strided_slice %264 {offsets = [0, 0], sizes = [8, 128], strides = [1, 1]} : vector<8x384xf32> to vector<8x128xf32>
    %266 = vector.extract_strided_slice %264 {offsets = [0, 128], sizes = [8, 128], strides = [1, 1]} : vector<8x384xf32> to vector<8x128xf32>
    %267 = vector.extract_strided_slice %264 {offsets = [0, 256], sizes = [8, 128], strides = [1, 1]} : vector<8x384xf32> to vector<8x128xf32>
    %268 = vector.extract_strided_slice %258 {offsets = [0, 384], sizes = [8, 128], strides = [1, 1]} : vector<8x512xf32> to vector<8x128xf32>
    %269 = math.tanh %268 : vector<8x128xf32>
    %270 = arith.mulf %266, %251 : vector<8x128xf32>
    %271 = arith.mulf %265, %269 : vector<8x128xf32>
    %272 = arith.addf %270, %271 : vector<8x128xf32>
    %273 = math.tanh %272 : vector<8x128xf32>
    %274 = arith.mulf %267, %273 : vector<8x128xf32>
    %c24_113 = arith.constant 24 : index
    %c0_114 = arith.constant 0 : index
    %275 = vector.load %arg13[%c24_113, %c0_114] : memref<64x128xf32, #tpu.memory_space<vmem>>, vector<8x128xf32>
    tpu.vector_store %arg13[%c24_113, %c0_114], %274 {strides = array<i32>} : memref<64x128xf32, #tpu.memory_space<vmem>>, vector<8x128xf32>,
    %c32_115 = arith.constant 32 : index
    %c0_116 = arith.constant 0 : index
    %276 = vector.load %arg12[%c32_115, %c0_116] : memref<64x512xf32, #tpu.memory_space<vmem>>, vector<8x512xf32>
    %c0_117 = arith.constant 0 : index
    %c0_118 = arith.constant 0 : index
    %277 = vector.load %arg5[%c0_117, %c0_118] : memref<128x512xf32, #tpu.memory_space<vmem>>, vector<128x512xf32>
    %cst_119 = arith.constant dense<0.000000e+00> : vector<8x512xf32>
    %278 = tpu.matmul %274, %277, %cst_119 {dimension_numbers = #tpu.dot_dimension_numbers<[1], [0], [0], [1], [0, 0, 1, 1], [], []>} : vector<8x128xf32>, vector<128x512xf32>, vector<8x512xf32> -> vector<8x512xf32>
    %279 = arith.addf %276, %278 : vector<8x512xf32>
    %280 = vector.extract_strided_slice %279 {offsets = [0, 0], sizes = [8, 384], strides = [1, 1]} : vector<8x512xf32> to vector<8x384xf32>
    %281 = arith.negf %280 : vector<8x384xf32>
    %282 = math.exp %281 : vector<8x384xf32>
    %cst_120 = arith.constant 1.000000e+00 : f32
    %283 = vector.broadcast %cst_120 : f32 to vector<8x384xf32>
    %284 = arith.addf %283, %282 : vector<8x384xf32>
    %285 = arith.divf %283, %284 : vector<8x384xf32>
    %286 = vector.extract_strided_slice %285 {offsets = [0, 0], sizes = [8, 128], strides = [1, 1]} : vector<8x384xf32> to vector<8x128xf32>
    %287 = vector.extract_strided_slice %285 {offsets = [0, 128], sizes = [8, 128], strides = [1, 1]} : vector<8x384xf32> to vector<8x128xf32>
    %288 = vector.extract_strided_slice %285 {offsets = [0, 256], sizes = [8, 128], strides = [1, 1]} : vector<8x384xf32> to vector<8x128xf32>
    %289 = vector.extract_strided_slice %279 {offsets = [0, 384], sizes = [8, 128], strides = [1, 1]} : vector<8x512xf32> to vector<8x128xf32>
    %290 = math.tanh %289 : vector<8x128xf32>
    %291 = arith.mulf %287, %272 : vector<8x128xf32>
    %292 = arith.mulf %286, %290 : vector<8x128xf32>
    %293 = arith.addf %291, %292 : vector<8x128xf32>
    %294 = math.tanh %293 : vector<8x128xf32>
    %295 = arith.mulf %288, %294 : vector<8x128xf32>
    %c32_121 = arith.constant 32 : index
    %c0_122 = arith.constant 0 : index
    %296 = vector.load %arg13[%c32_121, %c0_122] : memref<64x128xf32, #tpu.memory_space<vmem>>, vector<8x128xf32>
    tpu.vector_store %arg13[%c32_121, %c0_122], %295 {strides = array<i32>} : memref<64x128xf32, #tpu.memory_space<vmem>>, vector<8x128xf32>,
    %c40_123 = arith.constant 40 : index
    %c0_124 = arith.constant 0 : index
    %297 = vector.load %arg12[%c40_123, %c0_124] : memref<64x512xf32, #tpu.memory_space<vmem>>, vector<8x512xf32>
    %c0_125 = arith.constant 0 : index
    %c0_126 = arith.constant 0 : index
    %298 = vector.load %arg5[%c0_125, %c0_126] : memref<128x512xf32, #tpu.memory_space<vmem>>, vector<128x512xf32>
    %cst_127 = arith.constant dense<0.000000e+00> : vector<8x512xf32>
    %299 = tpu.matmul %295, %298, %cst_127 {dimension_numbers = #tpu.dot_dimension_numbers<[1], [0], [0], [1], [0, 0, 1, 1], [], []>} : vector<8x128xf32>, vector<128x512xf32>, vector<8x512xf32> -> vector<8x512xf32>
    %300 = arith.addf %297, %299 : vector<8x512xf32>
    %301 = vector.extract_strided_slice %300 {offsets = [0, 0], sizes = [8, 384], strides = [1, 1]} : vector<8x512xf32> to vector<8x384xf32>
    %302 = arith.negf %301 : vector<8x384xf32>
    %303 = math.exp %302 : vector<8x384xf32>
    %cst_128 = arith.constant 1.000000e+00 : f32
    %304 = vector.broadcast %cst_128 : f32 to vector<8x384xf32>
    %305 = arith.addf %304, %303 : vector<8x384xf32>
    %306 = arith.divf %304, %305 : vector<8x384xf32>
    %307 = vector.extract_strided_slice %306 {offsets = [0, 0], sizes = [8, 128], strides = [1, 1]} : vector<8x384xf32> to vector<8x128xf32>
    %308 = vector.extract_strided_slice %306 {offsets = [0, 128], sizes = [8, 128], strides = [1, 1]} : vector<8x384xf32> to vector<8x128xf32>
    %309 = vector.extract_strided_slice %306 {offsets = [0, 256], sizes = [8, 128], strides = [1, 1]} : vector<8x384xf32> to vector<8x128xf32>
    %310 = vector.extract_strided_slice %300 {offsets = [0, 384], sizes = [8, 128], strides = [1, 1]} : vector<8x512xf32> to vector<8x128xf32>
    %311 = math.tanh %310 : vector<8x128xf32>
    %312 = arith.mulf %308, %293 : vector<8x128xf32>
    %313 = arith.mulf %307, %311 : vector<8x128xf32>
    %314 = arith.addf %312, %313 : vector<8x128xf32>
    %315 = math.tanh %314 : vector<8x128xf32>
    %316 = arith.mulf %309, %315 : vector<8x128xf32>
    %c40_129 = arith.constant 40 : index
    %c0_130 = arith.constant 0 : index
    %317 = vector.load %arg13[%c40_129, %c0_130] : memref<64x128xf32, #tpu.memory_space<vmem>>, vector<8x128xf32>
    tpu.vector_store %arg13[%c40_129, %c0_130], %316 {strides = array<i32>} : memref<64x128xf32, #tpu.memory_space<vmem>>, vector<8x128xf32>,
    %c48_131 = arith.constant 48 : index
    %c0_132 = arith.constant 0 : index
    %318 = vector.load %arg12[%c48_131, %c0_132] : memref<64x512xf32, #tpu.memory_space<vmem>>, vector<8x512xf32>
    %c0_133 = arith.constant 0 : index
    %c0_134 = arith.constant 0 : index
    %319 = vector.load %arg5[%c0_133, %c0_134] : memref<128x512xf32, #tpu.memory_space<vmem>>, vector<128x512xf32>
    %cst_135 = arith.constant dense<0.000000e+00> : vector<8x512xf32>
    %320 = tpu.matmul %316, %319, %cst_135 {dimension_numbers = #tpu.dot_dimension_numbers<[1], [0], [0], [1], [0, 0, 1, 1], [], []>} : vector<8x128xf32>, vector<128x512xf32>, vector<8x512xf32> -> vector<8x512xf32>
    %321 = arith.addf %318, %320 : vector<8x512xf32>
    %322 = vector.extract_strided_slice %321 {offsets = [0, 0], sizes = [8, 384], strides = [1, 1]} : vector<8x512xf32> to vector<8x384xf32>
    %323 = arith.negf %322 : vector<8x384xf32>
    %324 = math.exp %323 : vector<8x384xf32>
    %cst_136 = arith.constant 1.000000e+00 : f32
    %325 = vector.broadcast %cst_136 : f32 to vector<8x384xf32>
    %326 = arith.addf %325, %324 : vector<8x384xf32>
    %327 = arith.divf %325, %326 : vector<8x384xf32>
    %328 = vector.extract_strided_slice %327 {offsets = [0, 0], sizes = [8, 128], strides = [1, 1]} : vector<8x384xf32> to vector<8x128xf32>
    %329 = vector.extract_strided_slice %327 {offsets = [0, 128], sizes = [8, 128], strides = [1, 1]} : vector<8x384xf32> to vector<8x128xf32>
    %330 = vector.extract_strided_slice %327 {offsets = [0, 256], sizes = [8, 128], strides = [1, 1]} : vector<8x384xf32> to vector<8x128xf32>
    %331 = vector.extract_strided_slice %321 {offsets = [0, 384], sizes = [8, 128], strides = [1, 1]} : vector<8x512xf32> to vector<8x128xf32>
    %332 = math.tanh %331 : vector<8x128xf32>
    %333 = arith.mulf %329, %314 : vector<8x128xf32>
    %334 = arith.mulf %328, %332 : vector<8x128xf32>
    %335 = arith.addf %333, %334 : vector<8x128xf32>
    %336 = math.tanh %335 : vector<8x128xf32>
    %337 = arith.mulf %330, %336 : vector<8x128xf32>
    %c48_137 = arith.constant 48 : index
    %c0_138 = arith.constant 0 : index
    %338 = vector.load %arg13[%c48_137, %c0_138] : memref<64x128xf32, #tpu.memory_space<vmem>>, vector<8x128xf32>
    tpu.vector_store %arg13[%c48_137, %c0_138], %337 {strides = array<i32>} : memref<64x128xf32, #tpu.memory_space<vmem>>, vector<8x128xf32>,
    %c56_139 = arith.constant 56 : index
    %c0_140 = arith.constant 0 : index
    %339 = vector.load %arg12[%c56_139, %c0_140] : memref<64x512xf32, #tpu.memory_space<vmem>>, vector<8x512xf32>
    %c0_141 = arith.constant 0 : index
    %c0_142 = arith.constant 0 : index
    %340 = vector.load %arg5[%c0_141, %c0_142] : memref<128x512xf32, #tpu.memory_space<vmem>>, vector<128x512xf32>
    %cst_143 = arith.constant dense<0.000000e+00> : vector<8x512xf32>
    %341 = tpu.matmul %337, %340, %cst_143 {dimension_numbers = #tpu.dot_dimension_numbers<[1], [0], [0], [1], [0, 0, 1, 1], [], []>} : vector<8x128xf32>, vector<128x512xf32>, vector<8x512xf32> -> vector<8x512xf32>
    %342 = arith.addf %339, %341 : vector<8x512xf32>
    %343 = vector.extract_strided_slice %342 {offsets = [0, 0], sizes = [8, 384], strides = [1, 1]} : vector<8x512xf32> to vector<8x384xf32>
    %344 = arith.negf %343 : vector<8x384xf32>
    %345 = math.exp %344 : vector<8x384xf32>
    %cst_144 = arith.constant 1.000000e+00 : f32
    %346 = vector.broadcast %cst_144 : f32 to vector<8x384xf32>
    %347 = arith.addf %346, %345 : vector<8x384xf32>
    %348 = arith.divf %346, %347 : vector<8x384xf32>
    %349 = vector.extract_strided_slice %348 {offsets = [0, 0], sizes = [8, 128], strides = [1, 1]} : vector<8x384xf32> to vector<8x128xf32>
    %350 = vector.extract_strided_slice %348 {offsets = [0, 128], sizes = [8, 128], strides = [1, 1]} : vector<8x384xf32> to vector<8x128xf32>
    %351 = vector.extract_strided_slice %348 {offsets = [0, 256], sizes = [8, 128], strides = [1, 1]} : vector<8x384xf32> to vector<8x128xf32>
    %352 = vector.extract_strided_slice %342 {offsets = [0, 384], sizes = [8, 128], strides = [1, 1]} : vector<8x512xf32> to vector<8x128xf32>
    %353 = math.tanh %352 : vector<8x128xf32>
    %354 = arith.mulf %350, %335 : vector<8x128xf32>
    %355 = arith.mulf %349, %353 : vector<8x128xf32>
    %356 = arith.addf %354, %355 : vector<8x128xf32>
    %357 = math.tanh %356 : vector<8x128xf32>
    %358 = arith.mulf %351, %357 : vector<8x128xf32>
    %c56_145 = arith.constant 56 : index
    %c0_146 = arith.constant 0 : index
    %359 = vector.load %arg13[%c56_145, %c0_146] : memref<64x128xf32, #tpu.memory_space<vmem>>, vector<8x128xf32>
    tpu.vector_store %arg13[%c56_145, %c0_146], %358 {strides = array<i32>} : memref<64x128xf32, #tpu.memory_space<vmem>>, vector<8x128xf32>,
    %c1 = arith.constant 1 : index
    %c0_147 = arith.constant 0 : index
    %c0_148 = arith.constant 0 : index
    %360 = vector.load %arg10[%c1, %c0_147, %c0_148] : memref<2x8x128xf32, #tpu.memory_space<vmem>>, vector<1x8x128xf32>
    %361 = vector.shape_cast %360 : vector<1x8x128xf32> to vector<8x128xf32>
    %362 = vector.shape_cast %358 : vector<8x128xf32> to vector<1x8x128xf32>
    tpu.vector_store %arg10[%c1, %c0_147, %c0_148], %362 {strides = array<i32>} : memref<2x8x128xf32, #tpu.memory_space<vmem>>, vector<1x8x128xf32>,
    %c1_149 = arith.constant 1 : index
    %c0_150 = arith.constant 0 : index
    %c0_151 = arith.constant 0 : index
    %363 = vector.load %arg11[%c1_149, %c0_150, %c0_151] : memref<2x8x128xf32, #tpu.memory_space<vmem>>, vector<1x8x128xf32>
    %364 = vector.shape_cast %363 : vector<1x8x128xf32> to vector<8x128xf32>
    %365 = vector.shape_cast %356 : vector<8x128xf32> to vector<1x8x128xf32>
    tpu.vector_store %arg11[%c1_149, %c0_150, %c0_151], %365 {strides = array<i32>} : memref<2x8x128xf32, #tpu.memory_space<vmem>>, vector<1x8x128xf32>,
    %c0_152 = arith.constant 0 : index
    %c0_153 = arith.constant 0 : index
    %366 = vector.load %arg13[%c0_152, %c0_153] : memref<64x128xf32, #tpu.memory_space<vmem>>, vector<64x128xf32>
    %c0_154 = arith.constant 0 : index
    %c0_155 = arith.constant 0 : index
    %367 = vector.load %arg7[%c0_154, %c0_155] : memref<128x128xf32, #tpu.memory_space<vmem>>, vector<128x128xf32>
    %cst_156 = arith.constant dense<0.000000e+00> : vector<64x128xf32>
    %368 = tpu.matmul %366, %367, %cst_156 {dimension_numbers = #tpu.dot_dimension_numbers<[1], [0], [0], [1], [0, 0, 1, 1], [], []>} : vector<64x128xf32>, vector<128x128xf32>, vector<64x128xf32> -> vector<64x128xf32>
    %c0_157 = arith.constant 0 : index
    %c0_158 = arith.constant 0 : index
    %369 = vector.load %arg8[%c0_157, %c0_158] : memref<1x128xf32, #tpu.memory_space<vmem>>, vector<1x128xf32>
    %370 = vector.broadcast %369 : vector<1x128xf32> to vector<64x128xf32>
    %371 = arith.addf %368, %370 : vector<64x128xf32>
    %c0_159 = arith.constant 0 : index
    %c0_160 = arith.constant 0 : index
    %372 = vector.load %arg9[%c0_159, %c0_160] : memref<64x128xf32, #tpu.memory_space<vmem>>, vector<64x128xf32>
    tpu.vector_store %arg9[%c0_159, %c0_160], %371 {strides = array<i32>} : memref<64x128xf32, #tpu.memory_space<vmem>>, vector<64x128xf32>,
    return
  }
}

</mosaic_0001>

<llo_original>
// kernel: _lambda_.1
$region0: #{_lambda_.1}
  #allocation0 [shape = 'u32[]', space=smem, size = 0x4, offset = 0x4, fixed_abs, tag = 'smem constant byte address 0x4 - core index']
  #allocation1 [shape = 'u32[144,128]{1,0:T(1,128)}', space=vmem, size = 0x12000, scoped, tag = 'internal scratch']
  #allocation2 [shape = 'f32[64,512]{1,0:T(8,128)}', space=vmem, size = 0x20000, scoped, tag = 'scratch operand']
  #allocation3 [shape = 'f32[64,128]{1,0:T(8,128)}', space=vmem, size = 0x8000, scoped, tag = 'scratch operand']
  %s0 = inlined_call_operand.vmem [shape: f32[64,32], index: 0, kind: input, shape index: {}]
  %s1 = inlined_call_operand.hbm [shape: f32[32,512], index: 1, kind: input, shape index: {}]
  %s2 = inlined_call_operand.hbm [shape: f32[128,512], index: 2, kind: input, shape index: {}]
  %s3 = inlined_call_operand.vmem [shape: f32[1,512], index: 3, kind: input, shape index: {}]
  %s4 = inlined_call_operand.hbm [shape: f32[128,512], index: 4, kind: input, shape index: {}]
  %s5 = inlined_call_operand.vmem [shape: f32[128,512], index: 5, kind: input, shape index: {}]
  %s6 = inlined_call_operand.vmem [shape: f32[1,512], index: 6, kind: input, shape index: {}]
  %s7 = inlined_call_operand.vmem [shape: f32[128,128], index: 7, kind: input, shape index: {}]
  %s8 = inlined_call_operand.vmem [shape: f32[1,128], index: 8, kind: input, shape index: {}]
  %s9 = inlined_call_operand.vmem [shape: f32[64,128], index: 9, kind: output, shape index: {0}]
  %s10 = inlined_call_operand.hbm [shape: f32[2,8,128], index: 10, kind: output, shape index: {1}]
  %s11 = inlined_call_operand.hbm [shape: f32[2,8,128], index: 11, kind: output, shape index: {2}]
  %12 = xla_tuple %s9, %s10, %s11
  %s13 = sld [smem:[#allocation0]]
  $region74: #{_lambda_.1} parent=0
    _
  %s15 = ssub.s32 1, %s13
  %s16 = scalar_select 0, %s15, %s13
  $region1: #{_lambda_.1} parent=0
    #allocation4 [shape = 'u8[65536]{0}', space=vmem, size = 0x10000, scoped, tag = 'input window, operand 1, single buffered']
    #allocation5 [shape = 's32[1]{0}', space=sflag, size = 0x4, scoped, tag = 'scoped memory for _lambda_.1']
    #allocation6 [shape = 's32[1]{0}', space=sflag, size = 0x4, scoped, tag = 'scoped memory for _lambda_.1']
    #allocation7 [shape = 'u8[262144]{0}', space=vmem, size = 0x40000, scoped, tag = 'input window, operand 2, single buffered']
    #allocation8 [shape = 's32[1]{0}', space=sflag, size = 0x4, scoped, tag = 'scoped memory for _lambda_.1']
    #allocation9 [shape = 'u8[262144]{0}', space=vmem, size = 0x40000, scoped, tag = 'input window, operand 4, single buffered']
    #allocation10 [shape = 'u8[8192]{0}', space=vmem, size = 0x2000, scoped, tag = 'output window, operand 1, single buffered']
    #allocation11 [shape = 'u8[8192]{0}', space=vmem, size = 0x2000, scoped, tag = 'output window, operand 2, single buffered']
    #allocation12 [shape = 's32[1]{0}', space=sflag, size = 0x4, scoped, tag = 'scoped memory for _lambda_.1']
    %17 = vsyncpa [#allocation5], 0
    %18 = vsyncpa [#allocation8], 0
    %19 = vsyncpa [#allocation6], 0
    %20 = vsyncpa [#allocation12], 0
    // Predicated region
    $region2: #{_lambda_.1} parent=1 // pred_check
      _
    $region3: #{_lambda_.1} parent=1 // pred_check_branch
      %22 = sbr.rel (0) target = $region5
    $region4: #{_lambda_.1} parent=1 // pred_region
      _
    $region5: #{_lambda_.1} parent=1 // pred_fallthru
      _
    // Predicated region
    $region6: #{_lambda_.1} parent=1 // pred_check
      _
    $region7: #{_lambda_.1} parent=1 // pred_check_branch
      %24 = sbr.rel (0) target = $region9
    $region8: #{_lambda_.1} parent=1 // pred_region
      %s26 = ssub.s32 2048, 2048
      %27 = vsyncadd [#allocation5], %s26
      %s28 = sshll.u32 [#allocation4], 4
      %s29 = int_to_ptr.vmem [resolvable:$true] %s28
      %34 = dma.hbm_to_vmem [thread:$0]  %s1, 2048, %s29, [#allocation5], 512, 512, 32
    $region9: #{_lambda_.1} parent=1 // pred_fallthru
      _
    // Predicated region
    $region10: #{_lambda_.1} parent=1 // pred_check
      _
    $region11: #{_lambda_.1} parent=1 // pred_check_branch
      %36 = sbr.rel (0) target = $region13
    $region12: #{_lambda_.1} parent=1 // pred_region
      %s38 = ssub.s32 8192, 8192
      %39 = vsyncadd [#allocation8], %s38
      %s40 = sshll.u32 [#allocation7], 4
      %s41 = int_to_ptr.vmem [resolvable:$true] %s40
      %46 = dma.hbm_to_vmem [thread:$0]  %s2, 8192, %s41, [#allocation8], 512, 512, 32
    $region13: #{_lambda_.1} parent=1 // pred_fallthru
      _
    // Predicated region
    $region14: #{_lambda_.1} parent=1 // pred_check
      _
    $region15: #{_lambda_.1} parent=1 // pred_check_branch
      %48 = sbr.rel (0) target = $region17
    $region16: #{_lambda_.1} parent=1 // pred_region
      _
    $region17: #{_lambda_.1} parent=1 // pred_fallthru
      _
    // Predicated region
    $region18: #{_lambda_.1} parent=1 // pred_check
      _
    $region19: #{_lambda_.1} parent=1 // pred_check_branch
      %50 = sbr.rel (0) target = $region21
    $region20: #{_lambda_.1} parent=1 // pred_region
      %s52 = ssub.s32 8192, 8192
      %53 = vsyncadd [#allocation8], %s52
      %s54 = sshll.u32 [#allocation9], 4
      %s55 = int_to_ptr.vmem [resolvable:$true] %s54
      %60 = dma.hbm_to_vmem [thread:$0]  %s4, 8192, %s55, [#allocation8], 512, 512, 32
    $region21: #{_lambda_.1} parent=1 // pred_fallthru
      _
    // Predicated region
    $region22: #{_lambda_.1} parent=1 // pred_check
      _
    $region23: #{_lambda_.1} parent=1 // pred_check_branch
      %62 = sbr.rel (0) target = $region25
    $region24: #{_lambda_.1} parent=1 // pred_region
      _
    $region25: #{_lambda_.1} parent=1 // pred_fallthru
      _
    // Predicated region
    $region26: #{_lambda_.1} parent=1 // pred_check
      _
    $region27: #{_lambda_.1} parent=1 // pred_check_branch
      %64 = sbr.rel (0) target = $region29
    $region28: #{_lambda_.1} parent=1 // pred_region
      _
    $region29: #{_lambda_.1} parent=1 // pred_fallthru
      _
    // Predicated region
    $region30: #{_lambda_.1} parent=1 // pred_check
      _
    $region31: #{_lambda_.1} parent=1 // pred_check_branch
      %66 = sbr.rel (0) target = $region33
    $region32: #{_lambda_.1} parent=1 // pred_region
      _
    $region33: #{_lambda_.1} parent=1 // pred_fallthru
      _
    // Predicated region
    $region34: #{_lambda_.1} parent=1 // pred_check
      _
    $region35: #{_lambda_.1} parent=1 // pred_check_branch
      %68 = sbr.rel (0) target = $region37
    $region36: #{_lambda_.1} parent=1 // pred_region
      _
    $region37: #{_lambda_.1} parent=1 // pred_fallthru
      _
    // Predicated region
    $region38: #{_lambda_.1} parent=1 // pred_check
      _
    $region39: #{_lambda_.1} parent=1 // pred_check_branch
      %70 = sbr.rel (0) target = $region41
    $region40: #{_lambda_.1} parent=1 // pred_region
      %71 = dma.done [#allocation5], 2048
    $region41: #{_lambda_.1} parent=1 // pred_fallthru
      _
    // Predicated region
    $region42: #{_lambda_.1} parent=1 // pred_check
      _
    $region43: #{_lambda_.1} parent=1 // pred_check_branch
      %73 = sbr.rel (0) target = $region45
    $region44: #{_lambda_.1} parent=1 // pred_region
      %74 = dma.done [#allocation8], 8192
    $region45: #{_lambda_.1} parent=1 // pred_fallthru
      _
    // Predicated region
    $region46: #{_lambda_.1} parent=1 // pred_check
      _
    $region47: #{_lambda_.1} parent=1 // pred_check_branch
      %76 = sbr.rel (0) target = $region49
    $region48: #{_lambda_.1} parent=1 // pred_region
      %77 = dma.done [#allocation8], 8192
    $region49: #{_lambda_.1} parent=1 // pred_fallthru
      _
    %v78 = vld [vmem:[%s0] sm:$0xff]
    %v79 = vld [vmem:[%s0 + $0x8] sm:$0xff]
    %v80 = vld [vmem:[%s0 + $0x10] sm:$0xff]
    %v81 = vld [vmem:[%s0 + $0x18] sm:$0xff]
    %v82 = vld [vmem:[%s0 + $0x20] sm:$0xff]
    %v83 = vld [vmem:[%s0 + $0x28] sm:$0xff]
    %v84 = vld [vmem:[%s0 + $0x30] sm:$0xff]
    %v85 = vld [vmem:[%s0 + $0x38] sm:$0xff]
    %v86 = vld [vmem:[#allocation4] sm:$0xff]
    %v87 = vld [vmem:[#allocation4 + $0x8] sm:$0xff]
    %v88 = vld [vmem:[#allocation4 + $0x10] sm:$0xff]
    %v89 = vld [vmem:[#allocation4 + $0x18] sm:$0xff]
    %v90 = vld [vmem:[#allocation4 + $0x20] sm:$0xff]
    %v91 = vld [vmem:[#allocation4 + $0x28] sm:$0xff]
    %v92 = vld [vmem:[#allocation4 + $0x30] sm:$0xff]
    %v93 = vld [vmem:[#allocation4 + $0x38] sm:$0xff]
    %v94 = vld [vmem:[#allocation4 + $0x40] sm:$0xff]
    %v95 = vld [vmem:[#allocation4 + $0x48] sm:$0xff]
    %v96 = vld [vmem:[#allocation4 + $0x50] sm:$0xff]
    %v97 = vld [vmem:[#allocation4 + $0x58] sm:$0xff]
    %v98 = vld [vmem:[#allocation4 + $0x60] sm:$0xff]
    %v99 = vld [vmem:[#allocation4 + $0x68] sm:$0xff]
    %v100 = vld [vmem:[#allocation4 + $0x70] sm:$0xff]
    %v101 = vld [vmem:[#allocation4 + $0x78] sm:$0xff]
    %v102 = vld [vmem:[%s3] sm:$0xf]
    %v104 = vlaneseq
    %v105 = vshrl.u32 %v104, 7
    %v106 = vsub.s32 0, %v105
    %v107 = vrot.slane %v102, %v106
    %v108 = vlaneseq
    %v109 = vshrl.u32 %v108, 7
    %v110 = vsub.s32 1, %v109
    %v111 = vrot.slane %v102, %v110
    %v112 = vlaneseq
    %v113 = vshrl.u32 %v112, 7
    %v114 = vsub.s32 2, %v113
    %v115 = vrot.slane %v102, %v114
    %v116 = vlaneseq
    %v117 = vshrl.u32 %v116, 7
    %v118 = vsub.s32 3, %v117
    %v119 = vrot.slane %v102, %v118
    %vm124 = vcmask 261120
    %v126 = vsel %vm124, %v78, 0
    %v129 = vsel %vm124, %v79, 0
    %v132 = vsel %vm124, %v80, 0
    %v135 = vsel %vm124, %v81, 0
    %v138 = vsel %vm124, %v82, 0
    %v141 = vsel %vm124, %v83, 0
    %v144 = vsel %vm124, %v84, 0
    %v147 = vsel %vm124, %v85, 0
    %149 = vmatprep.subr.mxu0 %v87
    %150 = vmatpush1.msra.mxu0 %v86
    %151 = vmatprep.subr.mxu0 %v91
    %152 = vmatpush1.msra.mxu0 %v90
    %153 = vmatprep.subr.mxu0 %v95
    %154 = vmatpush1.msra.mxu0 %v94
    %155 = vmatprep.subr.mxu0 %v99
    %156 = vmatpush1.msra.mxu0 %v98
    %157 = vmatprep.subr.mxu0 0.0
    %158 = vmatpush1.msra.mxu0 0.0
    %159 = vmatprep.subr.mxu0 0.0
    %160 = vmatpush1.msra.mxu0 0.0
    %161 = vmatprep.subr.mxu0 0.0
    %162 = vmatpush1.msra.mxu0 0.0
    %163 = vmatprep.subr.mxu0 0.0
    %164 = vmatpush1.msra.mxu0 0.0
    %165 = vmatprep.subr.mxu0 0.0
    %166 = vmatpush1.msra.mxu0 0.0
    %167 = vmatprep.subr.mxu0 0.0
    %168 = vmatpush1.msra.mxu0 0.0
    %169 = vmatprep.subr.mxu0 0.0
    %170 = vmatpush1.msra.mxu0 0.0
    %171 = vmatprep.subr.mxu0 0.0
    %172 = vmatpush1.msra.mxu0 0.0
    %173 = vmatprep.subr.mxu0 0.0
    %174 = vmatpush1.msra.mxu0 0.0
    %175 = vmatprep.subr.mxu0 0.0
    %176 = vmatpush1.msra.mxu0 0.0
    %177 = vmatprep.subr.mxu0 0.0
    %178 = vmatpush1.msra.mxu0 0.0
    %179 = vmatprep.subr.mxu0 0.0
    %180 = vmatpush1.msra.mxu0 0.0
    %181 = vmatprep.subr.mxu0 0.0
    %182 = vmatpush1.msra.mxu0 0.0
    %183 = vmatprep.subr.mxu0 0.0
    %184 = vmatpush1.msra.mxu0 0.0
    %185 = vmatprep.subr.mxu0 0.0
    %186 = vmatpush1.msra.mxu0 0.0
    %187 = vmatprep.subr.mxu0 0.0
    %188 = vmatpush1.msra.mxu0 0.0
    %189 = vmatprep.subr.mxu0 0.0
    %190 = vmatpush1.msra.mxu0 0.0
    %191 = vmatprep.subr.mxu0 0.0
    %192 = vmatpush1.msra.mxu0 0.0
    %193 = vmatprep.subr.mxu0 0.0
    %194 = vmatpush1.msra.mxu0 0.0
    %195 = vmatprep.subr.mxu0 0.0
    %196 = vmatpush1.msra.mxu0 0.0
    %197 = vmatprep.subr.mxu0 0.0
    %198 = vmatpush1.msra.mxu0 0.0
    %199 = vmatprep.subr.mxu0 0.0
    %200 = vmatpush1.msra.mxu0 0.0
    %201 = vmatprep.subr.mxu0 0.0
    %202 = vmatpush1.msra.mxu0 0.0
    %203 = vmatprep.subr.mxu0 0.0
    %204 = vmatpush1.msra.mxu0 0.0
    %205 = vmatprep.subr.mxu0 0.0
    %206 = vmatpush1.msra.mxu0 0.0
    %207 = vmatprep.subr.mxu0 0.0
    %208 = vmatpush1.msra.mxu0 0.0
    %209 = vmatprep.subr.mxu0 0.0
    %210 = vmatpush1.msra.mxu0 0.0
    %211 = vmatprep.subr.mxu0 0.0
    %212 = vmatpush1.msra.mxu0 0.0
    %213 = vmatprep.mubr.f32.mxu0 0.0
    %214 = vmatmul.mubr.f32.gmra.mrb[0].mxu0 %v126
    %v215 = vpop.f32.mrb[0].mxu0
    %v216 = vadd.f32 %v107, %v215
    %v217 = vpop.f32.mrb[0].mxu0
    %v218 = vadd.f32 %v111, %v217
    %219 = vmatprep.mubr.f32.mxu0 0.0
    %220 = vmatmul.mubr.f32.gmra.mrb[0].mxu0 %v129
    %v221 = vpop.f32.mrb[0].mxu0
    %v222 = vadd.f32 %v107, %v221
    %v223 = vpop.f32.mrb[0].mxu0
    %v224 = vadd.f32 %v111, %v223
    %225 = vmatprep.mubr.f32.mxu0 0.0
    %226 = vmatmul.mubr.f32.gmra.mrb[0].mxu0 %v132
    %v227 = vpop.f32.mrb[0].mxu0
    %v228 = vadd.f32 %v107, %v227
    %v229 = vpop.f32.mrb[0].mxu0
    %v230 = vadd.f32 %v111, %v229
    %231 = vmatprep.mubr.f32.mxu0 0.0
    %232 = vmatmul.mubr.f32.gmra.mrb[0].mxu0 %v135
    %v233 = vpop.f32.mrb[0].mxu0
    %v234 = vadd.f32 %v107, %v233
    %v235 = vpop.f32.mrb[0].mxu0
    %v236 = vadd.f32 %v111, %v235
    %237 = vmatprep.mubr.f32.mxu0 0.0
    %238 = vmatmul.mubr.f32.gmra.mrb[0].mxu0 %v138
    %v239 = vpop.f32.mrb[0].mxu0
    %v240 = vadd.f32 %v107, %v239
    %v241 = vpop.f32.mrb[0].mxu0
    %v242 = vadd.f32 %v111, %v241
    %243 = vmatprep.mubr.f32.mxu0 0.0
    %244 = vmatmul.mubr.f32.gmra.mrb[0].mxu0 %v141
    %v245 = vpop.f32.mrb[0].mxu0
    %v246 = vadd.f32 %v107, %v245
    %v247 = vpop.f32.mrb[0].mxu0
    %v248 = vadd.f32 %v111, %v247
    %249 = vmatprep.mubr.f32.mxu0 0.0
    %250 = vmatmul.mubr.f32.gmra.mrb[0].mxu0 %v144
    %v251 = vpop.f32.mrb[0].mxu0
    %v252 = vadd.f32 %v107, %v251
    %v253 = vpop.f32.mrb[0].mxu0
    %v254 = vadd.f32 %v111, %v253
    %255 = vmatprep.mubr.f32.mxu0 0.0
    %256 = vmatmul.mubr.f32.gmra.mrb[0].mxu0 %v147
    %v257 = vpop.f32.mrb[0].mxu0
    %v258 = vadd.f32 %v107, %v257
    %v259 = vpop.f32.mrb[0].mxu0
    %v260 = vadd.f32 %v111, %v259
    %261 = vdwg.mxu0
    %262 = vmatprep.subr.mxu0 %v89
    %263 = vmatpush1.msra.mxu0 %v88
    %264 = vmatprep.subr.mxu0 %v93
    %265 = vmatpush1.msra.mxu0 %v92
    %266 = vmatprep.subr.mxu0 %v97
    %267 = vmatpush1.msra.mxu0 %v96
    %268 = vmatprep.subr.mxu0 %v101
    %269 = vmatpush1.msra.mxu0 %v100
    %270 = vmatprep.subr.mxu0 0.0
    %271 = vmatpush1.msra.mxu0 0.0
    %272 = vmatprep.subr.mxu0 0.0
    %273 = vmatpush1.msra.mxu0 0.0
    %274 = vmatprep.subr.mxu0 0.0
    %275 = vmatpush1.msra.mxu0 0.0
    %276 = vmatprep.subr.mxu0 0.0
    %277 = vmatpush1.msra.mxu0 0.0
    %278 = vmatprep.subr.mxu0 0.0
    %279 = vmatpush1.msra.mxu0 0.0
    %280 = vmatprep.subr.mxu0 0.0
    %281 = vmatpush1.msra.mxu0 0.0
    %282 = vmatprep.subr.mxu0 0.0
    %283 = vmatpush1.msra.mxu0 0.0
    %284 = vmatprep.subr.mxu0 0.0
    %285 = vmatpush1.msra.mxu0 0.0
    %286 = vmatprep.subr.mxu0 0.0
    %287 = vmatpush1.msra.mxu0 0.0
    %288 = vmatprep.subr.mxu0 0.0
    %289 = vmatpush1.msra.mxu0 0.0
    %290 = vmatprep.subr.mxu0 0.0
    %291 = vmatpush1.msra.mxu0 0.0
    %292 = vmatprep.subr.mxu0 0.0
    %293 = vmatpush1.msra.mxu0 0.0
    %294 = vmatprep.subr.mxu0 0.0
    %295 = vmatpush1.msra.mxu0 0.0
    %296 = vmatprep.subr.mxu0 0.0
    %297 = vmatpush1.msra.mxu0 0.0
    %298 = vmatprep.subr.mxu0 0.0
    %299 = vmatpush1.msra.mxu0 0.0
    %300 = vmatprep.subr.mxu0 0.0
    %301 = vmatpush1.msra.mxu0 0.0
    %302 = vmatprep.subr.mxu0 0.0
    %303 = vmatpush1.msra.mxu0 0.0
    %304 = vmatprep.subr.mxu0 0.0
    %305 = vmatpush1.msra.mxu0 0.0
    %306 = vmatprep.subr.mxu0 0.0
    %307 = vmatpush1.msra.mxu0 0.0
    %308 = vmatprep.subr.mxu0 0.0
    %309 = vmatpush1.msra.mxu0 0.0
    %310 = vmatprep.subr.mxu0 0.0
    %311 = vmatpush1.msra.mxu0 0.0
    %312 = vmatprep.subr.mxu0 0.0
    %313 = vmatpush1.msra.mxu0 0.0
    %314 = vmatprep.subr.mxu0 0.0
    %315 = vmatpush1.msra.mxu0 0.0
    %316 = vmatprep.subr.mxu0 0.0
    %317 = vmatpush1.msra.mxu0 0.0
    %318 = vmatprep.subr.mxu0 0.0
    %319 = vmatpush1.msra.mxu0 0.0
    %320 = vmatprep.subr.mxu0 0.0
    %321 = vmatpush1.msra.mxu0 0.0
    %322 = vmatprep.subr.mxu0 0.0
    %323 = vmatpush1.msra.mxu0 0.0
    %324 = vmatprep.subr.mxu0 0.0
    %325 = vmatpush1.msra.mxu0 0.0
    %326 = vmatprep.mubr.f32.mxu0 0.0
    %327 = vmatmul.mubr.f32.gmra.mrb[0].mxu0 %v126
    %v328 = vpop.f32.mrb[0].mxu0
    %v329 = vadd.f32 %v115, %v328
    %v330 = vpop.f32.mrb[0].mxu0
    %v331 = vadd.f32 %v119, %v330
    %332 = vmatprep.mubr.f32.mxu0 0.0
    %333 = vmatmul.mubr.f32.gmra.mrb[0].mxu0 %v129
    %v334 = vpop.f32.mrb[0].mxu0
    %v335 = vadd.f32 %v115, %v334
    %v336 = vpop.f32.mrb[0].mxu0
    %v337 = vadd.f32 %v119, %v336
    %338 = vmatprep.mubr.f32.mxu0 0.0
    %339 = vmatmul.mubr.f32.gmra.mrb[0].mxu0 %v132
    %v340 = vpop.f32.mrb[0].mxu0
    %v341 = vadd.f32 %v115, %v340
    %v342 = vpop.f32.mrb[0].mxu0
    %v343 = vadd.f32 %v119, %v342
    %344 = vmatprep.mubr.f32.mxu0 0.0
    %345 = vmatmul.mubr.f32.gmra.mrb[0].mxu0 %v135
    %v346 = vpop.f32.mrb[0].mxu0
    %v347 = vadd.f32 %v115, %v346
    %v348 = vpop.f32.mrb[0].mxu0
    %v349 = vadd.f32 %v119, %v348
    %350 = vmatprep.mubr.f32.mxu0 0.0
    %351 = vmatmul.mubr.f32.gmra.mrb[0].mxu0 %v138
    %v352 = vpop.f32.mrb[0].mxu0
    %v353 = vadd.f32 %v115, %v352
    %v354 = vpop.f32.mrb[0].mxu0
    %v355 = vadd.f32 %v119, %v354
    %356 = vmatprep.mubr.f32.mxu0 0.0
    %357 = vmatmul.mubr.f32.gmra.mrb[0].mxu0 %v141
    %v358 = vpop.f32.mrb[0].mxu0
    %v359 = vadd.f32 %v115, %v358
    %v360 = vpop.f32.mrb[0].mxu0
    %v361 = vadd.f32 %v119, %v360
    %362 = vmatprep.mubr.f32.mxu0 0.0
    %363 = vmatmul.mubr.f32.gmra.mrb[0].mxu0 %v144
    %v364 = vpop.f32.mrb[0].mxu0
    %v365 = vadd.f32 %v115, %v364
    %v366 = vpop.f32.mrb[0].mxu0
    %v367 = vadd.f32 %v119, %v366
    %368 = vmatprep.mubr.f32.mxu0 0.0
    %369 = vmatmul.mubr.f32.gmra.mrb[0].mxu0 %v147
    %v370 = vpop.f32.mrb[0].mxu0
    %v371 = vadd.f32 %v115, %v370
    %v372 = vpop.f32.mrb[0].mxu0
    %v373 = vadd.f32 %v119, %v372
    %374 = vdwg.mxu0
    %375 = vst [vmem:[#allocation2] sm:$0xff] %v216
    %376 = vst [vmem:[#allocation2 + $0x8] sm:$0xff] %v218
    %377 = vst [vmem:[#allocation2 + $0x10] sm:$0xff] %v329
    %378 = vst [vmem:[#allocation2 + $0x18] sm:$0xff] %v331
    %379 = vst [vmem:[#allocation2 + $0x20] sm:$0xff] %v222
    %380 = vst [vmem:[#allocation2 + $0x28] sm:$0xff] %v224
    %381 = vst [vmem:[#allocation2 + $0x30] sm:$0xff] %v335
    %382 = vst [vmem:[#allocation2 + $0x38] sm:$0xff] %v337
    %383 = vst [vmem:[#allocation2 + $0x40] sm:$0xff] %v228
    %384 = vst [vmem:[#allocation2 + $0x48] sm:$0xff] %v230
    %385 = vst [vmem:[#allocation2 + $0x50] sm:$0xff] %v341
    %386 = vst [vmem:[#allocation2 + $0x58] sm:$0xff] %v343
    %387 = vst [vmem:[#allocation2 + $0x60] sm:$0xff] %v234
    %388 = vst [vmem:[#allocation2 + $0x68] sm:$0xff] %v236
    %389 = vst [vmem:[#allocation2 + $0x70] sm:$0xff] %v347
    %390 = vst [vmem:[#allocation2 + $0x78] sm:$0xff] %v349
    %391 = vst [vmem:[#allocation2 + $0x80] sm:$0xff] %v240
    %392 = vst [vmem:[#allocation2 + $0x88] sm:$0xff] %v242
    %393 = vst [vmem:[#allocation2 + $0x90] sm:$0xff] %v353
    %394 = vst [vmem:[#allocation2 + $0x98] sm:$0xff] %v355
    %395 = vst [vmem:[#allocation2 + $0xa0] sm:$0xff] %v246
    %396 = vst [vmem:[#allocation2 + $0xa8] sm:$0xff] %v248
    %397 = vst [vmem:[#allocation2 + $0xb0] sm:$0xff] %v359
    %398 = vst [vmem:[#allocation2 + $0xb8] sm:$0xff] %v361
    %399 = vst [vmem:[#allocation2 + $0xc0] sm:$0xff] %v252
    %400 = vst [vmem:[#allocation2 + $0xc8] sm:$0xff] %v254
    %401 = vst [vmem:[#allocation2 + $0xd0] sm:$0xff] %v365
    %402 = vst [vmem:[#allocation2 + $0xd8] sm:$0xff] %v367
    %403 = vst [vmem:[#allocation2 + $0xe0] sm:$0xff] %v258
    %404 = vst [vmem:[#allocation2 + $0xe8] sm:$0xff] %v260
    %405 = vst [vmem:[#allocation2 + $0xf0] sm:$0xff] %v371
    %406 = vst [vmem:[#allocation2 + $0xf8] sm:$0xff] %v373
    %v407 = vld [vmem:[#allocation2] sm:$0xff]
    %v408 = vld [vmem:[#allocation2 + $0x8] sm:$0xff]
    %v409 = vld [vmem:[#allocation2 + $0x10] sm:$0xff]
    %v410 = vld [vmem:[#allocation2 + $0x18] sm:$0xff]
    %v411 = vld [vmem:[#allocation7] sm:$0xff]
    %v412 = vld [vmem:[#allocation7 + $0x8] sm:$0xff]
    %v413 = vld [vmem:[#allocation7 + $0x10] sm:$0xff]
    %v414 = vld [vmem:[#allocation7 + $0x18] sm:$0xff]
    %v415 = vld [vmem:[#allocation7 + $0x20] sm:$0xff]
    %v416 = vld [vmem:[#allocation7 + $0x28] sm:$0xff]
    %v417 = vld [vmem:[#allocation7 + $0x30] sm:$0xff]
    %v418 = vld [vmem:[#allocation7 + $0x38] sm:$0xff]
    %v419 = vld [vmem:[#allocation7 + $0x40] sm:$0xff]
    %v420 = vld [vmem:[#allocation7 + $0x48] sm:$0xff]
    %v421 = vld [vmem:[#allocation7 + $0x50] sm:$0xff]
    %v422 = vld [vmem:[#allocation7 + $0x58] sm:$0xff]
    %v423 = vld [vmem:[#allocation7 + $0x60] sm:$0xff]
    %v424 = vld [vmem:[#allocation7 + $0x68] sm:$0xff]
    %v425 = vld [vmem:[#allocation7 + $0x70] sm:$0xff]
    %v426 = vld [vmem:[#allocation7 + $0x78] sm:$0xff]
    %v427 = vld [vmem:[#allocation7 + $0x80] sm:$0xff]
    %v428 = vld [vmem:[#allocation7 + $0x88] sm:$0xff]
    %v429 = vld [vmem:[#allocation7 + $0x90] sm:$0xff]
    %v430 = vld [vmem:[#allocation7 + $0x98] sm:$0xff]
    %v431 = vld [vmem:[#allocation7 + $0xa0] sm:$0xff]
    %v432 = vld [vmem:[#allocation7 + $0xa8] sm:$0xff]
    %v433 = vld [vmem:[#allocation7 + $0xb0] sm:$0xff]
    %v434 = vld [vmem:[#allocation7 + $0xb8] sm:$0xff]
    %v435 = vld [vmem:[#allocation7 + $0xc0] sm:$0xff]
    %v436 = vld [vmem:[#allocation7 + $0xc8] sm:$0xff]
    %v437 = vld [vmem:[#allocation7 + $0xd0] sm:$0xff]
    %v438 = vld [vmem:[#allocation7 + $0xd8] sm:$0xff]
    %v439 = vld [vmem:[#allocation7 + $0xe0] sm:$0xff]
    %v440 = vld [vmem:[#allocation7 + $0xe8] sm:$0xff]
    %v441 = vld [vmem:[#allocation7 + $0xf0] sm:$0xff]
    %v442 = vld [vmem:[#allocation7 + $0xf8] sm:$0xff]
    %v443 = vld [vmem:[#allocation7 + $0x100] sm:$0xff]
    %v444 = vld [vmem:[#allocation7 + $0x108] sm:$0xff]
    %v445 = vld [vmem:[#allocation7 + $0x110] sm:$0xff]
    %v446 = vld [vmem:[#allocation7 + $0x118] sm:$0xff]
    %v447 = vld [vmem:[#allocation7 + $0x120] sm:$0xff]
    %v448 = vld [vmem:[#allocation7 + $0x128] sm:$0xff]
    %v449 = vld [vmem:[#allocation7 + $0x130] sm:$0xff]
    %v450 = vld [vmem:[#allocation7 + $0x138] sm:$0xff]
    %v451 = vld [vmem:[#allocation7 + $0x140] sm:$0xff]
    %v452 = vld [vmem:[#allocation7 + $0x148] sm:$0xff]
    %v453 = vld [vmem:[#allocation7 + $0x150] sm:$0xff]
    %v454 = vld [vmem:[#allocation7 + $0x158] sm:$0xff]
    %v455 = vld [vmem:[#allocation7 + $0x160] sm:$0xff]
    %v456 = vld [vmem:[#allocation7 + $0x168] sm:$0xff]
    %v457 = vld [vmem:[#allocation7 + $0x170] sm:$0xff]
    %v458 = vld [vmem:[#allocation7 + $0x178] sm:$0xff]
    %v459 = vld [vmem:[#allocation7 + $0x180] sm:$0xff]
    %v460 = vld [vmem:[#allocation7 + $0x188] sm:$0xff]
    %v461 = vld [vmem:[#allocation7 + $0x190] sm:$0xff]
    %v462 = vld [vmem:[#allocation7 + $0x198] sm:$0xff]
    %v463 = vld [vmem:[#allocation7 + $0x1a0] sm:$0xff]
    %v464 = vld [vmem:[#allocation7 + $0x1a8] sm:$0xff]
    %v465 = vld [vmem:[#allocation7 + $0x1b0] sm:$0xff]
    %v466 = vld [vmem:[#allocation7 + $0x1b8] sm:$0xff]
    %v467 = vld [vmem:[#allocation7 + $0x1c0] sm:$0xff]
    %v468 = vld [vmem:[#allocation7 + $0x1c8] sm:$0xff]
    %v469 = vld [vmem:[#allocation7 + $0x1d0] sm:$0xff]
    %v470 = vld [vmem:[#allocation7 + $0x1d8] sm:$0xff]
    %v471 = vld [vmem:[#allocation7 + $0x1e0] sm:$0xff]
    %v472 = vld [vmem:[#allocation7 + $0x1e8] sm:$0xff]
    %v473 = vld [vmem:[#allocation7 + $0x1f0] sm:$0xff]
    %v474 = vld [vmem:[#allocation7 + $0x1f8] sm:$0xff]
    %475 = vmatprep.subr.mxu0 %v412
    %476 = vmatpush1.msra.mxu0 %v411
    %477 = vmatprep.subr.mxu0 %v416
    %478 = vmatpush1.msra.mxu0 %v415
    %479 = vmatprep.subr.mxu0 %v420
    %480 = vmatpush1.msra.mxu0 %v419
    %481 = vmatprep.subr.mxu0 %v424
    %482 = vmatpush1.msra.mxu0 %v423
    %483 = vmatprep.subr.mxu0 %v428
    %484 = vmatpush1.msra.mxu0 %v427
    %485 = vmatprep.subr.mxu0 %v432
    %486 = vmatpush1.msra.mxu0 %v431
    %487 = vmatprep.subr.mxu0 %v436
    %488 = vmatpush1.msra.mxu0 %v435
    %489 = vmatprep.subr.mxu0 %v440
    %490 = vmatpush1.msra.mxu0 %v439
    %491 = vmatprep.subr.mxu0 %v444
    %492 = vmatpush1.msra.mxu0 %v443
    %493 = vmatprep.subr.mxu0 %v448
    %494 = vmatpush1.msra.mxu0 %v447
    %495 = vmatprep.subr.mxu0 %v452
    %496 = vmatpush1.msra.mxu0 %v451
    %497 = vmatprep.subr.mxu0 %v456
    %498 = vmatpush1.msra.mxu0 %v455
    %499 = vmatprep.subr.mxu0 %v460
    %500 = vmatpush1.msra.mxu0 %v459
    %501 = vmatprep.subr.mxu0 %v464
    %502 = vmatpush1.msra.mxu0 %v463
    %503 = vmatprep.subr.mxu0 %v468
    %504 = vmatpush1.msra.mxu0 %v467
    %505 = vmatprep.subr.mxu0 %v472
    %506 = vmatpush1.msra.mxu0 %v471
    %507 = vmatprep.subr.mxu0 0.0
    %508 = vmatpush1.msra.mxu0 0.0
    %509 = vmatprep.subr.mxu0 0.0
    %510 = vmatpush1.msra.mxu0 0.0
    %511 = vmatprep.subr.mxu0 0.0
    %512 = vmatpush1.msra.mxu0 0.0
    %513 = vmatprep.subr.mxu0 0.0
    %514 = vmatpush1.msra.mxu0 0.0
    %515 = vmatprep.subr.mxu0 0.0
    %516 = vmatpush1.msra.mxu0 0.0
    %517 = vmatprep.subr.mxu0 0.0
    %518 = vmatpush1.msra.mxu0 0.0
    %519 = vmatprep.subr.mxu0 0.0
    %520 = vmatpush1.msra.mxu0 0.0
    %521 = vmatprep.subr.mxu0 0.0
    %522 = vmatpush1.msra.mxu0 0.0
    %523 = vmatprep.subr.mxu0 0.0
    %524 = vmatpush1.msra.mxu0 0.0
    %525 = vmatprep.subr.mxu0 0.0
    %526 = vmatpush1.msra.mxu0 0.0
    %527 = vmatprep.subr.mxu0 0.0
    %528 = vmatpush1.msra.mxu0 0.0
    %529 = vmatprep.subr.mxu0 0.0
    %530 = vmatpush1.msra.mxu0 0.0
    %531 = vmatprep.subr.mxu0 0.0
    %532 = vmatpush1.msra.mxu0 0.0
    %533 = vmatprep.subr.mxu0 0.0
    %534 = vmatpush1.msra.mxu0 0.0
    %535 = vmatprep.subr.mxu0 0.0
    %536 = vmatpush1.msra.mxu0 0.0
    %537 = vmatprep.subr.mxu0 0.0
    %538 = vmatpush1.msra.mxu0 0.0
    %539 = vmatprep.mubr.f32.mxu0 0.0
    %540 = vmatmul.mubr.f32.gmra.mrb[0].mxu0 0.0
    %v541 = vpop.f32.mrb[0].mxu0
    %v542 = vadd.f32 0.0, %v541
    %v543 = vpop.f32.mrb[0].mxu0
    %v544 = vadd.f32 0.0, %v543
    %545 = vdwg.mxu0
    %546 = vmatprep.subr.mxu0 %v414
    %547 = vmatpush1.msra.mxu0 %v413
    %548 = vmatprep.subr.mxu0 %v418
    %549 = vmatpush1.msra.mxu0 %v417
    %550 = vmatprep.subr.mxu0 %v422
    %551 = vmatpush1.msra.mxu0 %v421
    %552 = vmatprep.subr.mxu0 %v426
    %553 = vmatpush1.msra.mxu0 %v425
    %554 = vmatprep.subr.mxu0 %v430
    %555 = vmatpush1.msra.mxu0 %v429
    %556 = vmatprep.subr.mxu0 %v434
    %557 = vmatpush1.msra.mxu0 %v433
    %558 = vmatprep.subr.mxu0 %v438
    %559 = vmatpush1.msra.mxu0 %v437
    %560 = vmatprep.subr.mxu0 %v442
    %561 = vmatpush1.msra.mxu0 %v441
    %562 = vmatprep.subr.mxu0 %v446
    %563 = vmatpush1.msra.mxu0 %v445
    %564 = vmatprep.subr.mxu0 %v450
    %565 = vmatpush1.msra.mxu0 %v449
    %566 = vmatprep.subr.mxu0 %v454
    %567 = vmatpush1.msra.mxu0 %v453
    %568 = vmatprep.subr.mxu0 %v458
    %569 = vmatpush1.msra.mxu0 %v457
    %570 = vmatprep.subr.mxu0 %v462
    %571 = vmatpush1.msra.mxu0 %v461
    %572 = vmatprep.subr.mxu0 %v466
    %573 = vmatpush1.msra.mxu0 %v465
    %574 = vmatprep.subr.mxu0 %v470
    %575 = vmatpush1.msra.mxu0 %v469
    %576 = vmatprep.subr.mxu0 %v474
    %577 = vmatpush1.msra.mxu0 %v473
    %578 = vmatprep.subr.mxu0 0.0
    %579 = vmatpush1.msra.mxu0 0.0
    %580 = vmatprep.subr.mxu0 0.0
    %581 = vmatpush1.msra.mxu0 0.0
    %582 = vmatprep.subr.mxu0 0.0
    %583 = vmatpush1.msra.mxu0 0.0
    %584 = vmatprep.subr.mxu0 0.0
    %585 = vmatpush1.msra.mxu0 0.0
    %586 = vmatprep.subr.mxu0 0.0
    %587 = vmatpush1.msra.mxu0 0.0
    %588 = vmatprep.subr.mxu0 0.0
    %589 = vmatpush1.msra.mxu0 0.0
    %590 = vmatprep.subr.mxu0 0.0
    %591 = vmatpush1.msra.mxu0 0.0
    %592 = vmatprep.subr.mxu0 0.0
    %593 = vmatpush1.msra.mxu0 0.0
    %594 = vmatprep.subr.mxu0 0.0
    %595 = vmatpush1.msra.mxu0 0.0
    %596 = vmatprep.subr.mxu0 0.0
    %597 = vmatpush1.msra.mxu0 0.0
    %598 = vmatprep.subr.mxu0 0.0
    %599 = vmatpush1.msra.mxu0 0.0
    %600 = vmatprep.subr.mxu0 0.0
    %601 = vmatpush1.msra.mxu0 0.0
    %602 = vmatprep.subr.mxu0 0.0
    %603 = vmatpush1.msra.mxu0 0.0
    %604 = vmatprep.subr.mxu0 0.0
    %605 = vmatpush1.msra.mxu0 0.0
    %606 = vmatprep.subr.mxu0 0.0
    %607 = vmatpush1.msra.mxu0 0.0
    %608 = vmatprep.subr.mxu0 0.0
    %609 = vmatpush1.msra.mxu0 0.0
    %610 = vmatprep.mubr.f32.mxu0 0.0
    %611 = vmatmul.mubr.f32.gmra.mrb[0].mxu0 0.0
    %v612 = vpop.f32.mrb[0].mxu0
    %v613 = vadd.f32 0.0, %v612
    %v614 = vpop.f32.mrb[0].mxu0
    %v615 = vadd.f32 0.0, %v614
    %616 = vdwg.mxu0
    %v617 = vadd.f32 %v407, %v542
    %v618 = vadd.f32 %v408, %v544
    %v619 = vadd.f32 %v409, %v613
    %v620 = vadd.f32 %v410, %v615
    %v621 = vxor.u32 %v617, 2147483648
    %v622 = vxor.u32 %v618, 2147483648
    %v623 = vxor.u32 %v619, 2147483648
    %v624 = vmul.f32 %v621, 1.442695
    %v625 = vpow.pop %v624
    %v626 = vmul.f32 %v622, 1.442695
    %v627 = vpow.pop %v626
    %v628 = vmul.f32 %v623, 1.442695
    %v629 = vpow.pop %v628
    %v630 = vadd.f32 %v625, 1.0
    %v631 = vadd.f32 %v627, 1.0
    %v632 = vadd.f32 %v629, 1.0
    %v633 = vrcp.pop %v630
    %v634 = vmul.f32 1.0, %v633
    %v635 = vrcp.pop %v631
    %v636 = vmul.f32 1.0, %v635
    %v637 = vrcp.pop %v632
    %v638 = vmul.f32 1.0, %v637
    %v639 = vtanh.pop %v620
    %v640 = vmul.f32 %v636, 0.0
    %v641 = vmul.f32 %v634, %v639
    %v642 = vadd.f32 %v640, %v641
    %v643 = vtanh.pop %v642
    %v644 = vmul.f32 %v638, %v643
    %645 = vst [vmem:[#allocation3] sm:$0xff] %v644
    %v646 = vld [vmem:[#allocation2 + $0x20] sm:$0xff]
    %v647 = vld [vmem:[#allocation2 + $0x28] sm:$0xff]
    %v648 = vld [vmem:[#allocation2 + $0x30] sm:$0xff]
    %v649 = vld [vmem:[#allocation2 + $0x38] sm:$0xff]
    %v650 = vld [vmem:[#allocation7] sm:$0xff]
    %v651 = vld [vmem:[#allocation7 + $0x8] sm:$0xff]
    %v652 = vld [vmem:[#allocation7 + $0x10] sm:$0xff]
    %v653 = vld [vmem:[#allocation7 + $0x18] sm:$0xff]
    %v654 = vld [vmem:[#allocation7 + $0x20] sm:$0xff]
    %v655 = vld [vmem:[#allocation7 + $0x28] sm:$0xff]
    %v656 = vld [vmem:[#allocation7 + $0x30] sm:$0xff]
    %v657 = vld [vmem:[#allocation7 + $0x38] sm:$0xff]
    %v658 = vld [vmem:[#allocation7 + $0x40] sm:$0xff]
    %v659 = vld [vmem:[#allocation7 + $0x48] sm:$0xff]
    %v660 = vld [vmem:[#allocation7 + $0x50] sm:$0xff]
    %v661 = vld [vmem:[#allocation7 + $0x58] sm:$0xff]
    %v662 = vld [vmem:[#allocation7 + $0x60] sm:$0xff]
    %v663 = vld [vmem:[#allocation7 + $0x68] sm:$0xff]
    %v664 = vld [vmem:[#allocation7 + $0x70] sm:$0xff]
    %v665 = vld [vmem:[#allocation7 + $0x78] sm:$0xff]
    %v666 = vld [vmem:[#allocation7 + $0x80] sm:$0xff]
    %v667 = vld [vmem:[#allocation7 + $0x88] sm:$0xff]
    %v668 = vld [vmem:[#allocation7 + $0x90] sm:$0xff]
    %v669 = vld [vmem:[#allocation7 + $0x98] sm:$0xff]
    %v670 = vld [vmem:[#allocation7 + $0xa0] sm:$0xff]
    %v671 = vld [vmem:[#allocation7 + $0xa8] sm:$0xff]
    %v672 = vld [vmem:[#allocation7 + $0xb0] sm:$0xff]
    %v673 = vld [vmem:[#allocation7 + $0xb8] sm:$0xff]
    %v674 = vld [vmem:[#allocation7 + $0xc0] sm:$0xff]
    %v675 = vld [vmem:[#allocation7 + $0xc8] sm:$0xff]
    %v676 = vld [vmem:[#allocation7 + $0xd0] sm:$0xff]
    %v677 = vld [vmem:[#allocation7 + $0xd8] sm:$0xff]
    %v678 = vld [vmem:[#allocation7 + $0xe0] sm:$0xff]
    %v679 = vld [vmem:[#allocation7 + $0xe8] sm:$0xff]
    %v680 = vld [vmem:[#allocation7 + $0xf0] sm:$0xff]
    %v681 = vld [vmem:[#allocation7 + $0xf8] sm:$0xff]
    %v682 = vld [vmem:[#allocation7 + $0x100] sm:$0xff]
    %v683 = vld [vmem:[#allocation7 + $0x108] sm:$0xff]
    %v684 = vld [vmem:[#allocation7 + $0x110] sm:$0xff]
    %v685 = vld [vmem:[#allocation7 + $0x118] sm:$0xff]
    %v686 = vld [vmem:[#allocation7 + $0x120] sm:$0xff]
    %v687 = vld [vmem:[#allocation7 + $0x128] sm:$0xff]
    %v688 = vld [vmem:[#allocation7 + $0x130] sm:$0xff]
    %v689 = vld [vmem:[#allocation7 + $0x138] sm:$0xff]
    %v690 = vld [vmem:[#allocation7 + $0x140] sm:$0xff]
    %v691 = vld [vmem:[#allocation7 + $0x148] sm:$0xff]
    %v692 = vld [vmem:[#allocation7 + $0x150] sm:$0xff]
    %v693 = vld [vmem:[#allocation7 + $0x158] sm:$0xff]
    %v694 = vld [vmem:[#allocation7 + $0x160] sm:$0xff]
    %v695 = vld [vmem:[#allocation7 + $0x168] sm:$0xff]
    %v696 = vld [vmem:[#allocation7 + $0x170] sm:$0xff]
    %v697 = vld [vmem:[#allocation7 + $0x178] sm:$0xff]
    %v698 = vld [vmem:[#allocation7 + $0x180] sm:$0xff]
    %v699 = vld [vmem:[#allocation7 + $0x188] sm:$0xff]
    %v700 = vld [vmem:[#allocation7 + $0x190] sm:$0xff]
    %v701 = vld [vmem:[#allocation7 + $0x198] sm:$0xff]
    %v702 = vld [vmem:[#allocation7 + $0x1a0] sm:$0xff]
    %v703 = vld [vmem:[#allocation7 + $0x1a8] sm:$0xff]
    %v704 = vld [vmem:[#allocation7 + $0x1b0] sm:$0xff]
    %v705 = vld [vmem:[#allocation7 + $0x1b8] sm:$0xff]
    %v706 = vld [vmem:[#allocation7 + $0x1c0] sm:$0xff]
    %v707 = vld [vmem:[#allocation7 + $0x1c8] sm:$0xff]
    %v708 = vld [vmem:[#allocation7 + $0x1d0] sm:$0xff]
    %v709 = vld [vmem:[#allocation7 + $0x1d8] sm:$0xff]
    %v710 = vld [vmem:[#allocation7 + $0x1e0] sm:$0xff]
    %v711 = vld [vmem:[#allocation7 + $0x1e8] sm:$0xff]
    %v712 = vld [vmem:[#allocation7 + $0x1f0] sm:$0xff]
    %v713 = vld [vmem:[#allocation7 + $0x1f8] sm:$0xff]
    %714 = vmatprep.subr.mxu0 %v651
    %715 = vmatpush1.msra.mxu0 %v650
    %716 = vmatprep.subr.mxu0 %v655
    %717 = vmatpush1.msra.mxu0 %v654
    %718 = vmatprep.subr.mxu0 %v659
    %719 = vmatpush1.msra.mxu0 %v658
    %720 = vmatprep.subr.mxu0 %v663
    %721 = vmatpush1.msra.mxu0 %v662
    %722 = vmatprep.subr.mxu0 %v667
    %723 = vmatpush1.msra.mxu0 %v666
    %724 = vmatprep.subr.mxu0 %v671
    %725 = vmatpush1.msra.mxu0 %v670
    %726 = vmatprep.subr.mxu0 %v675
    %727 = vmatpush1.msra.mxu0 %v674
    %728 = vmatprep.subr.mxu0 %v679
    %729 = vmatpush1.msra.mxu0 %v678
    %730 = vmatprep.subr.mxu0 %v683
    %731 = vmatpush1.msra.mxu0 %v682
    %732 = vmatprep.subr.mxu0 %v687
    %733 = vmatpush1.msra.mxu0 %v686
    %734 = vmatprep.subr.mxu0 %v691
    %735 = vmatpush1.msra.mxu0 %v690
    %736 = vmatprep.subr.mxu0 %v695
    %737 = vmatpush1.msra.mxu0 %v694
    %738 = vmatprep.subr.mxu0 %v699
    %739 = vmatpush1.msra.mxu0 %v698
    %740 = vmatprep.subr.mxu0 %v703
    %741 = vmatpush1.msra.mxu0 %v702
    %742 = vmatprep.subr.mxu0 %v707
    %743 = vmatpush1.msra.mxu0 %v706
    %744 = vmatprep.subr.mxu0 %v711
    %745 = vmatpush1.msra.mxu0 %v710
    %746 = vmatprep.subr.mxu0 0.0
    %747 = vmatpush1.msra.mxu0 0.0
    %748 = vmatprep.subr.mxu0 0.0
    %749 = vmatpush1.msra.mxu0 0.0
    %750 = vmatprep.subr.mxu0 0.0
    %751 = vmatpush1.msra.mxu0 0.0
    %752 = vmatprep.subr.mxu0 0.0
    %753 = vmatpush1.msra.mxu0 0.0
    %754 = vmatprep.subr.mxu0 0.0
    %755 = vmatpush1.msra.mxu0 0.0
    %756 = vmatprep.subr.mxu0 0.0
    %757 = vmatpush1.msra.mxu0 0.0
    %758 = vmatprep.subr.mxu0 0.0
    %759 = vmatpush1.msra.mxu0 0.0
    %760 = vmatprep.subr.mxu0 0.0
    %761 = vmatpush1.msra.mxu0 0.0
    %762 = vmatprep.subr.mxu0 0.0
    %763 = vmatpush1.msra.mxu0 0.0
    %764 = vmatprep.subr.mxu0 0.0
    %765 = vmatpush1.msra.mxu0 0.0
    %766 = vmatprep.subr.mxu0 0.0
    %767 = vmatpush1.msra.mxu0 0.0
    %768 = vmatprep.subr.mxu0 0.0
    %769 = vmatpush1.msra.mxu0 0.0
    %770 = vmatprep.subr.mxu0 0.0
    %771 = vmatpush1.msra.mxu0 0.0
    %772 = vmatprep.subr.mxu0 0.0
    %773 = vmatpush1.msra.mxu0 0.0
    %774 = vmatprep.subr.mxu0 0.0
    %775 = vmatpush1.msra.mxu0 0.0
    %776 = vmatprep.subr.mxu0 0.0
    %777 = vmatpush1.msra.mxu0 0.0
    %778 = vmatprep.mubr.f32.mxu0 0.0
    %779 = vmatmul.mubr.f32.gmra.mrb[0].mxu0 %v644
    %v780 = vpop.f32.mrb[0].mxu0
    %v781 = vadd.f32 0.0, %v780
    %v782 = vpop.f32.mrb[0].mxu0
    %v783 = vadd.f32 0.0, %v782
    %784 = vdwg.mxu0
    %785 = vmatprep.subr.mxu0 %v653
    %786 = vmatpush1.msra.mxu0 %v652
    %787 = vmatprep.subr.mxu0 %v657
    %788 = vmatpush1.msra.mxu0 %v656
    %789 = vmatprep.subr.mxu0 %v661
    %790 = vmatpush1.msra.mxu0 %v660
    %791 = vmatprep.subr.mxu0 %v665
    %792 = vmatpush1.msra.mxu0 %v664
    %793 = vmatprep.subr.mxu0 %v669
    %794 = vmatpush1.msra.mxu0 %v668
    %795 = vmatprep.subr.mxu0 %v673
    %796 = vmatpush1.msra.mxu0 %v672
    %797 = vmatprep.subr.mxu0 %v677
    %798 = vmatpush1.msra.mxu0 %v676
    %799 = vmatprep.subr.mxu0 %v681
    %800 = vmatpush1.msra.mxu0 %v680
    %801 = vmatprep.subr.mxu0 %v685
    %802 = vmatpush1.msra.mxu0 %v684
    %803 = vmatprep.subr.mxu0 %v689
    %804 = vmatpush1.msra.mxu0 %v688
    %805 = vmatprep.subr.mxu0 %v693
    %806 = vmatpush1.msra.mxu0 %v692
    %807 = vmatprep.subr.mxu0 %v697
    %808 = vmatpush1.msra.mxu0 %v696
    %809 = vmatprep.subr.mxu0 %v701
    %810 = vmatpush1.msra.mxu0 %v700
    %811 = vmatprep.subr.mxu0 %v705
    %812 = vmatpush1.msra.mxu0 %v704
    %813 = vmatprep.subr.mxu0 %v709
    %814 = vmatpush1.msra.mxu0 %v708
    %815 = vmatprep.subr.mxu0 %v713
    %816 = vmatpush1.msra.mxu0 %v712
    %817 = vmatprep.subr.mxu0 0.0
    %818 = vmatpush1.msra.mxu0 0.0
    %819 = vmatprep.subr.mxu0 0.0
    %820 = vmatpush1.msra.mxu0 0.0
    %821 = vmatprep.subr.mxu0 0.0
    %822 = vmatpush1.msra.mxu0 0.0
    %823 = vmatprep.subr.mxu0 0.0
    %824 = vmatpush1.msra.mxu0 0.0
    %825 = vmatprep.subr.mxu0 0.0
    %826 = vmatpush1.msra.mxu0 0.0
    %827 = vmatprep.subr.mxu0 0.0
    %828 = vmatpush1.msra.mxu0 0.0
    %829 = vmatprep.subr.mxu0 0.0
    %830 = vmatpush1.msra.mxu0 0.0
    %831 = vmatprep.subr.mxu0 0.0
    %832 = vmatpush1.msra.mxu0 0.0
    %833 = vmatprep.subr.mxu0 0.0
    %834 = vmatpush1.msra.mxu0 0.0
    %835 = vmatprep.subr.mxu0 0.0
    %836 = vmatpush1.msra.mxu0 0.0
    %837 = vmatprep.subr.mxu0 0.0
    %838 = vmatpush1.msra.mxu0 0.0
    %839 = vmatprep.subr.mxu0 0.0
    %840 = vmatpush1.msra.mxu0 0.0
    %841 = vmatprep.subr.mxu0 0.0
    %842 = vmatpush1.msra.mxu0 0.0
    %843 = vmatprep.subr.mxu0 0.0
    %844 = vmatpush1.msra.mxu0 0.0
    %845 = vmatprep.subr.mxu0 0.0
    %846 = vmatpush1.msra.mxu0 0.0
    %847 = vmatprep.subr.mxu0 0.0
    %848 = vmatpush1.msra.mxu0 0.0
    %849 = vmatprep.mubr.f32.mxu0 0.0
    %850 = vmatmul.mubr.f32.gmra.mrb[0].mxu0 %v644
    %v851 = vpop.f32.mrb[0].mxu0
    %v852 = vadd.f32 0.0, %v851
    %v853 = vpop.f32.mrb[0].mxu0
    %v854 = vadd.f32 0.0, %v853
    %855 = vdwg.mxu0
    %v856 = vadd.f32 %v646, %v781
    %v857 = vadd.f32 %v647, %v783
    %v858 = vadd.f32 %v648, %v852
    %v859 = vadd.f32 %v649, %v854
    %v860 = vxor.u32 %v856, 2147483648
    %v861 = vxor.u32 %v857, 2147483648
    %v862 = vxor.u32 %v858, 2147483648
    %v863 = vmul.f32 %v860, 1.442695
    %v864 = vpow.pop %v863
    %v865 = vmul.f32 %v861, 1.442695
    %v866 = vpow.pop %v865
    %v867 = vmul.f32 %v862, 1.442695
    %v868 = vpow.pop %v867
    %v869 = vadd.f32 %v864, 1.0
    %v870 = vadd.f32 %v866, 1.0
    %v871 = vadd.f32 %v868, 1.0
    %v872 = vrcp.pop %v869
    %v873 = vmul.f32 1.0, %v872
    %v874 = vrcp.pop %v870
    %v875 = vmul.f32 1.0, %v874
    %v876 = vrcp.pop %v871
    %v877 = vmul.f32 1.0, %v876
    %v878 = vtanh.pop %v859
    %v879 = vmul.f32 %v875, %v642
    %v880 = vmul.f32 %v873, %v878
    %v881 = vadd.f32 %v879, %v880
    %v882 = vtanh.pop %v881
    %v883 = vmul.f32 %v877, %v882
    %884 = vst [vmem:[#allocation3 + $0x8] sm:$0xff] %v883
    %v885 = vld [vmem:[#allocation2 + $0x40] sm:$0xff]
    %v886 = vld [vmem:[#allocation2 + $0x48] sm:$0xff]
    %v887 = vld [vmem:[#allocation2 + $0x50] sm:$0xff]
    %v888 = vld [vmem:[#allocation2 + $0x58] sm:$0xff]
    %v889 = vld [vmem:[#allocation7] sm:$0xff]
    %v890 = vld [vmem:[#allocation7 + $0x8] sm:$0xff]
    %v891 = vld [vmem:[#allocation7 + $0x10] sm:$0xff]
    %v892 = vld [vmem:[#allocation7 + $0x18] sm:$0xff]
    %v893 = vld [vmem:[#allocation7 + $0x20] sm:$0xff]
    %v894 = vld [vmem:[#allocation7 + $0x28] sm:$0xff]
    %v895 = vld [vmem:[#allocation7 + $0x30] sm:$0xff]
    %v896 = vld [vmem:[#allocation7 + $0x38] sm:$0xff]
    %v897 = vld [vmem:[#allocation7 + $0x40] sm:$0xff]
    %v898 = vld [vmem:[#allocation7 + $0x48] sm:$0xff]
    %v899 = vld [vmem:[#allocation7 + $0x50] sm:$0xff]
    %v900 = vld [vmem:[#allocation7 + $0x58] sm:$0xff]
    %v901 = vld [vmem:[#allocation7 + $0x60] sm:$0xff]
    %v902 = vld [vmem:[#allocation7 + $0x68] sm:$0xff]
    %v903 = vld [vmem:[#allocation7 + $0x70] sm:$0xff]
    %v904 = vld [vmem:[#allocation7 + $0x78] sm:$0xff]
    %v905 = vld [vmem:[#allocation7 + $0x80] sm:$0xff]
    %v906 = vld [vmem:[#allocation7 + $0x88] sm:$0xff]
    %v907 = vld [vmem:[#allocation7 + $0x90] sm:$0xff]
    %v908 = vld [vmem:[#allocation7 + $0x98] sm:$0xff]
    %v909 = vld [vmem:[#allocation7 + $0xa0] sm:$0xff]
    %v910 = vld [vmem:[#allocation7 + $0xa8] sm:$0xff]
    %v911 = vld [vmem:[#allocation7 + $0xb0] sm:$0xff]
    %v912 = vld [vmem:[#allocation7 + $0xb8] sm:$0xff]
    %v913 = vld [vmem:[#allocation7 + $0xc0] sm:$0xff]
    %v914 = vld [vmem:[#allocation7 + $0xc8] sm:$0xff]
    %v915 = vld [vmem:[#allocation7 + $0xd0] sm:$0xff]
    %v916 = vld [vmem:[#allocation7 + $0xd8] sm:$0xff]
    %v917 = vld [vmem:[#allocation7 + $0xe0] sm:$0xff]
    %v918 = vld [vmem:[#allocation7 + $0xe8] sm:$0xff]
    %v919 = vld [vmem:[#allocation7 + $0xf0] sm:$0xff]
    %v920 = vld [vmem:[#allocation7 + $0xf8] sm:$0xff]
    %v921 = vld [vmem:[#allocation7 + $0x100] sm:$0xff]
    %v922 = vld [vmem:[#allocation7 + $0x108] sm:$0xff]
    %v923 = vld [vmem:[#allocation7 + $0x110] sm:$0xff]
    %v924 = vld [vmem:[#allocation7 + $0x118] sm:$0xff]
    %v925 = vld [vmem:[#allocation7 + $0x120] sm:$0xff]
    %v926 = vld [vmem:[#allocation7 + $0x128] sm:$0xff]
    %v927 = vld [vmem:[#allocation7 + $0x130] sm:$0xff]
    %v928 = vld [vmem:[#allocation7 + $0x138] sm:$0xff]
    %v929 = vld [vmem:[#allocation7 + $0x140] sm:$0xff]
    %v930 = vld [vmem:[#allocation7 + $0x148] sm:$0xff]
    %v931 = vld [vmem:[#allocation7 + $0x150] sm:$0xff]
    %v932 = vld [vmem:[#allocation7 + $0x158] sm:$0xff]
    %v933 = vld [vmem:[#allocation7 + $0x160] sm:$0xff]
    %v934 = vld [vmem:[#allocation7 + $0x168] sm:$0xff]
    %v935 = vld [vmem:[#allocation7 + $0x170] sm:$0xff]
    %v936 = vld [vmem:[#allocation7 + $0x178] sm:$0xff]
    %v937 = vld [vmem:[#allocation7 + $0x180] sm:$0xff]
    %v938 = vld [vmem:[#allocation7 + $0x188] sm:$0xff]
    %v939 = vld [vmem:[#allocation7 + $0x190] sm:$0xff]
    %v940 = vld [vmem:[#allocation7 + $0x198] sm:$0xff]
    %v941 = vld [vmem:[#allocation7 + $0x1a0] sm:$0xff]
    %v942 = vld [vmem:[#allocation7 + $0x1a8] sm:$0xff]
    %v943 = vld [vmem:[#allocation7 + $0x1b0] sm:$0xff]
    %v944 = vld [vmem:[#allocation7 + $0x1b8] sm:$0xff]
    %v945 = vld [vmem:[#allocation7 + $0x1c0] sm:$0xff]
    %v946 = vld [vmem:[#allocation7 + $0x1c8] sm:$0xff]
    %v947 = vld [vmem:[#allocation7 + $0x1d0] sm:$0xff]
    %v948 = vld [vmem:[#allocation7 + $0x1d8] sm:$0xff]
    %v949 = vld [vmem:[#allocation7 + $0x1e0] sm:$0xff]
    %v950 = vld [vmem:[#allocation7 + $0x1e8] sm:$0xff]
    %v951 = vld [vmem:[#allocation7 + $0x1f0] sm:$0xff]
    %v952 = vld [vmem:[#allocation7 + $0x1f8] sm:$0xff]
    %953 = vmatprep.subr.mxu0 %v890
    %954 = vmatpush1.msra.mxu0 %v889
    %955 = vmatprep.subr.mxu0 %v894
    %956 = vmatpush1.msra.mxu0 %v893
    %957 = vmatprep.subr.mxu0 %v898
    %958 = vmatpush1.msra.mxu0 %v897
    %959 = vmatprep.subr.mxu0 %v902
    %960 = vmatpush1.msra.mxu0 %v901
    %961 = vmatprep.subr.mxu0 %v906
    %962 = vmatpush1.msra.mxu0 %v905
    %963 = vmatprep.subr.mxu0 %v910
    %964 = vmatpush1.msra.mxu0 %v909
    %965 = vmatprep.subr.mxu0 %v914
    %966 = vmatpush1.msra.mxu0 %v913
    %967 = vmatprep.subr.mxu0 %v918
    %968 = vmatpush1.msra.mxu0 %v917
    %969 = vmatprep.subr.mxu0 %v922
    %970 = vmatpush1.msra.mxu0 %v921
    %971 = vmatprep.subr.mxu0 %v926
    %972 = vmatpush1.msra.mxu0 %v925
    %973 = vmatprep.subr.mxu0 %v930
    %974 = vmatpush1.msra.mxu0 %v929
    %975 = vmatprep.subr.mxu0 %v934
    %976 = vmatpush1.msra.mxu0 %v933
    %977 = vmatprep.subr.mxu0 %v938
    %978 = vmatpush1.msra.mxu0 %v937
    %979 = vmatprep.subr.mxu0 %v942
    %980 = vmatpush1.msra.mxu0 %v941
    %981 = vmatprep.subr.mxu0 %v946
    %982 = vmatpush1.msra.mxu0 %v945
    %983 = vmatprep.subr.mxu0 %v950
    %984 = vmatpush1.msra.mxu0 %v949
    %985 = vmatprep.subr.mxu0 0.0
    %986 = vmatpush1.msra.mxu0 0.0
    %987 = vmatprep.subr.mxu0 0.0
    %988 = vmatpush1.msra.mxu0 0.0
    %989 = vmatprep.subr.mxu0 0.0
    %990 = vmatpush1.msra.mxu0 0.0
    %991 = vmatprep.subr.mxu0 0.0
    %992 = vmatpush1.msra.mxu0 0.0
    %993 = vmatprep.subr.mxu0 0.0
    %994 = vmatpush1.msra.mxu0 0.0
    %995 = vmatprep.subr.mxu0 0.0
    %996 = vmatpush1.msra.mxu0 0.0
    %997 = vmatprep.subr.mxu0 0.0
    %998 = vmatpush1.msra.mxu0 0.0
    %999 = vmatprep.subr.mxu0 0.0
    %1000 = vmatpush1.msra.mxu0 0.0
    %1001 = vmatprep.subr.mxu0 0.0
    %1002 = vmatpush1.msra.mxu0 0.0
    %1003 = vmatprep.subr.mxu0 0.0
    %1004 = vmatpush1.msra.mxu0 0.0
    %1005 = vmatprep.subr.mxu0 0.0
    %1006 = vmatpush1.msra.mxu0 0.0
    %1007 = vmatprep.subr.mxu0 0.0
    %1008 = vmatpush1.msra.mxu0 0.0
    %1009 = vmatprep.subr.mxu0 0.0
    %1010 = vmatpush1.msra.mxu0 0.0
    %1011 = vmatprep.subr.mxu0 0.0
    %1012 = vmatpush1.msra.mxu0 0.0
    %1013 = vmatprep.subr.mxu0 0.0
    %1014 = vmatpush1.msra.mxu0 0.0
    %1015 = vmatprep.subr.mxu0 0.0
    %1016 = vmatpush1.msra.mxu0 0.0
    %1017 = vmatprep.mubr.f32.mxu0 0.0
    %1018 = vmatmul.mubr.f32.gmra.mrb[0].mxu0 %v883
    %v1019 = vpop.f32.mrb[0].mxu0
    %v1020 = vadd.f32 0.0, %v1019
    %v1021 = vpop.f32.mrb[0].mxu0
    %v1022 = vadd.f32 0.0, %v1021
    %1023 = vdwg.mxu0
    %1024 = vmatprep.subr.mxu0 %v892
    %1025 = vmatpush1.msra.mxu0 %v891
    %1026 = vmatprep.subr.mxu0 %v896
    %1027 = vmatpush1.msra.mxu0 %v895
    %1028 = vmatprep.subr.mxu0 %v900
    %1029 = vmatpush1.msra.mxu0 %v899
    %1030 = vmatprep.subr.mxu0 %v904
    %1031 = vmatpush1.msra.mxu0 %v903
    %1032 = vmatprep.subr.mxu0 %v908
    %1033 = vmatpush1.msra.mxu0 %v907
    %1034 = vmatprep.subr.mxu0 %v912
    %1035 = vmatpush1.msra.mxu0 %v911
    %1036 = vmatprep.subr.mxu0 %v916
    %1037 = vmatpush1.msra.mxu0 %v915
    %1038 = vmatprep.subr.mxu0 %v920
    %1039 = vmatpush1.msra.mxu0 %v919
    %1040 = vmatprep.subr.mxu0 %v924
    %1041 = vmatpush1.msra.mxu0 %v923
    %1042 = vmatprep.subr.mxu0 %v928
    %1043 = vmatpush1.msra.mxu0 %v927
    %1044 = vmatprep.subr.mxu0 %v932
    %1045 = vmatpush1.msra.mxu0 %v931
    %1046 = vmatprep.subr.mxu0 %v936
    %1047 = vmatpush1.msra.mxu0 %v935
    %1048 = vmatprep.subr.mxu0 %v940
    %1049 = vmatpush1.msra.mxu0 %v939
    %1050 = vmatprep.subr.mxu0 %v944
    %1051 = vmatpush1.msra.mxu0 %v943
    %1052 = vmatprep.subr.mxu0 %v948
    %1053 = vmatpush1.msra.mxu0 %v947
    %1054 = vmatprep.subr.mxu0 %v952
    %1055 = vmatpush1.msra.mxu0 %v951
    %1056 = vmatprep.subr.mxu0 0.0
    %1057 = vmatpush1.msra.mxu0 0.0
    %1058 = vmatprep.subr.mxu0 0.0
    %1059 = vmatpush1.msra.mxu0 0.0
    %1060 = vmatprep.subr.mxu0 0.0
    %1061 = vmatpush1.msra.mxu0 0.0
    %1062 = vmatprep.subr.mxu0 0.0
    %1063 = vmatpush1.msra.mxu0 0.0
    %1064 = vmatprep.subr.mxu0 0.0
    %1065 = vmatpush1.msra.mxu0 0.0
    %1066 = vmatprep.subr.mxu0 0.0
    %1067 = vmatpush1.msra.mxu0 0.0
    %1068 = vmatprep.subr.mxu0 0.0
    %1069 = vmatpush1.msra.mxu0 0.0
    %1070 = vmatprep.subr.mxu0 0.0
    %1071 = vmatpush1.msra.mxu0 0.0
    %1072 = vmatprep.subr.mxu0 0.0
    %1073 = vmatpush1.msra.mxu0 0.0
    %1074 = vmatprep.subr.mxu0 0.0
    %1075 = vmatpush1.msra.mxu0 0.0
    %1076 = vmatprep.subr.mxu0 0.0
    %1077 = vmatpush1.msra.mxu0 0.0
    %1078 = vmatprep.subr.mxu0 0.0
    %1079 = vmatpush1.msra.mxu0 0.0
    %1080 = vmatprep.subr.mxu0 0.0
    %1081 = vmatpush1.msra.mxu0 0.0
    %1082 = vmatprep.subr.mxu0 0.0
    %1083 = vmatpush1.msra.mxu0 0.0
    %1084 = vmatprep.subr.mxu0 0.0
    %1085 = vmatpush1.msra.mxu0 0.0
    %1086 = vmatprep.subr.mxu0 0.0
    %1087 = vmatpush1.msra.mxu0 0.0
    %1088 = vmatprep.mubr.f32.mxu0 0.0
    %1089 = vmatmul.mubr.f32.gmra.mrb[0].mxu0 %v883
    %v1090 = vpop.f32.mrb[0].mxu0
    %v1091 = vadd.f32 0.0, %v1090
    %v1092 = vpop.f32.mrb[0].mxu0
    %v1093 = vadd.f32 0.0, %v1092
    %1094 = vdwg.mxu0
    %v1095 = vadd.f32 %v885, %v1020
    %v1096 = vadd.f32 %v886, %v1022
    %v1097 = vadd.f32 %v887, %v1091
    %v1098 = vadd.f32 %v888, %v1093
    %v1099 = vxor.u32 %v1095, 2147483648
    %v1100 = vxor.u32 %v1096, 2147483648
    %v1101 = vxor.u32 %v1097, 2147483648
    %v1102 = vmul.f32 %v1099, 1.442695
    %v1103 = vpow.pop %v1102
    %v1104 = vmul.f32 %v1100, 1.442695
    %v1105 = vpow.pop %v1104
    %v1106 = vmul.f32 %v1101, 1.442695
    %v1107 = vpow.pop %v1106
    %v1108 = vadd.f32 %v1103, 1.0
    %v1109 = vadd.f32 %v1105, 1.0
    %v1110 = vadd.f32 %v1107, 1.0
    %v1111 = vrcp.pop %v1108
    %v1112 = vmul.f32 1.0, %v1111
    %v1113 = vrcp.pop %v1109
    %v1114 = vmul.f32 1.0, %v1113
    %v1115 = vrcp.pop %v1110
    %v1116 = vmul.f32 1.0, %v1115
    %v1117 = vtanh.pop %v1098
    %v1118 = vmul.f32 %v1114, %v881
    %v1119 = vmul.f32 %v1112, %v1117
    %v1120 = vadd.f32 %v1118, %v1119
    %v1121 = vtanh.pop %v1120
    %v1122 = vmul.f32 %v1116, %v1121
    %1123 = vst [vmem:[#allocation3 + $0x10] sm:$0xff] %v1122
    %v1124 = vld [vmem:[#allocation2 + $0x60] sm:$0xff]
    %v1125 = vld [vmem:[#allocation2 + $0x68] sm:$0xff]
    %v1126 = vld [vmem:[#allocation2 + $0x70] sm:$0xff]
    %v1127 = vld [vmem:[#allocation2 + $0x78] sm:$0xff]
    %v1128 = vld [vmem:[#allocation7] sm:$0xff]
    %v1129 = vld [vmem:[#allocation7 + $0x8] sm:$0xff]
    %v1130 = vld [vmem:[#allocation7 + $0x10] sm:$0xff]
    %v1131 = vld [vmem:[#allocation7 + $0x18] sm:$0xff]
    %v1132 = vld [vmem:[#allocation7 + $0x20] sm:$0xff]
    %v1133 = vld [vmem:[#allocation7 + $0x28] sm:$0xff]
    %v1134 = vld [vmem:[#allocation7 + $0x30] sm:$0xff]
    %v1135 = vld [vmem:[#allocation7 + $0x38] sm:$0xff]
    %v1136 = vld [vmem:[#allocation7 + $0x40] sm:$0xff]
    %v1137 = vld [vmem:[#allocation7 + $0x48] sm:$0xff]
    %v1138 = vld [vmem:[#allocation7 + $0x50] sm:$0xff]
    %v1139 = vld [vmem:[#allocation7 + $0x58] sm:$0xff]
    %v1140 = vld [vmem:[#allocation7 + $0x60] sm:$0xff]
    %v1141 = vld [vmem:[#allocation7 + $0x68] sm:$0xff]
    %v1142 = vld [vmem:[#allocation7 + $0x70] sm:$0xff]
    %v1143 = vld [vmem:[#allocation7 + $0x78] sm:$0xff]
    %v1144 = vld [vmem:[#allocation7 + $0x80] sm:$0xff]
    %v1145 = vld [vmem:[#allocation7 + $0x88] sm:$0xff]
    %v1146 = vld [vmem:[#allocation7 + $0x90] sm:$0xff]
    %v1147 = vld [vmem:[#allocation7 + $0x98] sm:$0xff]
    %v1148 = vld [vmem:[#allocation7 + $0xa0] sm:$0xff]
    %v1149 = vld [vmem:[#allocation7 + $0xa8] sm:$0xff]
    %v1150 = vld [vmem:[#allocation7 + $0xb0] sm:$0xff]
    %v1151 = vld [vmem:[#allocation7 + $0xb8] sm:$0xff]
    %v1152 = vld [vmem:[#allocation7 + $0xc0] sm:$0xff]
    %v1153 = vld [vmem:[#allocation7 + $0xc8] sm:$0xff]
    %v1154 = vld [vmem:[#allocation7 + $0xd0] sm:$0xff]
    %v1155 = vld [vmem:[#allocation7 + $0xd8] sm:$0xff]
    %v1156 = vld [vmem:[#allocation7 + $0xe0] sm:$0xff]
    %v1157 = vld [vmem:[#allocation7 + $0xe8] sm:$0xff]
    %v1158 = vld [vmem:[#allocation7 + $0xf0] sm:$0xff]
    %v1159 = vld [vmem:[#allocation7 + $0xf8] sm:$0xff]
    %v1160 = vld [vmem:[#allocation7 + $0x100] sm:$0xff]
    %v1161 = vld [vmem:[#allocation7 + $0x108] sm:$0xff]
    %v1162 = vld [vmem:[#allocation7 + $0x110] sm:$0xff]
    %v1163 = vld [vmem:[#allocation7 + $0x118] sm:$0xff]
    %v1164 = vld [vmem:[#allocation7 + $0x120] sm:$0xff]
    %v1165 = vld [vmem:[#allocation7 + $0x128] sm:$0xff]
    %v1166 = vld [vmem:[#allocation7 + $0x130] sm:$0xff]
    %v1167 = vld [vmem:[#allocation7 + $0x138] sm:$0xff]
    %v1168 = vld [vmem:[#allocation7 + $0x140] sm:$0xff]
    %v1169 = vld [vmem:[#allocation7 + $0x148] sm:$0xff]
    %v1170 = vld [vmem:[#allocation7 + $0x150] sm:$0xff]
    %v1171 = vld [vmem:[#allocation7 + $0x158] sm:$0xff]
    %v1172 = vld [vmem:[#allocation7 + $0x160] sm:$0xff]
    %v1173 = vld [vmem:[#allocation7 + $0x168] sm:$0xff]
    %v1174 = vld [vmem:[#allocation7 + $0x170] sm:$0xff]
    %v1175 = vld [vmem:[#allocation7 + $0x178] sm:$0xff]
    %v1176 = vld [vmem:[#allocation7 + $0x180] sm:$0xff]
    %v1177 = vld [vmem:[#allocation7 + $0x188] sm:$0xff]
    %v1178 = vld [vmem:[#allocation7 + $0x190] sm:$0xff]
    %v1179 = vld [vmem:[#allocation7 + $0x198] sm:$0xff]
    %v1180 = vld [vmem:[#allocation7 + $0x1a0] sm:$0xff]
    %v1181 = vld [vmem:[#allocation7 + $0x1a8] sm:$0xff]
    %v1182 = vld [vmem:[#allocation7 + $0x1b0] sm:$0xff]
    %v1183 = vld [vmem:[#allocation7 + $0x1b8] sm:$0xff]
    %v1184 = vld [vmem:[#allocation7 + $0x1c0] sm:$0xff]
    %v1185 = vld [vmem:[#allocation7 + $0x1c8] sm:$0xff]
    %v1186 = vld [vmem:[#allocation7 + $0x1d0] sm:$0xff]
    %v1187 = vld [vmem:[#allocation7 + $0x1d8] sm:$0xff]
    %v1188 = vld [vmem:[#allocation7 + $0x1e0] sm:$0xff]
    %v1189 = vld [vmem:[#allocation7 + $0x1e8] sm:$0xff]
    %v1190 = vld [vmem:[#allocation7 + $0x1f0] sm:$0xff]
    %v1191 = vld [vmem:[#allocation7 + $0x1f8] sm:$0xff]
    %1192 = vmatprep.subr.mxu0 %v1129
    %1193 = vmatpush1.msra.mxu0 %v1128
    %1194 = vmatprep.subr.mxu0 %v1133
    %1195 = vmatpush1.msra.mxu0 %v1132
    %1196 = vmatprep.subr.mxu0 %v1137
    %1197 = vmatpush1.msra.mxu0 %v1136
    %1198 = vmatprep.subr.mxu0 %v1141
    %1199 = vmatpush1.msra.mxu0 %v1140
    %1200 = vmatprep.subr.mxu0 %v1145
    %1201 = vmatpush1.msra.mxu0 %v1144
    %1202 = vmatprep.subr.mxu0 %v1149
    %1203 = vmatpush1.msra.mxu0 %v1148
    %1204 = vmatprep.subr.mxu0 %v1153
    %1205 = vmatpush1.msra.mxu0 %v1152
    %1206 = vmatprep.subr.mxu0 %v1157
    %1207 = vmatpush1.msra.mxu0 %v1156
    %1208 = vmatprep.subr.mxu0 %v1161
    %1209 = vmatpush1.msra.mxu0 %v1160
    %1210 = vmatprep.subr.mxu0 %v1165
    %1211 = vmatpush1.msra.mxu0 %v1164
    %1212 = vmatprep.subr.mxu0 %v1169
    %1213 = vmatpush1.msra.mxu0 %v1168
    %1214 = vmatprep.subr.mxu0 %v1173
    %1215 = vmatpush1.msra.mxu0 %v1172
    %1216 = vmatprep.subr.mxu0 %v1177
    %1217 = vmatpush1.msra.mxu0 %v1176
    %1218 = vmatprep.subr.mxu0 %v1181
    %1219 = vmatpush1.msra.mxu0 %v1180
    %1220 = vmatprep.subr.mxu0 %v1185
    %1221 = vmatpush1.msra.mxu0 %v1184
    %1222 = vmatprep.subr.mxu0 %v1189
    %1223 = vmatpush1.msra.mxu0 %v1188
    %1224 = vmatprep.subr.mxu0 0.0
    %1225 = vmatpush1.msra.mxu0 0.0
    %1226 = vmatprep.subr.mxu0 0.0
    %1227 = vmatpush1.msra.mxu0 0.0
    %1228 = vmatprep.subr.mxu0 0.0
    %1229 = vmatpush1.msra.mxu0 0.0
    %1230 = vmatprep.subr.mxu0 0.0
    %1231 = vmatpush1.msra.mxu0 0.0
    %1232 = vmatprep.subr.mxu0 0.0
    %1233 = vmatpush1.msra.mxu0 0.0
    %1234 = vmatprep.subr.mxu0 0.0
    %1235 = vmatpush1.msra.mxu0 0.0
    %1236 = vmatprep.subr.mxu0 0.0
    %1237 = vmatpush1.msra.mxu0 0.0
    %1238 = vmatprep.subr.mxu0 0.0
    %1239 = vmatpush1.msra.mxu0 0.0
    %1240 = vmatprep.subr.mxu0 0.0
    %1241 = vmatpush1.msra.mxu0 0.0
    %1242 = vmatprep.subr.mxu0 0.0
    %1243 = vmatpush1.msra.mxu0 0.0
    %1244 = vmatprep.subr.mxu0 0.0
    %1245 = vmatpush1.msra.mxu0 0.0
    %1246 = vmatprep.subr.mxu0 0.0
    %1247 = vmatpush1.msra.mxu0 0.0
    %1248 = vmatprep.subr.mxu0 0.0
    %1249 = vmatpush1.msra.mxu0 0.0
    %1250 = vmatprep.subr.mxu0 0.0
    %1251 = vmatpush1.msra.mxu0 0.0
    %1252 = vmatprep.subr.mxu0 0.0
    %1253 = vmatpush1.msra.mxu0 0.0
    %1254 = vmatprep.subr.mxu0 0.0
    %1255 = vmatpush1.msra.mxu0 0.0
    %1256 = vmatprep.mubr.f32.mxu0 0.0
    %1257 = vmatmul.mubr.f32.gmra.mrb[0].mxu0 %v1122
    %v1258 = vpop.f32.mrb[0].mxu0
    %v1259 = vadd.f32 0.0, %v1258
    %v1260 = vpop.f32.mrb[0].mxu0
    %v1261 = vadd.f32 0.0, %v1260
    %1262 = vdwg.mxu0
    %1263 = vmatprep.subr.mxu0 %v1131
    %1264 = vmatpush1.msra.mxu0 %v1130
    %1265 = vmatprep.subr.mxu0 %v1135
    %1266 = vmatpush1.msra.mxu0 %v1134
    %1267 = vmatprep.subr.mxu0 %v1139
    %1268 = vmatpush1.msra.mxu0 %v1138
    %1269 = vmatprep.subr.mxu0 %v1143
    %1270 = vmatpush1.msra.mxu0 %v1142
    %1271 = vmatprep.subr.mxu0 %v1147
    %1272 = vmatpush1.msra.mxu0 %v1146
    %1273 = vmatprep.subr.mxu0 %v1151
    %1274 = vmatpush1.msra.mxu0 %v1150
    %1275 = vmatprep.subr.mxu0 %v1155
    %1276 = vmatpush1.msra.mxu0 %v1154
    %1277 = vmatprep.subr.mxu0 %v1159
    %1278 = vmatpush1.msra.mxu0 %v1158
    %1279 = vmatprep.subr.mxu0 %v1163
    %1280 = vmatpush1.msra.mxu0 %v1162
    %1281 = vmatprep.subr.mxu0 %v1167
    %1282 = vmatpush1.msra.mxu0 %v1166
    %1283 = vmatprep.subr.mxu0 %v1171
    %1284 = vmatpush1.msra.mxu0 %v1170
    %1285 = vmatprep.subr.mxu0 %v1175
    %1286 = vmatpush1.msra.mxu0 %v1174
    %1287 = vmatprep.subr.mxu0 %v1179
    %1288 = vmatpush1.msra.mxu0 %v1178
    %1289 = vmatprep.subr.mxu0 %v1183
    %1290 = vmatpush1.msra.mxu0 %v1182
    %1291 = vmatprep.subr.mxu0 %v1187
    %1292 = vmatpush1.msra.mxu0 %v1186
    %1293 = vmatprep.subr.mxu0 %v1191
    %1294 = vmatpush1.msra.mxu0 %v1190
    %1295 = vmatprep.subr.mxu0 0.0
    %1296 = vmatpush1.msra.mxu0 0.0
    %1297 = vmatprep.subr.mxu0 0.0
    %1298 = vmatpush1.msra.mxu0 0.0
    %1299 = vmatprep.subr.mxu0 0.0
    %1300 = vmatpush1.msra.mxu0 0.0
    %1301 = vmatprep.subr.mxu0 0.0
    %1302 = vmatpush1.msra.mxu0 0.0
    %1303 = vmatprep.subr.mxu0 0.0
    %1304 = vmatpush1.msra.mxu0 0.0
    %1305 = vmatprep.subr.mxu0 0.0
    %1306 = vmatpush1.msra.mxu0 0.0
    %1307 = vmatprep.subr.mxu0 0.0
    %1308 = vmatpush1.msra.mxu0 0.0
    %1309 = vmatprep.subr.mxu0 0.0
    %1310 = vmatpush1.msra.mxu0 0.0
    %1311 = vmatprep.subr.mxu0 0.0
    %1312 = vmatpush1.msra.mxu0 0.0
    %1313 = vmatprep.subr.mxu0 0.0
    %1314 = vmatpush1.msra.mxu0 0.0
    %1315 = vmatprep.subr.mxu0 0.0
    %1316 = vmatpush1.msra.mxu0 0.0
    %1317 = vmatprep.subr.mxu0 0.0
    %1318 = vmatpush1.msra.mxu0 0.0
    %1319 = vmatprep.subr.mxu0 0.0
    %1320 = vmatpush1.msra.mxu0 0.0
    %1321 = vmatprep.subr.mxu0 0.0
    %1322 = vmatpush1.msra.mxu0 0.0
    %1323 = vmatprep.subr.mxu0 0.0
    %1324 = vmatpush1.msra.mxu0 0.0
    %1325 = vmatprep.subr.mxu0 0.0
    %1326 = vmatpush1.msra.mxu0 0.0
    %1327 = vmatprep.mubr.f32.mxu0 0.0
    %1328 = vmatmul.mubr.f32.gmra.mrb[0].mxu0 %v1122
    %v1329 = vpop.f32.mrb[0].mxu0
    %v1330 = vadd.f32 0.0, %v1329
    %v1331 = vpop.f32.mrb[0].mxu0
    %v1332 = vadd.f32 0.0, %v1331
    %1333 = vdwg.mxu0
    %v1334 = vadd.f32 %v1124, %v1259
    %v1335 = vadd.f32 %v1125, %v1261
    %v1336 = vadd.f32 %v1126, %v1330
    %v1337 = vadd.f32 %v1127, %v1332
    %v1338 = vxor.u32 %v1334, 2147483648
    %v1339 = vxor.u32 %v1335, 2147483648
    %v1340 = vxor.u32 %v1336, 2147483648
    %v1341 = vmul.f32 %v1338, 1.442695
    %v1342 = vpow.pop %v1341
    %v1343 = vmul.f32 %v1339, 1.442695
    %v1344 = vpow.pop %v1343
    %v1345 = vmul.f32 %v1340, 1.442695
    %v1346 = vpow.pop %v1345
    %v1347 = vadd.f32 %v1342, 1.0
    %v1348 = vadd.f32 %v1344, 1.0
    %v1349 = vadd.f32 %v1346, 1.0
    %v1350 = vrcp.pop %v1347
    %v1351 = vmul.f32 1.0, %v1350
    %v1352 = vrcp.pop %v1348
    %v1353 = vmul.f32 1.0, %v1352
    %v1354 = vrcp.pop %v1349
    %v1355 = vmul.f32 1.0, %v1354
    %v1356 = vtanh.pop %v1337
    %v1357 = vmul.f32 %v1353, %v1120
    %v1358 = vmul.f32 %v1351, %v1356
    %v1359 = vadd.f32 %v1357, %v1358
    %v1360 = vtanh.pop %v1359
    %v1361 = vmul.f32 %v1355, %v1360
    %1362 = vst [vmem:[#allocation3 + $0x18] sm:$0xff] %v1361
    %v1363 = vld [vmem:[#allocation2 + $0x80] sm:$0xff]
    %v1364 = vld [vmem:[#allocation2 + $0x88] sm:$0xff]
    %v1365 = vld [vmem:[#allocation2 + $0x90] sm:$0xff]
    %v1366 = vld [vmem:[#allocation2 + $0x98] sm:$0xff]
    %v1367 = vld [vmem:[#allocation7] sm:$0xff]
    %v1368 = vld [vmem:[#allocation7 + $0x8] sm:$0xff]
    %v1369 = vld [vmem:[#allocation7 + $0x10] sm:$0xff]
    %v1370 = vld [vmem:[#allocation7 + $0x18] sm:$0xff]
    %v1371 = vld [vmem:[#allocation7 + $0x20] sm:$0xff]
    %v1372 = vld [vmem:[#allocation7 + $0x28] sm:$0xff]
    %v1373 = vld [vmem:[#allocation7 + $0x30] sm:$0xff]
    %v1374 = vld [vmem:[#allocation7 + $0x38] sm:$0xff]
    %v1375 = vld [vmem:[#allocation7 + $0x40] sm:$0xff]
    %v1376 = vld [vmem:[#allocation7 + $0x48] sm:$0xff]
    %v1377 = vld [vmem:[#allocation7 + $0x50] sm:$0xff]
    %v1378 = vld [vmem:[#allocation7 + $0x58] sm:$0xff]
    %v1379 = vld [vmem:[#allocation7 + $0x60] sm:$0xff]
    %v1380 = vld [vmem:[#allocation7 + $0x68] sm:$0xff]
    %v1381 = vld [vmem:[#allocation7 + $0x70] sm:$0xff]
    %v1382 = vld [vmem:[#allocation7 + $0x78] sm:$0xff]
    %v1383 = vld [vmem:[#allocation7 + $0x80] sm:$0xff]
    %v1384 = vld [vmem:[#allocation7 + $0x88] sm:$0xff]
    %v1385 = vld [vmem:[#allocation7 + $0x90] sm:$0xff]
    %v1386 = vld [vmem:[#allocation7 + $0x98] sm:$0xff]
    %v1387 = vld [vmem:[#allocation7 + $0xa0] sm:$0xff]
    %v1388 = vld [vmem:[#allocation7 + $0xa8] sm:$0xff]
    %v1389 = vld [vmem:[#allocation7 + $0xb0] sm:$0xff]
    %v1390 = vld [vmem:[#allocation7 + $0xb8] sm:$0xff]
    %v1391 = vld [vmem:[#allocation7 + $0xc0] sm:$0xff]
    %v1392 = vld [vmem:[#allocation7 + $0xc8] sm:$0xff]
    %v1393 = vld [vmem:[#allocation7 + $0xd0] sm:$0xff]
    %v1394 = vld [vmem:[#allocation7 + $0xd8] sm:$0xff]
    %v1395 = vld [vmem:[#allocation7 + $0xe0] sm:$0xff]
    %v1396 = vld [vmem:[#allocation7 + $0xe8] sm:$0xff]
    %v1397 = vld [vmem:[#allocation7 + $0xf0] sm:$0xff]
    %v1398 = vld [vmem:[#allocation7 + $0xf8] sm:$0xff]
    %v1399 = vld [vmem:[#allocation7 + $0x100] sm:$0xff]
    %v1400 = vld [vmem:[#allocation7 + $0x108] sm:$0xff]
    %v1401 = vld [vmem:[#allocation7 + $0x110] sm:$0xff]
    %v1402 = vld [vmem:[#allocation7 + $0x118] sm:$0xff]
    %v1403 = vld [vmem:[#allocation7 + $0x120] sm:$0xff]
    %v1404 = vld [vmem:[#allocation7 + $0x128] sm:$0xff]
    %v1405 = vld [vmem:[#allocation7 + $0x130] sm:$0xff]
    %v1406 = vld [vmem:[#allocation7 + $0x138] sm:$0xff]
    %v1407 = vld [vmem:[#allocation7 + $0x140] sm:$0xff]
    %v1408 = vld [vmem:[#allocation7 + $0x148] sm:$0xff]
    %v1409 = vld [vmem:[#allocation7 + $0x150] sm:$0xff]
    %v1410 = vld [vmem:[#allocation7 + $0x158] sm:$0xff]
    %v1411 = vld [vmem:[#allocation7 + $0x160] sm:$0xff]
    %v1412 = vld [vmem:[#allocation7 + $0x168] sm:$0xff]
    %v1413 = vld [vmem:[#allocation7 + $0x170] sm:$0xff]
    %v1414 = vld [vmem:[#allocation7 + $0x178] sm:$0xff]
    %v1415 = vld [vmem:[#allocation7 + $0x180] sm:$0xff]
    %v1416 = vld [vmem:[#allocation7 + $0x188] sm:$0xff]
    %v1417 = vld [vmem:[#allocation7 + $0x190] sm:$0xff]
    %v1418 = vld [vmem:[#allocation7 + $0x198] sm:$0xff]
    %v1419 = vld [vmem:[#allocation7 + $0x1a0] sm:$0xff]
    %v1420 = vld [vmem:[#allocation7 + $0x1a8] sm:$0xff]
    %v1421 = vld [vmem:[#allocation7 + $0x1b0] sm:$0xff]
    %v1422 = vld [vmem:[#allocation7 + $0x1b8] sm:$0xff]
    %v1423 = vld [vmem:[#allocation7 + $0x1c0] sm:$0xff]
    %v1424 = vld [vmem:[#allocation7 + $0x1c8] sm:$0xff]
    %v1425 = vld [vmem:[#allocation7 + $0x1d0] sm:$0xff]
    %v1426 = vld [vmem:[#allocation7 + $0x1d8] sm:$0xff]
    %v1427 = vld [vmem:[#allocation7 + $0x1e0] sm:$0xff]
    %v1428 = vld [vmem:[#allocation7 + $0x1e8] sm:$0xff]
    %v1429 = vld [vmem:[#allocation7 + $0x1f0] sm:$0xff]
    %v1430 = vld [vmem:[#allocation7 + $0x1f8] sm:$0xff]
    %1431 = vmatprep.subr.mxu0 %v1368
    %1432 = vmatpush1.msra.mxu0 %v1367
    %1433 = vmatprep.subr.mxu0 %v1372
    %1434 = vmatpush1.msra.mxu0 %v1371
    %1435 = vmatprep.subr.mxu0 %v1376
    %1436 = vmatpush1.msra.mxu0 %v1375
    %1437 = vmatprep.subr.mxu0 %v1380
    %1438 = vmatpush1.msra.mxu0 %v1379
    %1439 = vmatprep.subr.mxu0 %v1384
    %1440 = vmatpush1.msra.mxu0 %v1383
    %1441 = vmatprep.subr.mxu0 %v1388
    %1442 = vmatpush1.msra.mxu0 %v1387
    %1443 = vmatprep.subr.mxu0 %v1392
    %1444 = vmatpush1.msra.mxu0 %v1391
    %1445 = vmatprep.subr.mxu0 %v1396
    %1446 = vmatpush1.msra.mxu0 %v1395
    %1447 = vmatprep.subr.mxu0 %v1400
    %1448 = vmatpush1.msra.mxu0 %v1399
    %1449 = vmatprep.subr.mxu0 %v1404
    %1450 = vmatpush1.msra.mxu0 %v1403
    %1451 = vmatprep.subr.mxu0 %v1408
    %1452 = vmatpush1.msra.mxu0 %v1407
    %1453 = vmatprep.subr.mxu0 %v1412
    %1454 = vmatpush1.msra.mxu0 %v1411
    %1455 = vmatprep.subr.mxu0 %v1416
    %1456 = vmatpush1.msra.mxu0 %v1415
    %1457 = vmatprep.subr.mxu0 %v1420
    %1458 = vmatpush1.msra.mxu0 %v1419
    %1459 = vmatprep.subr.mxu0 %v1424
    %1460 = vmatpush1.msra.mxu0 %v1423
    %1461 = vmatprep.subr.mxu0 %v1428
    %1462 = vmatpush1.msra.mxu0 %v1427
    %1463 = vmatprep.subr.mxu0 0.0
    %1464 = vmatpush1.msra.mxu0 0.0
    %1465 = vmatprep.subr.mxu0 0.0
    %1466 = vmatpush1.msra.mxu0 0.0
    %1467 = vmatprep.subr.mxu0 0.0
    %1468 = vmatpush1.msra.mxu0 0.0
    %1469 = vmatprep.subr.mxu0 0.0
    %1470 = vmatpush1.msra.mxu0 0.0
    %1471 = vmatprep.subr.mxu0 0.0
    %1472 = vmatpush1.msra.mxu0 0.0
    %1473 = vmatprep.subr.mxu0 0.0
    %1474 = vmatpush1.msra.mxu0 0.0
    %1475 = vmatprep.subr.mxu0 0.0
    %1476 = vmatpush1.msra.mxu0 0.0
    %1477 = vmatprep.subr.mxu0 0.0
    %1478 = vmatpush1.msra.mxu0 0.0
    %1479 = vmatprep.subr.mxu0 0.0
    %1480 = vmatpush1.msra.mxu0 0.0
    %1481 = vmatprep.subr.mxu0 0.0
    %1482 = vmatpush1.msra.mxu0 0.0
    %1483 = vmatprep.subr.mxu0 0.0
    %1484 = vmatpush1.msra.mxu0 0.0
    %1485 = vmatprep.subr.mxu0 0.0
    %1486 = vmatpush1.msra.mxu0 0.0
    %1487 = vmatprep.subr.mxu0 0.0
    %1488 = vmatpush1.msra.mxu0 0.0
    %1489 = vmatprep.subr.mxu0 0.0
    %1490 = vmatpush1.msra.mxu0 0.0
    %1491 = vmatprep.subr.mxu0 0.0
    %1492 = vmatpush1.msra.mxu0 0.0
    %1493 = vmatprep.subr.mxu0 0.0
    %1494 = vmatpush1.msra.mxu0 0.0
    %1495 = vmatprep.mubr.f32.mxu0 0.0
    %1496 = vmatmul.mubr.f32.gmra.mrb[0].mxu0 %v1361
    %v1497 = vpop.f32.mrb[0].mxu0
    %v1498 = vadd.f32 0.0, %v1497
    %v1499 = vpop.f32.mrb[0].mxu0
    %v1500 = vadd.f32 0.0, %v1499
    %1501 = vdwg.mxu0
    %1502 = vmatprep.subr.mxu0 %v1370
    %1503 = vmatpush1.msra.mxu0 %v1369
    %1504 = vmatprep.subr.mxu0 %v1374
    %1505 = vmatpush1.msra.mxu0 %v1373
    %1506 = vmatprep.subr.mxu0 %v1378
    %1507 = vmatpush1.msra.mxu0 %v1377
    %1508 = vmatprep.subr.mxu0 %v1382
    %1509 = vmatpush1.msra.mxu0 %v1381
    %1510 = vmatprep.subr.mxu0 %v1386
    %1511 = vmatpush1.msra.mxu0 %v1385
    %1512 = vmatprep.subr.mxu0 %v1390
    %1513 = vmatpush1.msra.mxu0 %v1389
    %1514 = vmatprep.subr.mxu0 %v1394
    %1515 = vmatpush1.msra.mxu0 %v1393
    %1516 = vmatprep.subr.mxu0 %v1398
    %1517 = vmatpush1.msra.mxu0 %v1397
    %1518 = vmatprep.subr.mxu0 %v1402
    %1519 = vmatpush1.msra.mxu0 %v1401
    %1520 = vmatprep.subr.mxu0 %v1406
    %1521 = vmatpush1.msra.mxu0 %v1405
    %1522 = vmatprep.subr.mxu0 %v1410
    %1523 = vmatpush1.msra.mxu0 %v1409
    %1524 = vmatprep.subr.mxu0 %v1414
    %1525 = vmatpush1.msra.mxu0 %v1413
    %1526 = vmatprep.subr.mxu0 %v1418
    %1527 = vmatpush1.msra.mxu0 %v1417
    %1528 = vmatprep.subr.mxu0 %v1422
    %1529 = vmatpush1.msra.mxu0 %v1421
    %1530 = vmatprep.subr.mxu0 %v1426
    %1531 = vmatpush1.msra.mxu0 %v1425
    %1532 = vmatprep.subr.mxu0 %v1430
    %1533 = vmatpush1.msra.mxu0 %v1429
    %1534 = vmatprep.subr.mxu0 0.0
    %1535 = vmatpush1.msra.mxu0 0.0
    %1536 = vmatprep.subr.mxu0 0.0
    %1537 = vmatpush1.msra.mxu0 0.0
    %1538 = vmatprep.subr.mxu0 0.0
    %1539 = vmatpush1.msra.mxu0 0.0
    %1540 = vmatprep.subr.mxu0 0.0
    %1541 = vmatpush1.msra.mxu0 0.0
    %1542 = vmatprep.subr.mxu0 0.0
    %1543 = vmatpush1.msra.mxu0 0.0
    %1544 = vmatprep.subr.mxu0 0.0
    %1545 = vmatpush1.msra.mxu0 0.0
    %1546 = vmatprep.subr.mxu0 0.0
    %1547 = vmatpush1.msra.mxu0 0.0
    %1548 = vmatprep.subr.mxu0 0.0
    %1549 = vmatpush1.msra.mxu0 0.0
    %1550 = vmatprep.subr.mxu0 0.0
    %1551 = vmatpush1.msra.mxu0 0.0
    %1552 = vmatprep.subr.mxu0 0.0
    %1553 = vmatpush1.msra.mxu0 0.0
    %1554 = vmatprep.subr.mxu0 0.0
    %1555 = vmatpush1.msra.mxu0 0.0
    %1556 = vmatprep.subr.mxu0 0.0
    %1557 = vmatpush1.msra.mxu0 0.0
    %1558 = vmatprep.subr.mxu0 0.0
    %1559 = vmatpush1.msra.mxu0 0.0
    %1560 = vmatprep.subr.mxu0 0.0
    %1561 = vmatpush1.msra.mxu0 0.0
    %1562 = vmatprep.subr.mxu0 0.0
    %1563 = vmatpush1.msra.mxu0 0.0
    %1564 = vmatprep.subr.mxu0 0.0
    %1565 = vmatpush1.msra.mxu0 0.0
    %1566 = vmatprep.mubr.f32.mxu0 0.0
    %1567 = vmatmul.mubr.f32.gmra.mrb[0].mxu0 %v1361
    %v1568 = vpop.f32.mrb[0].mxu0
    %v1569 = vadd.f32 0.0, %v1568
    %v1570 = vpop.f32.mrb[0].mxu0
    %v1571 = vadd.f32 0.0, %v1570
    %1572 = vdwg.mxu0
    %v1573 = vadd.f32 %v1363, %v1498
    %v1574 = vadd.f32 %v1364, %v1500
    %v1575 = vadd.f32 %v1365, %v1569
    %v1576 = vadd.f32 %v1366, %v1571
    %v1577 = vxor.u32 %v1573, 2147483648
    %v1578 = vxor.u32 %v1574, 2147483648
    %v1579 = vxor.u32 %v1575, 2147483648
    %v1580 = vmul.f32 %v1577, 1.442695
    %v1581 = vpow.pop %v1580
    %v1582 = vmul.f32 %v1578, 1.442695
    %v1583 = vpow.pop %v1582
    %v1584 = vmul.f32 %v1579, 1.442695
    %v1585 = vpow.pop %v1584
    %v1586 = vadd.f32 %v1581, 1.0
    %v1587 = vadd.f32 %v1583, 1.0
    %v1588 = vadd.f32 %v1585, 1.0
    %v1589 = vrcp.pop %v1586
    %v1590 = vmul.f32 1.0, %v1589
    %v1591 = vrcp.pop %v1587
    %v1592 = vmul.f32 1.0, %v1591
    %v1593 = vrcp.pop %v1588
    %v1594 = vmul.f32 1.0, %v1593
    %v1595 = vtanh.pop %v1576
    %v1596 = vmul.f32 %v1592, %v1359
    %v1597 = vmul.f32 %v1590, %v1595
    %v1598 = vadd.f32 %v1596, %v1597
    %v1599 = vtanh.pop %v1598
    %v1600 = vmul.f32 %v1594, %v1599
    %1601 = vst [vmem:[#allocation3 + $0x20] sm:$0xff] %v1600
    %v1602 = vld [vmem:[#allocation2 + $0xa0] sm:$0xff]
    %v1603 = vld [vmem:[#allocation2 + $0xa8] sm:$0xff]
    %v1604 = vld [vmem:[#allocation2 + $0xb0] sm:$0xff]
    %v1605 = vld [vmem:[#allocation2 + $0xb8] sm:$0xff]
    %v1606 = vld [vmem:[#allocation7] sm:$0xff]
    %v1607 = vld [vmem:[#allocation7 + $0x8] sm:$0xff]
    %v1608 = vld [vmem:[#allocation7 + $0x10] sm:$0xff]
    %v1609 = vld [vmem:[#allocation7 + $0x18] sm:$0xff]
    %v1610 = vld [vmem:[#allocation7 + $0x20] sm:$0xff]
    %v1611 = vld [vmem:[#allocation7 + $0x28] sm:$0xff]
    %v1612 = vld [vmem:[#allocation7 + $0x30] sm:$0xff]
    %v1613 = vld [vmem:[#allocation7 + $0x38] sm:$0xff]
    %v1614 = vld [vmem:[#allocation7 + $0x40] sm:$0xff]
    %v1615 = vld [vmem:[#allocation7 + $0x48] sm:$0xff]
    %v1616 = vld [vmem:[#allocation7 + $0x50] sm:$0xff]
    %v1617 = vld [vmem:[#allocation7 + $0x58] sm:$0xff]
    %v1618 = vld [vmem:[#allocation7 + $0x60] sm:$0xff]
    %v1619 = vld [vmem:[#allocation7 + $0x68] sm:$0xff]
    %v1620 = vld [vmem:[#allocation7 + $0x70] sm:$0xff]
    %v1621 = vld [vmem:[#allocation7 + $0x78] sm:$0xff]
    %v1622 = vld [vmem:[#allocation7 + $0x80] sm:$0xff]
    %v1623 = vld [vmem:[#allocation7 + $0x88] sm:$0xff]
    %v1624 = vld [vmem:[#allocation7 + $0x90] sm:$0xff]
    %v1625 = vld [vmem:[#allocation7 + $0x98] sm:$0xff]
    %v1626 = vld [vmem:[#allocation7 + $0xa0] sm:$0xff]
    %v1627 = vld [vmem:[#allocation7 + $0xa8] sm:$0xff]
    %v1628 = vld [vmem:[#allocation7 + $0xb0] sm:$0xff]
    %v1629 = vld [vmem:[#allocation7 + $0xb8] sm:$0xff]
    %v1630 = vld [vmem:[#allocation7 + $0xc0] sm:$0xff]
    %v1631 = vld [vmem:[#allocation7 + $0xc8] sm:$0xff]
    %v1632 = vld [vmem:[#allocation7 + $0xd0] sm:$0xff]
    %v1633 = vld [vmem:[#allocation7 + $0xd8] sm:$0xff]
    %v1634 = vld [vmem:[#allocation7 + $0xe0] sm:$0xff]
    %v1635 = vld [vmem:[#allocation7 + $0xe8] sm:$0xff]
    %v1636 = vld [vmem:[#allocation7 + $0xf0] sm:$0xff]
    %v1637 = vld [vmem:[#allocation7 + $0xf8] sm:$0xff]
    %v1638 = vld [vmem:[#allocation7 + $0x100] sm:$0xff]
    %v1639 = vld [vmem:[#allocation7 + $0x108] sm:$0xff]
    %v1640 = vld [vmem:[#allocation7 + $0x110] sm:$0xff]
    %v1641 = vld [vmem:[#allocation7 + $0x118] sm:$0xff]
    %v1642 = vld [vmem:[#allocation7 + $0x120] sm:$0xff]
    %v1643 = vld [vmem:[#allocation7 + $0x128] sm:$0xff]
    %v1644 = vld [vmem:[#allocation7 + $0x130] sm:$0xff]
    %v1645 = vld [vmem:[#allocation7 + $0x138] sm:$0xff]
    %v1646 = vld [vmem:[#allocation7 + $0x140] sm:$0xff]
    %v1647 = vld [vmem:[#allocation7 + $0x148] sm:$0xff]
    %v1648 = vld [vmem:[#allocation7 + $0x150] sm:$0xff]
    %v1649 = vld [vmem:[#allocation7 + $0x158] sm:$0xff]
    %v1650 = vld [vmem:[#allocation7 + $0x160] sm:$0xff]
    %v1651 = vld [vmem:[#allocation7 + $0x168] sm:$0xff]
    %v1652 = vld [vmem:[#allocation7 + $0x170] sm:$0xff]
    %v1653 = vld [vmem:[#allocation7 + $0x178] sm:$0xff]
    %v1654 = vld [vmem:[#allocation7 + $0x180] sm:$0xff]
    %v1655 = vld [vmem:[#allocation7 + $0x188] sm:$0xff]
    %v1656 = vld [vmem:[#allocation7 + $0x190] sm:$0xff]
    %v1657 = vld [vmem:[#allocation7 + $0x198] sm:$0xff]
    %v1658 = vld [vmem:[#allocation7 + $0x1a0] sm:$0xff]
    %v1659 = vld [vmem:[#allocation7 + $0x1a8] sm:$0xff]
    %v1660 = vld [vmem:[#allocation7 + $0x1b0] sm:$0xff]
    %v1661 = vld [vmem:[#allocation7 + $0x1b8] sm:$0xff]
    %v1662 = vld [vmem:[#allocation7 + $0x1c0] sm:$0xff]
    %v1663 = vld [vmem:[#allocation7 + $0x1c8] sm:$0xff]
    %v1664 = vld [vmem:[#allocation7 + $0x1d0] sm:$0xff]
    %v1665 = vld [vmem:[#allocation7 + $0x1d8] sm:$0xff]
    %v1666 = vld [vmem:[#allocation7 + $0x1e0] sm:$0xff]
    %v1667 = vld [vmem:[#allocation7 + $0x1e8] sm:$0xff]
    %v1668 = vld [vmem:[#allocation7 + $0x1f0] sm:$0xff]
    %v1669 = vld [vmem:[#allocation7 + $0x1f8] sm:$0xff]
    %1670 = vmatprep.subr.mxu0 %v1607
    %1671 = vmatpush1.msra.mxu0 %v1606
    %1672 = vmatprep.subr.mxu0 %v1611
    %1673 = vmatpush1.msra.mxu0 %v1610
    %1674 = vmatprep.subr.mxu0 %v1615
    %1675 = vmatpush1.msra.mxu0 %v1614
    %1676 = vmatprep.subr.mxu0 %v1619
    %1677 = vmatpush1.msra.mxu0 %v1618
    %1678 = vmatprep.subr.mxu0 %v1623
    %1679 = vmatpush1.msra.mxu0 %v1622
    %1680 = vmatprep.subr.mxu0 %v1627
    %1681 = vmatpush1.msra.mxu0 %v1626
    %1682 = vmatprep.subr.mxu0 %v1631
    %1683 = vmatpush1.msra.mxu0 %v1630
    %1684 = vmatprep.subr.mxu0 %v1635
    %1685 = vmatpush1.msra.mxu0 %v1634
    %1686 = vmatprep.subr.mxu0 %v1639
    %1687 = vmatpush1.msra.mxu0 %v1638
    %1688 = vmatprep.subr.mxu0 %v1643
    %1689 = vmatpush1.msra.mxu0 %v1642
    %1690 = vmatprep.subr.mxu0 %v1647
    %1691 = vmatpush1.msra.mxu0 %v1646
    %1692 = vmatprep.subr.mxu0 %v1651
    %1693 = vmatpush1.msra.mxu0 %v1650
    %1694 = vmatprep.subr.mxu0 %v1655
    %1695 = vmatpush1.msra.mxu0 %v1654
    %1696 = vmatprep.subr.mxu0 %v1659
    %1697 = vmatpush1.msra.mxu0 %v1658
    %1698 = vmatprep.subr.mxu0 %v1663
    %1699 = vmatpush1.msra.mxu0 %v1662
    %1700 = vmatprep.subr.mxu0 %v1667
    %1701 = vmatpush1.msra.mxu0 %v1666
    %1702 = vmatprep.subr.mxu0 0.0
    %1703 = vmatpush1.msra.mxu0 0.0
    %1704 = vmatprep.subr.mxu0 0.0
    %1705 = vmatpush1.msra.mxu0 0.0
    %1706 = vmatprep.subr.mxu0 0.0
    %1707 = vmatpush1.msra.mxu0 0.0
    %1708 = vmatprep.subr.mxu0 0.0
    %1709 = vmatpush1.msra.mxu0 0.0
    %1710 = vmatprep.subr.mxu0 0.0
    %1711 = vmatpush1.msra.mxu0 0.0
    %1712 = vmatprep.subr.mxu0 0.0
    %1713 = vmatpush1.msra.mxu0 0.0
    %1714 = vmatprep.subr.mxu0 0.0
    %1715 = vmatpush1.msra.mxu0 0.0
    %1716 = vmatprep.subr.mxu0 0.0
    %1717 = vmatpush1.msra.mxu0 0.0
    %1718 = vmatprep.subr.mxu0 0.0
    %1719 = vmatpush1.msra.mxu0 0.0
    %1720 = vmatprep.subr.mxu0 0.0
    %1721 = vmatpush1.msra.mxu0 0.0
    %1722 = vmatprep.subr.mxu0 0.0
    %1723 = vmatpush1.msra.mxu0 0.0
    %1724 = vmatprep.subr.mxu0 0.0
    %1725 = vmatpush1.msra.mxu0 0.0
    %1726 = vmatprep.subr.mxu0 0.0
    %1727 = vmatpush1.msra.mxu0 0.0
    %1728 = vmatprep.subr.mxu0 0.0
    %1729 = vmatpush1.msra.mxu0 0.0
    %1730 = vmatprep.subr.mxu0 0.0
    %1731 = vmatpush1.msra.mxu0 0.0
    %1732 = vmatprep.subr.mxu0 0.0
    %1733 = vmatpush1.msra.mxu0 0.0
    %1734 = vmatprep.mubr.f32.mxu0 0.0
    %1735 = vmatmul.mubr.f32.gmra.mrb[0].mxu0 %v1600
    %v1736 = vpop.f32.mrb[0].mxu0
    %v1737 = vadd.f32 0.0, %v1736
    %v1738 = vpop.f32.mrb[0].mxu0
    %v1739 = vadd.f32 0.0, %v1738
    %1740 = vdwg.mxu0
    %1741 = vmatprep.subr.mxu0 %v1609
    %1742 = vmatpush1.msra.mxu0 %v1608
    %1743 = vmatprep.subr.mxu0 %v1613
    %1744 = vmatpush1.msra.mxu0 %v1612
    %1745 = vmatprep.subr.mxu0 %v1617
    %1746 = vmatpush1.msra.mxu0 %v1616
    %1747 = vmatprep.subr.mxu0 %v1621
    %1748 = vmatpush1.msra.mxu0 %v1620
    %1749 = vmatprep.subr.mxu0 %v1625
    %1750 = vmatpush1.msra.mxu0 %v1624
    %1751 = vmatprep.subr.mxu0 %v1629
    %1752 = vmatpush1.msra.mxu0 %v1628
    %1753 = vmatprep.subr.mxu0 %v1633
    %1754 = vmatpush1.msra.mxu0 %v1632
    %1755 = vmatprep.subr.mxu0 %v1637
    %1756 = vmatpush1.msra.mxu0 %v1636
    %1757 = vmatprep.subr.mxu0 %v1641
    %1758 = vmatpush1.msra.mxu0 %v1640
    %1759 = vmatprep.subr.mxu0 %v1645
    %1760 = vmatpush1.msra.mxu0 %v1644
    %1761 = vmatprep.subr.mxu0 %v1649
    %1762 = vmatpush1.msra.mxu0 %v1648
    %1763 = vmatprep.subr.mxu0 %v1653
    %1764 = vmatpush1.msra.mxu0 %v1652
    %1765 = vmatprep.subr.mxu0 %v1657
    %1766 = vmatpush1.msra.mxu0 %v1656
    %1767 = vmatprep.subr.mxu0 %v1661
    %1768 = vmatpush1.msra.mxu0 %v1660
    %1769 = vmatprep.subr.mxu0 %v1665
    %1770 = vmatpush1.msra.mxu0 %v1664
    %1771 = vmatprep.subr.mxu0 %v1669
    %1772 = vmatpush1.msra.mxu0 %v1668
    %1773 = vmatprep.subr.mxu0 0.0
    %1774 = vmatpush1.msra.mxu0 0.0
    %1775 = vmatprep.subr.mxu0 0.0
    %1776 = vmatpush1.msra.mxu0 0.0
    %1777 = vmatprep.subr.mxu0 0.0
    %1778 = vmatpush1.msra.mxu0 0.0
    %1779 = vmatprep.subr.mxu0 0.0
    %1780 = vmatpush1.msra.mxu0 0.0
    %1781 = vmatprep.subr.mxu0 0.0
    %1782 = vmatpush1.msra.mxu0 0.0
    %1783 = vmatprep.subr.mxu0 0.0
    %1784 = vmatpush1.msra.mxu0 0.0
    %1785 = vmatprep.subr.mxu0 0.0
    %1786 = vmatpush1.msra.mxu0 0.0
    %1787 = vmatprep.subr.mxu0 0.0
    %1788 = vmatpush1.msra.mxu0 0.0
    %1789 = vmatprep.subr.mxu0 0.0
    %1790 = vmatpush1.msra.mxu0 0.0
    %1791 = vmatprep.subr.mxu0 0.0
    %1792 = vmatpush1.msra.mxu0 0.0
    %1793 = vmatprep.subr.mxu0 0.0
    %1794 = vmatpush1.msra.mxu0 0.0
    %1795 = vmatprep.subr.mxu0 0.0
    %1796 = vmatpush1.msra.mxu0 0.0
    %1797 = vmatprep.subr.mxu0 0.0
    %1798 = vmatpush1.msra.mxu0 0.0
    %1799 = vmatprep.subr.mxu0 0.0
    %1800 = vmatpush1.msra.mxu0 0.0
    %1801 = vmatprep.subr.mxu0 0.0
    %1802 = vmatpush1.msra.mxu0 0.0
    %1803 = vmatprep.subr.mxu0 0.0
    %1804 = vmatpush1.msra.mxu0 0.0
    %1805 = vmatprep.mubr.f32.mxu0 0.0
    %1806 = vmatmul.mubr.f32.gmra.mrb[0].mxu0 %v1600
    %v1807 = vpop.f32.mrb[0].mxu0
    %v1808 = vadd.f32 0.0, %v1807
    %v1809 = vpop.f32.mrb[0].mxu0
    %v1810 = vadd.f32 0.0, %v1809
    %1811 = vdwg.mxu0
    %v1812 = vadd.f32 %v1602, %v1737
    %v1813 = vadd.f32 %v1603, %v1739
    %v1814 = vadd.f32 %v1604, %v1808
    %v1815 = vadd.f32 %v1605, %v1810
    %v1816 = vxor.u32 %v1812, 2147483648
    %v1817 = vxor.u32 %v1813, 2147483648
    %v1818 = vxor.u32 %v1814, 2147483648
    %v1819 = vmul.f32 %v1816, 1.442695
    %v1820 = vpow.pop %v1819
    %v1821 = vmul.f32 %v1817, 1.442695
    %v1822 = vpow.pop %v1821
    %v1823 = vmul.f32 %v1818, 1.442695
    %v1824 = vpow.pop %v1823
    %v1825 = vadd.f32 %v1820, 1.0
    %v1826 = vadd.f32 %v1822, 1.0
    %v1827 = vadd.f32 %v1824, 1.0
    %v1828 = vrcp.pop %v1825
    %v1829 = vmul.f32 1.0, %v1828
    %v1830 = vrcp.pop %v1826
    %v1831 = vmul.f32 1.0, %v1830
    %v1832 = vrcp.pop %v1827
    %v1833 = vmul.f32 1.0, %v1832
    %v1834 = vtanh.pop %v1815
    %v1835 = vmul.f32 %v1831, %v1598
    %v1836 = vmul.f32 %v1829, %v1834
    %v1837 = vadd.f32 %v1835, %v1836
    %v1838 = vtanh.pop %v1837
    %v1839 = vmul.f32 %v1833, %v1838
    %1840 = vst [vmem:[#allocation3 + $0x28] sm:$0xff] %v1839
    %v1841 = vld [vmem:[#allocation2 + $0xc0] sm:$0xff]
    %v1842 = vld [vmem:[#allocation2 + $0xc8] sm:$0xff]
    %v1843 = vld [vmem:[#allocation2 + $0xd0] sm:$0xff]
    %v1844 = vld [vmem:[#allocation2 + $0xd8] sm:$0xff]
    %v1845 = vld [vmem:[#allocation7] sm:$0xff]
    %v1846 = vld [vmem:[#allocation7 + $0x8] sm:$0xff]
    %v1847 = vld [vmem:[#allocation7 + $0x10] sm:$0xff]
    %v1848 = vld [vmem:[#allocation7 + $0x18] sm:$0xff]
    %v1849 = vld [vmem:[#allocation7 + $0x20] sm:$0xff]
    %v1850 = vld [vmem:[#allocation7 + $0x28] sm:$0xff]
    %v1851 = vld [vmem:[#allocation7 + $0x30] sm:$0xff]
    %v1852 = vld [vmem:[#allocation7 + $0x38] sm:$0xff]
    %v1853 = vld [vmem:[#allocation7 + $0x40] sm:$0xff]
    %v1854 = vld [vmem:[#allocation7 + $0x48] sm:$0xff]
    %v1855 = vld [vmem:[#allocation7 + $0x50] sm:$0xff]
    %v1856 = vld [vmem:[#allocation7 + $0x58] sm:$0xff]
    %v1857 = vld [vmem:[#allocation7 + $0x60] sm:$0xff]
    %v1858 = vld [vmem:[#allocation7 + $0x68] sm:$0xff]
    %v1859 = vld [vmem:[#allocation7 + $0x70] sm:$0xff]
    %v1860 = vld [vmem:[#allocation7 + $0x78] sm:$0xff]
    %v1861 = vld [vmem:[#allocation7 + $0x80] sm:$0xff]
    %v1862 = vld [vmem:[#allocation7 + $0x88] sm:$0xff]
    %v1863 = vld [vmem:[#allocation7 + $0x90] sm:$0xff]
    %v1864 = vld [vmem:[#allocation7 + $0x98] sm:$0xff]
    %v1865 = vld [vmem:[#allocation7 + $0xa0] sm:$0xff]
    %v1866 = vld [vmem:[#allocation7 + $0xa8] sm:$0xff]
    %v1867 = vld [vmem:[#allocation7 + $0xb0] sm:$0xff]
    %v1868 = vld [vmem:[#allocation7 + $0xb8] sm:$0xff]
    %v1869 = vld [vmem:[#allocation7 + $0xc0] sm:$0xff]
    %v1870 = vld [vmem:[#allocation7 + $0xc8] sm:$0xff]
    %v1871 = vld [vmem:[#allocation7 + $0xd0] sm:$0xff]
    %v1872 = vld [vmem:[#allocation7 + $0xd8] sm:$0xff]
    %v1873 = vld [vmem:[#allocation7 + $0xe0] sm:$0xff]
    %v1874 = vld [vmem:[#allocation7 + $0xe8] sm:$0xff]
    %v1875 = vld [vmem:[#allocation7 + $0xf0] sm:$0xff]
    %v1876 = vld [vmem:[#allocation7 + $0xf8] sm:$0xff]
    %v1877 = vld [vmem:[#allocation7 + $0x100] sm:$0xff]
    %v1878 = vld [vmem:[#allocation7 + $0x108] sm:$0xff]
    %v1879 = vld [vmem:[#allocation7 + $0x110] sm:$0xff]
    %v1880 = vld [vmem:[#allocation7 + $0x118] sm:$0xff]
    %v1881 = vld [vmem:[#allocation7 + $0x120] sm:$0xff]
    %v1882 = vld [vmem:[#allocation7 + $0x128] sm:$0xff]
    %v1883 = vld [vmem:[#allocation7 + $0x130] sm:$0xff]
    %v1884 = vld [vmem:[#allocation7 + $0x138] sm:$0xff]
    %v1885 = vld [vmem:[#allocation7 + $0x140] sm:$0xff]
    %v1886 = vld [vmem:[#allocation7 + $0x148] sm:$0xff]
    %v1887 = vld [vmem:[#allocation7 + $0x150] sm:$0xff]
    %v1888 = vld [vmem:[#allocation7 + $0x158] sm:$0xff]
    %v1889 = vld [vmem:[#allocation7 + $0x160] sm:$0xff]
    %v1890 = vld [vmem:[#allocation7 + $0x168] sm:$0xff]
    %v1891 = vld [vmem:[#allocation7 + $0x170] sm:$0xff]
    %v1892 = vld [vmem:[#allocation7 + $0x178] sm:$0xff]
    %v1893 = vld [vmem:[#allocation7 + $0x180] sm:$0xff]
    %v1894 = vld [vmem:[#allocation7 + $0x188] sm:$0xff]
    %v1895 = vld [vmem:[#allocation7 + $0x190] sm:$0xff]
    %v1896 = vld [vmem:[#allocation7 + $0x198] sm:$0xff]
    %v1897 = vld [vmem:[#allocation7 + $0x1a0] sm:$0xff]
    %v1898 = vld [vmem:[#allocation7 + $0x1a8] sm:$0xff]
    %v1899 = vld [vmem:[#allocation7 + $0x1b0] sm:$0xff]
    %v1900 = vld [vmem:[#allocation7 + $0x1b8] sm:$0xff]
    %v1901 = vld [vmem:[#allocation7 + $0x1c0] sm:$0xff]
    %v1902 = vld [vmem:[#allocation7 + $0x1c8] sm:$0xff]
    %v1903 = vld [vmem:[#allocation7 + $0x1d0] sm:$0xff]
    %v1904 = vld [vmem:[#allocation7 + $0x1d8] sm:$0xff]
    %v1905 = vld [vmem:[#allocation7 + $0x1e0] sm:$0xff]
    %v1906 = vld [vmem:[#allocation7 + $0x1e8] sm:$0xff]
    %v1907 = vld [vmem:[#allocation7 + $0x1f0] sm:$0xff]
    %v1908 = vld [vmem:[#allocation7 + $0x1f8] sm:$0xff]
    %1909 = vmatprep.subr.mxu0 %v1846
    %1910 = vmatpush1.msra.mxu0 %v1845
    %1911 = vmatprep.subr.mxu0 %v1850
    %1912 = vmatpush1.msra.mxu0 %v1849
    %1913 = vmatprep.subr.mxu0 %v1854
    %1914 = vmatpush1.msra.mxu0 %v1853
    %1915 = vmatprep.subr.mxu0 %v1858
    %1916 = vmatpush1.msra.mxu0 %v1857
    %1917 = vmatprep.subr.mxu0 %v1862
    %1918 = vmatpush1.msra.mxu0 %v1861
    %1919 = vmatprep.subr.mxu0 %v1866
    %1920 = vmatpush1.msra.mxu0 %v1865
    %1921 = vmatprep.subr.mxu0 %v1870
    %1922 = vmatpush1.msra.mxu0 %v1869
    %1923 = vmatprep.subr.mxu0 %v1874
    %1924 = vmatpush1.msra.mxu0 %v1873
    %1925 = vmatprep.subr.mxu0 %v1878
    %1926 = vmatpush1.msra.mxu0 %v1877
    %1927 = vmatprep.subr.mxu0 %v1882
    %1928 = vmatpush1.msra.mxu0 %v1881
    %1929 = vmatprep.subr.mxu0 %v1886
    %1930 = vmatpush1.msra.mxu0 %v1885
    %1931 = vmatprep.subr.mxu0 %v1890
    %1932 = vmatpush1.msra.mxu0 %v1889
    %1933 = vmatprep.subr.mxu0 %v1894
    %1934 = vmatpush1.msra.mxu0 %v1893
    %1935 = vmatprep.subr.mxu0 %v1898
    %1936 = vmatpush1.msra.mxu0 %v1897
    %1937 = vmatprep.subr.mxu0 %v1902
    %1938 = vmatpush1.msra.mxu0 %v1901
    %1939 = vmatprep.subr.mxu0 %v1906
    %1940 = vmatpush1.msra.mxu0 %v1905
    %1941 = vmatprep.subr.mxu0 0.0
    %1942 = vmatpush1.msra.mxu0 0.0
    %1943 = vmatprep.subr.mxu0 0.0
    %1944 = vmatpush1.msra.mxu0 0.0
    %1945 = vmatprep.subr.mxu0 0.0
    %1946 = vmatpush1.msra.mxu0 0.0
    %1947 = vmatprep.subr.mxu0 0.0
    %1948 = vmatpush1.msra.mxu0 0.0
    %1949 = vmatprep.subr.mxu0 0.0
    %1950 = vmatpush1.msra.mxu0 0.0
    %1951 = vmatprep.subr.mxu0 0.0
    %1952 = vmatpush1.msra.mxu0 0.0
    %1953 = vmatprep.subr.mxu0 0.0
    %1954 = vmatpush1.msra.mxu0 0.0
    %1955 = vmatprep.subr.mxu0 0.0
    %1956 = vmatpush1.msra.mxu0 0.0
    %1957 = vmatprep.subr.mxu0 0.0
    %1958 = vmatpush1.msra.mxu0 0.0
    %1959 = vmatprep.subr.mxu0 0.0
    %1960 = vmatpush1.msra.mxu0 0.0
    %1961 = vmatprep.subr.mxu0 0.0
    %1962 = vmatpush1.msra.mxu0 0.0
    %1963 = vmatprep.subr.mxu0 0.0
    %1964 = vmatpush1.msra.mxu0 0.0
    %1965 = vmatprep.subr.mxu0 0.0
    %1966 = vmatpush1.msra.mxu0 0.0
    %1967 = vmatprep.subr.mxu0 0.0
    %1968 = vmatpush1.msra.mxu0 0.0
    %1969 = vmatprep.subr.mxu0 0.0
    %1970 = vmatpush1.msra.mxu0 0.0
    %1971 = vmatprep.subr.mxu0 0.0
    %1972 = vmatpush1.msra.mxu0 0.0
    %1973 = vmatprep.mubr.f32.mxu0 0.0
    %1974 = vmatmul.mubr.f32.gmra.mrb[0].mxu0 %v1839
    %v1975 = vpop.f32.mrb[0].mxu0
    %v1976 = vadd.f32 0.0, %v1975
    %v1977 = vpop.f32.mrb[0].mxu0
    %v1978 = vadd.f32 0.0, %v1977
    %1979 = vdwg.mxu0
    %1980 = vmatprep.subr.mxu0 %v1848
    %1981 = vmatpush1.msra.mxu0 %v1847
    %1982 = vmatprep.subr.mxu0 %v1852
    %1983 = vmatpush1.msra.mxu0 %v1851
    %1984 = vmatprep.subr.mxu0 %v1856
    %1985 = vmatpush1.msra.mxu0 %v1855
    %1986 = vmatprep.subr.mxu0 %v1860
    %1987 = vmatpush1.msra.mxu0 %v1859
    %1988 = vmatprep.subr.mxu0 %v1864
    %1989 = vmatpush1.msra.mxu0 %v1863
    %1990 = vmatprep.subr.mxu0 %v1868
    %1991 = vmatpush1.msra.mxu0 %v1867
    %1992 = vmatprep.subr.mxu0 %v1872
    %1993 = vmatpush1.msra.mxu0 %v1871
    %1994 = vmatprep.subr.mxu0 %v1876
    %1995 = vmatpush1.msra.mxu0 %v1875
    %1996 = vmatprep.subr.mxu0 %v1880
    %1997 = vmatpush1.msra.mxu0 %v1879
    %1998 = vmatprep.subr.mxu0 %v1884
    %1999 = vmatpush1.msra.mxu0 %v1883
    %2000 = vmatprep.subr.mxu0 %v1888
    %2001 = vmatpush1.msra.mxu0 %v1887
    %2002 = vmatprep.subr.mxu0 %v1892
    %2003 = vmatpush1.msra.mxu0 %v1891
    %2004 = vmatprep.subr.mxu0 %v1896
    %2005 = vmatpush1.msra.mxu0 %v1895
    %2006 = vmatprep.subr.mxu0 %v1900
    %2007 = vmatpush1.msra.mxu0 %v1899
    %2008 = vmatprep.subr.mxu0 %v1904
    %2009 = vmatpush1.msra.mxu0 %v1903
    %2010 = vmatprep.subr.mxu0 %v1908
    %2011 = vmatpush1.msra.mxu0 %v1907
    %2012 = vmatprep.subr.mxu0 0.0
    %2013 = vmatpush1.msra.mxu0 0.0
    %2014 = vmatprep.subr.mxu0 0.0
    %2015 = vmatpush1.msra.mxu0 0.0
    %2016 = vmatprep.subr.mxu0 0.0
    %2017 = vmatpush1.msra.mxu0 0.0
    %2018 = vmatprep.subr.mxu0 0.0
    %2019 = vmatpush1.msra.mxu0 0.0
    %2020 = vmatprep.subr.mxu0 0.0
    %2021 = vmatpush1.msra.mxu0 0.0
    %2022 = vmatprep.subr.mxu0 0.0
    %2023 = vmatpush1.msra.mxu0 0.0
    %2024 = vmatprep.subr.mxu0 0.0
    %2025 = vmatpush1.msra.mxu0 0.0
    %2026 = vmatprep.subr.mxu0 0.0
    %2027 = vmatpush1.msra.mxu0 0.0
    %2028 = vmatprep.subr.mxu0 0.0
    %2029 = vmatpush1.msra.mxu0 0.0
    %2030 = vmatprep.subr.mxu0 0.0
    %2031 = vmatpush1.msra.mxu0 0.0
    %2032 = vmatprep.subr.mxu0 0.0
    %2033 = vmatpush1.msra.mxu0 0.0
    %2034 = vmatprep.subr.mxu0 0.0
    %2035 = vmatpush1.msra.mxu0 0.0
    %2036 = vmatprep.subr.mxu0 0.0
    %2037 = vmatpush1.msra.mxu0 0.0
    %2038 = vmatprep.subr.mxu0 0.0
    %2039 = vmatpush1.msra.mxu0 0.0
    %2040 = vmatprep.subr.mxu0 0.0
    %2041 = vmatpush1.msra.mxu0 0.0
    %2042 = vmatprep.subr.mxu0 0.0
    %2043 = vmatpush1.msra.mxu0 0.0
    %2044 = vmatprep.mubr.f32.mxu0 0.0
    %2045 = vmatmul.mubr.f32.gmra.mrb[0].mxu0 %v1839
    %v2046 = vpop.f32.mrb[0].mxu0
    %v2047 = vadd.f32 0.0, %v2046
    %v2048 = vpop.f32.mrb[0].mxu0
    %v2049 = vadd.f32 0.0, %v2048
    %2050 = vdwg.mxu0
    %v2051 = vadd.f32 %v1841, %v1976
    %v2052 = vadd.f32 %v1842, %v1978
    %v2053 = vadd.f32 %v1843, %v2047
    %v2054 = vadd.f32 %v1844, %v2049
    %v2055 = vxor.u32 %v2051, 2147483648
    %v2056 = vxor.u32 %v2052, 2147483648
    %v2057 = vxor.u32 %v2053, 2147483648
    %v2058 = vmul.f32 %v2055, 1.442695
    %v2059 = vpow.pop %v2058
    %v2060 = vmul.f32 %v2056, 1.442695
    %v2061 = vpow.pop %v2060
    %v2062 = vmul.f32 %v2057, 1.442695
    %v2063 = vpow.pop %v2062
    %v2064 = vadd.f32 %v2059, 1.0
    %v2065 = vadd.f32 %v2061, 1.0
    %v2066 = vadd.f32 %v2063, 1.0
    %v2067 = vrcp.pop %v2064
    %v2068 = vmul.f32 1.0, %v2067
    %v2069 = vrcp.pop %v2065
    %v2070 = vmul.f32 1.0, %v2069
    %v2071 = vrcp.pop %v2066
    %v2072 = vmul.f32 1.0, %v2071
    %v2073 = vtanh.pop %v2054
    %v2074 = vmul.f32 %v2070, %v1837
    %v2075 = vmul.f32 %v2068, %v2073
    %v2076 = vadd.f32 %v2074, %v2075
    %v2077 = vtanh.pop %v2076
    %v2078 = vmul.f32 %v2072, %v2077
    %2079 = vst [vmem:[#allocation3 + $0x30] sm:$0xff] %v2078
    %v2080 = vld [vmem:[#allocation2 + $0xe0] sm:$0xff]
    %v2081 = vld [vmem:[#allocation2 + $0xe8] sm:$0xff]
    %v2082 = vld [vmem:[#allocation2 + $0xf0] sm:$0xff]
    %v2083 = vld [vmem:[#allocation2 + $0xf8] sm:$0xff]
    %v2084 = vld [vmem:[#allocation7] sm:$0xff]
    %v2085 = vld [vmem:[#allocation7 + $0x8] sm:$0xff]
    %v2086 = vld [vmem:[#allocation7 + $0x10] sm:$0xff]
    %v2087 = vld [vmem:[#allocation7 + $0x18] sm:$0xff]
    %v2088 = vld [vmem:[#allocation7 + $0x20] sm:$0xff]
    %v2089 = vld [vmem:[#allocation7 + $0x28] sm:$0xff]
    %v2090 = vld [vmem:[#allocation7 + $0x30] sm:$0xff]
    %v2091 = vld [vmem:[#allocation7 + $0x38] sm:$0xff]
    %v2092 = vld [vmem:[#allocation7 + $0x40] sm:$0xff]
    %v2093 = vld [vmem:[#allocation7 + $0x48] sm:$0xff]
    %v2094 = vld [vmem:[#allocation7 + $0x50] sm:$0xff]
    %v2095 = vld [vmem:[#allocation7 + $0x58] sm:$0xff]
    %v2096 = vld [vmem:[#allocation7 + $0x60] sm:$0xff]
    %v2097 = vld [vmem:[#allocation7 + $0x68] sm:$0xff]
    %v2098 = vld [vmem:[#allocation7 + $0x70] sm:$0xff]
    %v2099 = vld [vmem:[#allocation7 + $0x78] sm:$0xff]
    %v2100 = vld [vmem:[#allocation7 + $0x80] sm:$0xff]
    %v2101 = vld [vmem:[#allocation7 + $0x88] sm:$0xff]
    %v2102 = vld [vmem:[#allocation7 + $0x90] sm:$0xff]
    %v2103 = vld [vmem:[#allocation7 + $0x98] sm:$0xff]
    %v2104 = vld [vmem:[#allocation7 + $0xa0] sm:$0xff]
    %v2105 = vld [vmem:[#allocation7 + $0xa8] sm:$0xff]
    %v2106 = vld [vmem:[#allocation7 + $0xb0] sm:$0xff]
    %v2107 = vld [vmem:[#allocation7 + $0xb8] sm:$0xff]
    %v2108 = vld [vmem:[#allocation7 + $0xc0] sm:$0xff]
    %v2109 = vld [vmem:[#allocation7 + $0xc8] sm:$0xff]
    %v2110 = vld [vmem:[#allocation7 + $0xd0] sm:$0xff]
    %v2111 = vld [vmem:[#allocation7 + $0xd8] sm:$0xff]
    %v2112 = vld [vmem:[#allocation7 + $0xe0] sm:$0xff]
    %v2113 = vld [vmem:[#allocation7 + $0xe8] sm:$0xff]
    %v2114 = vld [vmem:[#allocation7 + $0xf0] sm:$0xff]
    %v2115 = vld [vmem:[#allocation7 + $0xf8] sm:$0xff]
    %v2116 = vld [vmem:[#allocation7 + $0x100] sm:$0xff]
    %v2117 = vld [vmem:[#allocation7 + $0x108] sm:$0xff]
    %v2118 = vld [vmem:[#allocation7 + $0x110] sm:$0xff]
    %v2119 = vld [vmem:[#allocation7 + $0x118] sm:$0xff]
    %v2120 = vld [vmem:[#allocation7 + $0x120] sm:$0xff]
    %v2121 = vld [vmem:[#allocation7 + $0x128] sm:$0xff]
    %v2122 = vld [vmem:[#allocation7 + $0x130] sm:$0xff]
    %v2123 = vld [vmem:[#allocation7 + $0x138] sm:$0xff]
    %v2124 = vld [vmem:[#allocation7 + $0x140] sm:$0xff]
    %v2125 = vld [vmem:[#allocation7 + $0x148] sm:$0xff]
    %v2126 = vld [vmem:[#allocation7 + $0x150] sm:$0xff]
    %v2127 = vld [vmem:[#allocation7 + $0x158] sm:$0xff]
    %v2128 = vld [vmem:[#allocation7 + $0x160] sm:$0xff]
    %v2129 = vld [vmem:[#allocation7 + $0x168] sm:$0xff]
    %v2130 = vld [vmem:[#allocation7 + $0x170] sm:$0xff]
    %v2131 = vld [vmem:[#allocation7 + $0x178] sm:$0xff]
    %v2132 = vld [vmem:[#allocation7 + $0x180] sm:$0xff]
    %v2133 = vld [vmem:[#allocation7 + $0x188] sm:$0xff]
    %v2134 = vld [vmem:[#allocation7 + $0x190] sm:$0xff]
    %v2135 = vld [vmem:[#allocation7 + $0x198] sm:$0xff]
    %v2136 = vld [vmem:[#allocation7 + $0x1a0] sm:$0xff]
    %v2137 = vld [vmem:[#allocation7 + $0x1a8] sm:$0xff]
    %v2138 = vld [vmem:[#allocation7 + $0x1b0] sm:$0xff]
    %v2139 = vld [vmem:[#allocation7 + $0x1b8] sm:$0xff]
    %v2140 = vld [vmem:[#allocation7 + $0x1c0] sm:$0xff]
    %v2141 = vld [vmem:[#allocation7 + $0x1c8] sm:$0xff]
    %v2142 = vld [vmem:[#allocation7 + $0x1d0] sm:$0xff]
    %v2143 = vld [vmem:[#allocation7 + $0x1d8] sm:$0xff]
    %v2144 = vld [vmem:[#allocation7 + $0x1e0] sm:$0xff]
    %v2145 = vld [vmem:[#allocation7 + $0x1e8] sm:$0xff]
    %v2146 = vld [vmem:[#allocation7 + $0x1f0] sm:$0xff]
    %v2147 = vld [vmem:[#allocation7 + $0x1f8] sm:$0xff]
    %2148 = vmatprep.subr.mxu0 %v2085
    %2149 = vmatpush1.msra.mxu0 %v2084
    %2150 = vmatprep.subr.mxu0 %v2089
    %2151 = vmatpush1.msra.mxu0 %v2088
    %2152 = vmatprep.subr.mxu0 %v2093
    %2153 = vmatpush1.msra.mxu0 %v2092
    %2154 = vmatprep.subr.mxu0 %v2097
    %2155 = vmatpush1.msra.mxu0 %v2096
    %2156 = vmatprep.subr.mxu0 %v2101
    %2157 = vmatpush1.msra.mxu0 %v2100
    %2158 = vmatprep.subr.mxu0 %v2105
    %2159 = vmatpush1.msra.mxu0 %v2104
    %2160 = vmatprep.subr.mxu0 %v2109
    %2161 = vmatpush1.msra.mxu0 %v2108
    %2162 = vmatprep.subr.mxu0 %v2113
    %2163 = vmatpush1.msra.mxu0 %v2112
    %2164 = vmatprep.subr.mxu0 %v2117
    %2165 = vmatpush1.msra.mxu0 %v2116
    %2166 = vmatprep.subr.mxu0 %v2121
    %2167 = vmatpush1.msra.mxu0 %v2120
    %2168 = vmatprep.subr.mxu0 %v2125
    %2169 = vmatpush1.msra.mxu0 %v2124
    %2170 = vmatprep.subr.mxu0 %v2129
    %2171 = vmatpush1.msra.mxu0 %v2128
    %2172 = vmatprep.subr.mxu0 %v2133
    %2173 = vmatpush1.msra.mxu0 %v2132
    %2174 = vmatprep.subr.mxu0 %v2137
    %2175 = vmatpush1.msra.mxu0 %v2136
    %2176 = vmatprep.subr.mxu0 %v2141
    %2177 = vmatpush1.msra.mxu0 %v2140
    %2178 = vmatprep.subr.mxu0 %v2145
    %2179 = vmatpush1.msra.mxu0 %v2144
    %2180 = vmatprep.subr.mxu0 0.0
    %2181 = vmatpush1.msra.mxu0 0.0
    %2182 = vmatprep.subr.mxu0 0.0
    %2183 = vmatpush1.msra.mxu0 0.0
    %2184 = vmatprep.subr.mxu0 0.0
    %2185 = vmatpush1.msra.mxu0 0.0
    %2186 = vmatprep.subr.mxu0 0.0
    %2187 = vmatpush1.msra.mxu0 0.0
    %2188 = vmatprep.subr.mxu0 0.0
    %2189 = vmatpush1.msra.mxu0 0.0
    %2190 = vmatprep.subr.mxu0 0.0
    %2191 = vmatpush1.msra.mxu0 0.0
    %2192 = vmatprep.subr.mxu0 0.0
    %2193 = vmatpush1.msra.mxu0 0.0
    %2194 = vmatprep.subr.mxu0 0.0
    %2195 = vmatpush1.msra.mxu0 0.0
    %2196 = vmatprep.subr.mxu0 0.0
    %2197 = vmatpush1.msra.mxu0 0.0
    %2198 = vmatprep.subr.mxu0 0.0
    %2199 = vmatpush1.msra.mxu0 0.0
    %2200 = vmatprep.subr.mxu0 0.0
    %2201 = vmatpush1.msra.mxu0 0.0
    %2202 = vmatprep.subr.mxu0 0.0
    %2203 = vmatpush1.msra.mxu0 0.0
    %2204 = vmatprep.subr.mxu0 0.0
    %2205 = vmatpush1.msra.mxu0 0.0
    %2206 = vmatprep.subr.mxu0 0.0
    %2207 = vmatpush1.msra.mxu0 0.0
    %2208 = vmatprep.subr.mxu0 0.0
    %2209 = vmatpush1.msra.mxu0 0.0
    %2210 = vmatprep.subr.mxu0 0.0
    %2211 = vmatpush1.msra.mxu0 0.0
    %2212 = vmatprep.mubr.f32.mxu0 0.0
    %2213 = vmatmul.mubr.f32.gmra.mrb[0].mxu0 %v2078
    %v2214 = vpop.f32.mrb[0].mxu0
    %v2215 = vadd.f32 0.0, %v2214
    %v2216 = vpop.f32.mrb[0].mxu0
    %v2217 = vadd.f32 0.0, %v2216
    %2218 = vdwg.mxu0
    %2219 = vmatprep.subr.mxu0 %v2087
    %2220 = vmatpush1.msra.mxu0 %v2086
    %2221 = vmatprep.subr.mxu0 %v2091
    %2222 = vmatpush1.msra.mxu0 %v2090
    %2223 = vmatprep.subr.mxu0 %v2095
    %2224 = vmatpush1.msra.mxu0 %v2094
    %2225 = vmatprep.subr.mxu0 %v2099
    %2226 = vmatpush1.msra.mxu0 %v2098
    %2227 = vmatprep.subr.mxu0 %v2103
    %2228 = vmatpush1.msra.mxu0 %v2102
    %2229 = vmatprep.subr.mxu0 %v2107
    %2230 = vmatpush1.msra.mxu0 %v2106
    %2231 = vmatprep.subr.mxu0 %v2111
    %2232 = vmatpush1.msra.mxu0 %v2110
    %2233 = vmatprep.subr.mxu0 %v2115
    %2234 = vmatpush1.msra.mxu0 %v2114
    %2235 = vmatprep.subr.mxu0 %v2119
    %2236 = vmatpush1.msra.mxu0 %v2118
    %2237 = vmatprep.subr.mxu0 %v2123
    %2238 = vmatpush1.msra.mxu0 %v2122
    %2239 = vmatprep.subr.mxu0 %v2127
    %2240 = vmatpush1.msra.mxu0 %v2126
    %2241 = vmatprep.subr.mxu0 %v2131
    %2242 = vmatpush1.msra.mxu0 %v2130
    %2243 = vmatprep.subr.mxu0 %v2135
    %2244 = vmatpush1.msra.mxu0 %v2134
    %2245 = vmatprep.subr.mxu0 %v2139
    %2246 = vmatpush1.msra.mxu0 %v2138
    %2247 = vmatprep.subr.mxu0 %v2143
    %2248 = vmatpush1.msra.mxu0 %v2142
    %2249 = vmatprep.subr.mxu0 %v2147
    %2250 = vmatpush1.msra.mxu0 %v2146
    %2251 = vmatprep.subr.mxu0 0.0
    %2252 = vmatpush1.msra.mxu0 0.0
    %2253 = vmatprep.subr.mxu0 0.0
    %2254 = vmatpush1.msra.mxu0 0.0
    %2255 = vmatprep.subr.mxu0 0.0
    %2256 = vmatpush1.msra.mxu0 0.0
    %2257 = vmatprep.subr.mxu0 0.0
    %2258 = vmatpush1.msra.mxu0 0.0
    %2259 = vmatprep.subr.mxu0 0.0
    %2260 = vmatpush1.msra.mxu0 0.0
    %2261 = vmatprep.subr.mxu0 0.0
    %2262 = vmatpush1.msra.mxu0 0.0
    %2263 = vmatprep.subr.mxu0 0.0
    %2264 = vmatpush1.msra.mxu0 0.0
    %2265 = vmatprep.subr.mxu0 0.0
    %2266 = vmatpush1.msra.mxu0 0.0
    %2267 = vmatprep.subr.mxu0 0.0
    %2268 = vmatpush1.msra.mxu0 0.0
    %2269 = vmatprep.subr.mxu0 0.0
    %2270 = vmatpush1.msra.mxu0 0.0
    %2271 = vmatprep.subr.mxu0 0.0
    %2272 = vmatpush1.msra.mxu0 0.0
    %2273 = vmatprep.subr.mxu0 0.0
    %2274 = vmatpush1.msra.mxu0 0.0
    %2275 = vmatprep.subr.mxu0 0.0
    %2276 = vmatpush1.msra.mxu0 0.0
    %2277 = vmatprep.subr.mxu0 0.0
    %2278 = vmatpush1.msra.mxu0 0.0
    %2279 = vmatprep.subr.mxu0 0.0
    %2280 = vmatpush1.msra.mxu0 0.0
    %2281 = vmatprep.subr.mxu0 0.0
    %2282 = vmatpush1.msra.mxu0 0.0
    %2283 = vmatprep.mubr.f32.mxu0 0.0
    %2284 = vmatmul.mubr.f32.gmra.mrb[0].mxu0 %v2078
    %v2285 = vpop.f32.mrb[0].mxu0
    %v2286 = vadd.f32 0.0, %v2285
    %v2287 = vpop.f32.mrb[0].mxu0
    %v2288 = vadd.f32 0.0, %v2287
    %2289 = vdwg.mxu0
    %v2290 = vadd.f32 %v2080, %v2215
    %v2291 = vadd.f32 %v2081, %v2217
    %v2292 = vadd.f32 %v2082, %v2286
    %v2293 = vadd.f32 %v2083, %v2288
    %v2294 = vxor.u32 %v2290, 2147483648
    %v2295 = vxor.u32 %v2291, 2147483648
    %v2296 = vxor.u32 %v2292, 2147483648
    %v2297 = vmul.f32 %v2294, 1.442695
    %v2298 = vpow.pop %v2297
    %v2299 = vmul.f32 %v2295, 1.442695
    %v2300 = vpow.pop %v2299
    %v2301 = vmul.f32 %v2296, 1.442695
    %v2302 = vpow.pop %v2301
    %v2303 = vadd.f32 %v2298, 1.0
    %v2304 = vadd.f32 %v2300, 1.0
    %v2305 = vadd.f32 %v2302, 1.0
    %v2306 = vrcp.pop %v2303
    %v2307 = vmul.f32 1.0, %v2306
    %v2308 = vrcp.pop %v2304
    %v2309 = vmul.f32 1.0, %v2308
    %v2310 = vrcp.pop %v2305
    %v2311 = vmul.f32 1.0, %v2310
    %v2312 = vtanh.pop %v2293
    %v2313 = vmul.f32 %v2309, %v2076
    %v2314 = vmul.f32 %v2307, %v2312
    %v2315 = vadd.f32 %v2313, %v2314
    %v2316 = vtanh.pop %v2315
    %v2317 = vmul.f32 %v2311, %v2316
    %2318 = vst [vmem:[#allocation3 + $0x38] sm:$0xff] %v2317
    %2319 = vst [vmem:[#allocation10] sm:$0xff] %v2317
    %2320 = vst [vmem:[#allocation11] sm:$0xff] %v2315
    %v2321 = vld [vmem:[#allocation3] sm:$0xff]
    %v2322 = vld [vmem:[#allocation3 + $0x8] sm:$0xff]
    %v2323 = vld [vmem:[#allocation3 + $0x10] sm:$0xff]
    %v2324 = vld [vmem:[#allocation3 + $0x18] sm:$0xff]
    %v2325 = vld [vmem:[#allocation3 + $0x20] sm:$0xff]
    %v2326 = vld [vmem:[#allocation3 + $0x28] sm:$0xff]
    %v2327 = vld [vmem:[#allocation3 + $0x30] sm:$0xff]
    %v2328 = vld [vmem:[#allocation3 + $0x38] sm:$0xff]
    %v2329 = vld [vmem:[#allocation9] sm:$0xff]
    %v2330 = vld [vmem:[#allocation9 + $0x8] sm:$0xff]
    %v2331 = vld [vmem:[#allocation9 + $0x10] sm:$0xff]
    %v2332 = vld [vmem:[#allocation9 + $0x18] sm:$0xff]
    %v2333 = vld [vmem:[#allocation9 + $0x20] sm:$0xff]
    %v2334 = vld [vmem:[#allocation9 + $0x28] sm:$0xff]
    %v2335 = vld [vmem:[#allocation9 + $0x30] sm:$0xff]
    %v2336 = vld [vmem:[#allocation9 + $0x38] sm:$0xff]
    %v2337 = vld [vmem:[#allocation9 + $0x40] sm:$0xff]
    %v2338 = vld [vmem:[#allocation9 + $0x48] sm:$0xff]
    %v2339 = vld [vmem:[#allocation9 + $0x50] sm:$0xff]
    %v2340 = vld [vmem:[#allocation9 + $0x58] sm:$0xff]
    %v2341 = vld [vmem:[#allocation9 + $0x60] sm:$0xff]
    %v2342 = vld [vmem:[#allocation9 + $0x68] sm:$0xff]
    %v2343 = vld [vmem:[#allocation9 + $0x70] sm:$0xff]
    %v2344 = vld [vmem:[#allocation9 + $0x78] sm:$0xff]
    %v2345 = vld [vmem:[#allocation9 + $0x80] sm:$0xff]
    %v2346 = vld [vmem:[#allocation9 + $0x88] sm:$0xff]
    %v2347 = vld [vmem:[#allocation9 + $0x90] sm:$0xff]
    %v2348 = vld [vmem:[#allocation9 + $0x98] sm:$0xff]
    %v2349 = vld [vmem:[#allocation9 + $0xa0] sm:$0xff]
    %v2350 = vld [vmem:[#allocation9 + $0xa8] sm:$0xff]
    %v2351 = vld [vmem:[#allocation9 + $0xb0] sm:$0xff]
    %v2352 = vld [vmem:[#allocation9 + $0xb8] sm:$0xff]
    %v2353 = vld [vmem:[#allocation9 + $0xc0] sm:$0xff]
    %v2354 = vld [vmem:[#allocation9 + $0xc8] sm:$0xff]
    %v2355 = vld [vmem:[#allocation9 + $0xd0] sm:$0xff]
    %v2356 = vld [vmem:[#allocation9 + $0xd8] sm:$0xff]
    %v2357 = vld [vmem:[#allocation9 + $0xe0] sm:$0xff]
    %v2358 = vld [vmem:[#allocation9 + $0xe8] sm:$0xff]
    %v2359 = vld [vmem:[#allocation9 + $0xf0] sm:$0xff]
    %v2360 = vld [vmem:[#allocation9 + $0xf8] sm:$0xff]
    %v2361 = vld [vmem:[#allocation9 + $0x100] sm:$0xff]
    %v2362 = vld [vmem:[#allocation9 + $0x108] sm:$0xff]
    %v2363 = vld [vmem:[#allocation9 + $0x110] sm:$0xff]
    %v2364 = vld [vmem:[#allocation9 + $0x118] sm:$0xff]
    %v2365 = vld [vmem:[#allocation9 + $0x120] sm:$0xff]
    %v2366 = vld [vmem:[#allocation9 + $0x128] sm:$0xff]
    %v2367 = vld [vmem:[#allocation9 + $0x130] sm:$0xff]
    %v2368 = vld [vmem:[#allocation9 + $0x138] sm:$0xff]
    %v2369 = vld [vmem:[#allocation9 + $0x140] sm:$0xff]
    %v2370 = vld [vmem:[#allocation9 + $0x148] sm:$0xff]
    %v2371 = vld [vmem:[#allocation9 + $0x150] sm:$0xff]
    %v2372 = vld [vmem:[#allocation9 + $0x158] sm:$0xff]
    %v2373 = vld [vmem:[#allocation9 + $0x160] sm:$0xff]
    %v2374 = vld [vmem:[#allocation9 + $0x168] sm:$0xff]
    %v2375 = vld [vmem:[#allocation9 + $0x170] sm:$0xff]
    %v2376 = vld [vmem:[#allocation9 + $0x178] sm:$0xff]
    %v2377 = vld [vmem:[#allocation9 + $0x180] sm:$0xff]
    %v2378 = vld [vmem:[#allocation9 + $0x188] sm:$0xff]
    %v2379 = vld [vmem:[#allocation9 + $0x190] sm:$0xff]
    %v2380 = vld [vmem:[#allocation9 + $0x198] sm:$0xff]
    %v2381 = vld [vmem:[#allocation9 + $0x1a0] sm:$0xff]
    %v2382 = vld [vmem:[#allocation9 + $0x1a8] sm:$0xff]
    %v2383 = vld [vmem:[#allocation9 + $0x1b0] sm:$0xff]
    %v2384 = vld [vmem:[#allocation9 + $0x1b8] sm:$0xff]
    %v2385 = vld [vmem:[#allocation9 + $0x1c0] sm:$0xff]
    %v2386 = vld [vmem:[#allocation9 + $0x1c8] sm:$0xff]
    %v2387 = vld [vmem:[#allocation9 + $0x1d0] sm:$0xff]
    %v2388 = vld [vmem:[#allocation9 + $0x1d8] sm:$0xff]
    %v2389 = vld [vmem:[#allocation9 + $0x1e0] sm:$0xff]
    %v2390 = vld [vmem:[#allocation9 + $0x1e8] sm:$0xff]
    %v2391 = vld [vmem:[#allocation9 + $0x1f0] sm:$0xff]
    %v2392 = vld [vmem:[#allocation9 + $0x1f8] sm:$0xff]
    %v2393 = vld [vmem:[%s6] sm:$0xf]
    %v2395 = vlaneseq
    %v2396 = vshrl.u32 %v2395, 7
    %v2397 = vsub.s32 0, %v2396
    %v2398 = vrot.slane %v2393, %v2397
    %v2399 = vlaneseq
    %v2400 = vshrl.u32 %v2399, 7
    %v2401 = vsub.s32 1, %v2400
    %v2402 = vrot.slane %v2393, %v2401
    %v2403 = vlaneseq
    %v2404 = vshrl.u32 %v2403, 7
    %v2405 = vsub.s32 2, %v2404
    %v2406 = vrot.slane %v2393, %v2405
    %v2407 = vlaneseq
    %v2408 = vshrl.u32 %v2407, 7
    %v2409 = vsub.s32 3, %v2408
    %v2410 = vrot.slane %v2393, %v2409
    %2415 = vmatprep.subr.mxu0 %v2330
    %2416 = vmatpush1.msra.mxu0 %v2329
    %2417 = vmatprep.subr.mxu0 %v2334
    %2418 = vmatpush1.msra.mxu0 %v2333
    %2419 = vmatprep.subr.mxu0 %v2338
    %2420 = vmatpush1.msra.mxu0 %v2337
    %2421 = vmatprep.subr.mxu0 %v2342
    %2422 = vmatpush1.msra.mxu0 %v2341
    %2423 = vmatprep.subr.mxu0 %v2346
    %2424 = vmatpush1.msra.mxu0 %v2345
    %2425 = vmatprep.subr.mxu0 %v2350
    %2426 = vmatpush1.msra.mxu0 %v2349
    %2427 = vmatprep.subr.mxu0 %v2354
    %2428 = vmatpush1.msra.mxu0 %v2353
    %2429 = vmatprep.subr.mxu0 %v2358
    %2430 = vmatpush1.msra.mxu0 %v2357
    %2431 = vmatprep.subr.mxu0 %v2362
    %2432 = vmatpush1.msra.mxu0 %v2361
    %2433 = vmatprep.subr.mxu0 %v2366
    %2434 = vmatpush1.msra.mxu0 %v2365
    %2435 = vmatprep.subr.mxu0 %v2370
    %2436 = vmatpush1.msra.mxu0 %v2369
    %2437 = vmatprep.subr.mxu0 %v2374
    %2438 = vmatpush1.msra.mxu0 %v2373
    %2439 = vmatprep.subr.mxu0 %v2378
    %2440 = vmatpush1.msra.mxu0 %v2377
    %2441 = vmatprep.subr.mxu0 %v2382
    %2442 = vmatpush1.msra.mxu0 %v2381
    %2443 = vmatprep.subr.mxu0 %v2386
    %2444 = vmatpush1.msra.mxu0 %v2385
    %2445 = vmatprep.subr.mxu0 %v2390
    %2446 = vmatpush1.msra.mxu0 %v2389
    %2447 = vmatprep.subr.mxu0 0.0
    %2448 = vmatpush1.msra.mxu0 0.0
    %2449 = vmatprep.subr.mxu0 0.0
    %2450 = vmatpush1.msra.mxu0 0.0
    %2451 = vmatprep.subr.mxu0 0.0
    %2452 = vmatpush1.msra.mxu0 0.0
    %2453 = vmatprep.subr.mxu0 0.0
    %2454 = vmatpush1.msra.mxu0 0.0
    %2455 = vmatprep.subr.mxu0 0.0
    %2456 = vmatpush1.msra.mxu0 0.0
    %2457 = vmatprep.subr.mxu0 0.0
    %2458 = vmatpush1.msra.mxu0 0.0
    %2459 = vmatprep.subr.mxu0 0.0
    %2460 = vmatpush1.msra.mxu0 0.0
    %2461 = vmatprep.subr.mxu0 0.0
    %2462 = vmatpush1.msra.mxu0 0.0
    %2463 = vmatprep.subr.mxu0 0.0
    %2464 = vmatpush1.msra.mxu0 0.0
    %2465 = vmatprep.subr.mxu0 0.0
    %2466 = vmatpush1.msra.mxu0 0.0
    %2467 = vmatprep.subr.mxu0 0.0
    %2468 = vmatpush1.msra.mxu0 0.0
    %2469 = vmatprep.subr.mxu0 0.0
    %2470 = vmatpush1.msra.mxu0 0.0
    %2471 = vmatprep.subr.mxu0 0.0
    %2472 = vmatpush1.msra.mxu0 0.0
    %2473 = vmatprep.subr.mxu0 0.0
    %2474 = vmatpush1.msra.mxu0 0.0
    %2475 = vmatprep.subr.mxu0 0.0
    %2476 = vmatpush1.msra.mxu0 0.0
    %2477 = vmatprep.subr.mxu0 0.0
    %2478 = vmatpush1.msra.mxu0 0.0
    %2479 = vmatprep.mubr.f32.mxu0 0.0
    %2480 = vmatmul.mubr.f32.gmra.mrb[0].mxu0 %v2321
    %v2481 = vpop.f32.mrb[0].mxu0
    %v2482 = vadd.f32 %v2398, %v2481
    %v2483 = vpop.f32.mrb[0].mxu0
    %v2484 = vadd.f32 %v2402, %v2483
    %2485 = vmatprep.mubr.f32.mxu0 0.0
    %2486 = vmatmul.mubr.f32.gmra.mrb[0].mxu0 %v2322
    %v2487 = vpop.f32.mrb[0].mxu0
    %v2488 = vadd.f32 %v2398, %v2487
    %v2489 = vpop.f32.mrb[0].mxu0
    %v2490 = vadd.f32 %v2402, %v2489
    %2491 = vmatprep.mubr.f32.mxu0 0.0
    %2492 = vmatmul.mubr.f32.gmra.mrb[0].mxu0 %v2323
    %v2493 = vpop.f32.mrb[0].mxu0
    %v2494 = vadd.f32 %v2398, %v2493
    %v2495 = vpop.f32.mrb[0].mxu0
    %v2496 = vadd.f32 %v2402, %v2495
    %2497 = vmatprep.mubr.f32.mxu0 0.0
    %2498 = vmatmul.mubr.f32.gmra.mrb[0].mxu0 %v2324
    %v2499 = vpop.f32.mrb[0].mxu0
    %v2500 = vadd.f32 %v2398, %v2499
    %v2501 = vpop.f32.mrb[0].mxu0
    %v2502 = vadd.f32 %v2402, %v2501
    %2503 = vmatprep.mubr.f32.mxu0 0.0
    %2504 = vmatmul.mubr.f32.gmra.mrb[0].mxu0 %v2325
    %v2505 = vpop.f32.mrb[0].mxu0
    %v2506 = vadd.f32 %v2398, %v2505
    %v2507 = vpop.f32.mrb[0].mxu0
    %v2508 = vadd.f32 %v2402, %v2507
    %2509 = vmatprep.mubr.f32.mxu0 0.0
    %2510 = vmatmul.mubr.f32.gmra.mrb[0].mxu0 %v2326
    %v2511 = vpop.f32.mrb[0].mxu0
    %v2512 = vadd.f32 %v2398, %v2511
    %v2513 = vpop.f32.mrb[0].mxu0
    %v2514 = vadd.f32 %v2402, %v2513
    %2515 = vmatprep.mubr.f32.mxu0 0.0
    %2516 = vmatmul.mubr.f32.gmra.mrb[0].mxu0 %v2327
    %v2517 = vpop.f32.mrb[0].mxu0
    %v2518 = vadd.f32 %v2398, %v2517
    %v2519 = vpop.f32.mrb[0].mxu0
    %v2520 = vadd.f32 %v2402, %v2519
    %2521 = vmatprep.mubr.f32.mxu0 0.0
    %2522 = vmatmul.mubr.f32.gmra.mrb[0].mxu0 %v2328
    %v2523 = vpop.f32.mrb[0].mxu0
    %v2524 = vadd.f32 %v2398, %v2523
    %v2525 = vpop.f32.mrb[0].mxu0
    %v2526 = vadd.f32 %v2402, %v2525
    %2527 = vdwg.mxu0
    %2528 = vmatprep.subr.mxu0 %v2332
    %2529 = vmatpush1.msra.mxu0 %v2331
    %2530 = vmatprep.subr.mxu0 %v2336
    %2531 = vmatpush1.msra.mxu0 %v2335
    %2532 = vmatprep.subr.mxu0 %v2340
    %2533 = vmatpush1.msra.mxu0 %v2339
    %2534 = vmatprep.subr.mxu0 %v2344
    %2535 = vmatpush1.msra.mxu0 %v2343
    %2536 = vmatprep.subr.mxu0 %v2348
    %2537 = vmatpush1.msra.mxu0 %v2347
    %2538 = vmatprep.subr.mxu0 %v2352
    %2539 = vmatpush1.msra.mxu0 %v2351
    %2540 = vmatprep.subr.mxu0 %v2356
    %2541 = vmatpush1.msra.mxu0 %v2355
    %2542 = vmatprep.subr.mxu0 %v2360
    %2543 = vmatpush1.msra.mxu0 %v2359
    %2544 = vmatprep.subr.mxu0 %v2364
    %2545 = vmatpush1.msra.mxu0 %v2363
    %2546 = vmatprep.subr.mxu0 %v2368
    %2547 = vmatpush1.msra.mxu0 %v2367
    %2548 = vmatprep.subr.mxu0 %v2372
    %2549 = vmatpush1.msra.mxu0 %v2371
    %2550 = vmatprep.subr.mxu0 %v2376
    %2551 = vmatpush1.msra.mxu0 %v2375
    %2552 = vmatprep.subr.mxu0 %v2380
    %2553 = vmatpush1.msra.mxu0 %v2379
    %2554 = vmatprep.subr.mxu0 %v2384
    %2555 = vmatpush1.msra.mxu0 %v2383
    %2556 = vmatprep.subr.mxu0 %v2388
    %2557 = vmatpush1.msra.mxu0 %v2387
    %2558 = vmatprep.subr.mxu0 %v2392
    %2559 = vmatpush1.msra.mxu0 %v2391
    %2560 = vmatprep.subr.mxu0 0.0
    %2561 = vmatpush1.msra.mxu0 0.0
    %2562 = vmatprep.subr.mxu0 0.0
    %2563 = vmatpush1.msra.mxu0 0.0
    %2564 = vmatprep.subr.mxu0 0.0
    %2565 = vmatpush1.msra.mxu0 0.0
    %2566 = vmatprep.subr.mxu0 0.0
    %2567 = vmatpush1.msra.mxu0 0.0
    %2568 = vmatprep.subr.mxu0 0.0
    %2569 = vmatpush1.msra.mxu0 0.0
    %2570 = vmatprep.subr.mxu0 0.0
    %2571 = vmatpush1.msra.mxu0 0.0
    %2572 = vmatprep.subr.mxu0 0.0
    %2573 = vmatpush1.msra.mxu0 0.0
    %2574 = vmatprep.subr.mxu0 0.0
    %2575 = vmatpush1.msra.mxu0 0.0
    %2576 = vmatprep.subr.mxu0 0.0
    %2577 = vmatpush1.msra.mxu0 0.0
    %2578 = vmatprep.subr.mxu0 0.0
    %2579 = vmatpush1.msra.mxu0 0.0
    %2580 = vmatprep.subr.mxu0 0.0
    %2581 = vmatpush1.msra.mxu0 0.0
    %2582 = vmatprep.subr.mxu0 0.0
    %2583 = vmatpush1.msra.mxu0 0.0
    %2584 = vmatprep.subr.mxu0 0.0
    %2585 = vmatpush1.msra.mxu0 0.0
    %2586 = vmatprep.subr.mxu0 0.0
    %2587 = vmatpush1.msra.mxu0 0.0
    %2588 = vmatprep.subr.mxu0 0.0
    %2589 = vmatpush1.msra.mxu0 0.0
    %2590 = vmatprep.subr.mxu0 0.0
    %2591 = vmatpush1.msra.mxu0 0.0
    %2592 = vmatprep.mubr.f32.mxu0 0.0
    %2593 = vmatmul.mubr.f32.gmra.mrb[0].mxu0 %v2321
    %v2594 = vpop.f32.mrb[0].mxu0
    %v2595 = vadd.f32 %v2406, %v2594
    %v2596 = vpop.f32.mrb[0].mxu0
    %v2597 = vadd.f32 %v2410, %v2596
    %2598 = vmatprep.mubr.f32.mxu0 0.0
    %2599 = vmatmul.mubr.f32.gmra.mrb[0].mxu0 %v2322
    %v2600 = vpop.f32.mrb[0].mxu0
    %v2601 = vadd.f32 %v2406, %v2600
    %v2602 = vpop.f32.mrb[0].mxu0
    %v2603 = vadd.f32 %v2410, %v2602
    %2604 = vmatprep.mubr.f32.mxu0 0.0
    %2605 = vmatmul.mubr.f32.gmra.mrb[0].mxu0 %v2323
    %v2606 = vpop.f32.mrb[0].mxu0
    %v2607 = vadd.f32 %v2406, %v2606
    %v2608 = vpop.f32.mrb[0].mxu0
    %v2609 = vadd.f32 %v2410, %v2608
    %2610 = vmatprep.mubr.f32.mxu0 0.0
    %2611 = vmatmul.mubr.f32.gmra.mrb[0].mxu0 %v2324
    %v2612 = vpop.f32.mrb[0].mxu0
    %v2613 = vadd.f32 %v2406, %v2612
    %v2614 = vpop.f32.mrb[0].mxu0
    %v2615 = vadd.f32 %v2410, %v2614
    %2616 = vmatprep.mubr.f32.mxu0 0.0
    %2617 = vmatmul.mubr.f32.gmra.mrb[0].mxu0 %v2325
    %v2618 = vpop.f32.mrb[0].mxu0
    %v2619 = vadd.f32 %v2406, %v2618
    %v2620 = vpop.f32.mrb[0].mxu0
    %v2621 = vadd.f32 %v2410, %v2620
    %2622 = vmatprep.mubr.f32.mxu0 0.0
    %2623 = vmatmul.mubr.f32.gmra.mrb[0].mxu0 %v2326
    %v2624 = vpop.f32.mrb[0].mxu0
    %v2625 = vadd.f32 %v2406, %v2624
    %v2626 = vpop.f32.mrb[0].mxu0
    %v2627 = vadd.f32 %v2410, %v2626
    %2628 = vmatprep.mubr.f32.mxu0 0.0
    %2629 = vmatmul.mubr.f32.gmra.mrb[0].mxu0 %v2327
    %v2630 = vpop.f32.mrb[0].mxu0
    %v2631 = vadd.f32 %v2406, %v2630
    %v2632 = vpop.f32.mrb[0].mxu0
    %v2633 = vadd.f32 %v2410, %v2632
    %2634 = vmatprep.mubr.f32.mxu0 0.0
    %2635 = vmatmul.mubr.f32.gmra.mrb[0].mxu0 %v2328
    %v2636 = vpop.f32.mrb[0].mxu0
    %v2637 = vadd.f32 %v2406, %v2636
    %v2638 = vpop.f32.mrb[0].mxu0
    %v2639 = vadd.f32 %v2410, %v2638
    %2640 = vdwg.mxu0
    %2641 = vst [vmem:[#allocation2] sm:$0xff] %v2482
    %2642 = vst [vmem:[#allocation2 + $0x8] sm:$0xff] %v2484
    %2643 = vst [vmem:[#allocation2 + $0x10] sm:$0xff] %v2595
    %2644 = vst [vmem:[#allocation2 + $0x18] sm:$0xff] %v2597
    %2645 = vst [vmem:[#allocation2 + $0x20] sm:$0xff] %v2488
    %2646 = vst [vmem:[#allocation2 + $0x28] sm:$0xff] %v2490
    %2647 = vst [vmem:[#allocation2 + $0x30] sm:$0xff] %v2601
    %2648 = vst [vmem:[#allocation2 + $0x38] sm:$0xff] %v2603
    %2649 = vst [vmem:[#allocation2 + $0x40] sm:$0xff] %v2494
    %2650 = vst [vmem:[#allocation2 + $0x48] sm:$0xff] %v2496
    %2651 = vst [vmem:[#allocation2 + $0x50] sm:$0xff] %v2607
    %2652 = vst [vmem:[#allocation2 + $0x58] sm:$0xff] %v2609
    %2653 = vst [vmem:[#allocation2 + $0x60] sm:$0xff] %v2500
    %2654 = vst [vmem:[#allocation2 + $0x68] sm:$0xff] %v2502
    %2655 = vst [vmem:[#allocation2 + $0x70] sm:$0xff] %v2613
    %2656 = vst [vmem:[#allocation2 + $0x78] sm:$0xff] %v2615
    %2657 = vst [vmem:[#allocation2 + $0x80] sm:$0xff] %v2506
    %2658 = vst [vmem:[#allocation2 + $0x88] sm:$0xff] %v2508
    %2659 = vst [vmem:[#allocation2 + $0x90] sm:$0xff] %v2619
    %2660 = vst [vmem:[#allocation2 + $0x98] sm:$0xff] %v2621
    %2661 = vst [vmem:[#allocation2 + $0xa0] sm:$0xff] %v2512
    %2662 = vst [vmem:[#allocation2 + $0xa8] sm:$0xff] %v2514
    %2663 = vst [vmem:[#allocation2 + $0xb0] sm:$0xff] %v2625
    %2664 = vst [vmem:[#allocation2 + $0xb8] sm:$0xff] %v2627
    %2665 = vst [vmem:[#allocation2 + $0xc0] sm:$0xff] %v2518
    %2666 = vst [vmem:[#allocation2 + $0xc8] sm:$0xff] %v2520
    %2667 = vst [vmem:[#allocation2 + $0xd0] sm:$0xff] %v2631
    %2668 = vst [vmem:[#allocation2 + $0xd8] sm:$0xff] %v2633
    %2669 = vst [vmem:[#allocation2 + $0xe0] sm:$0xff] %v2524
    %2670 = vst [vmem:[#allocation2 + $0xe8] sm:$0xff] %v2526
    %2671 = vst [vmem:[#allocation2 + $0xf0] sm:$0xff] %v2637
    %2672 = vst [vmem:[#allocation2 + $0xf8] sm:$0xff] %v2639
    %v2673 = vld [vmem:[#allocation2] sm:$0xff]
    %v2674 = vld [vmem:[#allocation2 + $0x8] sm:$0xff]
    %v2675 = vld [vmem:[#allocation2 + $0x10] sm:$0xff]
    %v2676 = vld [vmem:[#allocation2 + $0x18] sm:$0xff]
    %v2677 = vld [vmem:[%s5] sm:$0xff]
    %v2678 = vld [vmem:[%s5 + $0x8] sm:$0xff]
    %v2679 = vld [vmem:[%s5 + $0x10] sm:$0xff]
    %v2680 = vld [vmem:[%s5 + $0x18] sm:$0xff]
    %v2681 = vld [vmem:[%s5 + $0x20] sm:$0xff]
    %v2682 = vld [vmem:[%s5 + $0x28] sm:$0xff]
    %v2683 = vld [vmem:[%s5 + $0x30] sm:$0xff]
    %v2684 = vld [vmem:[%s5 + $0x38] sm:$0xff]
    %v2685 = vld [vmem:[%s5 + $0x40] sm:$0xff]
    %v2686 = vld [vmem:[%s5 + $0x48] sm:$0xff]
    %v2687 = vld [vmem:[%s5 + $0x50] sm:$0xff]
    %v2688 = vld [vmem:[%s5 + $0x58] sm:$0xff]
    %v2689 = vld [vmem:[%s5 + $0x60] sm:$0xff]
    %v2690 = vld [vmem:[%s5 + $0x68] sm:$0xff]
    %v2691 = vld [vmem:[%s5 + $0x70] sm:$0xff]
    %v2692 = vld [vmem:[%s5 + $0x78] sm:$0xff]
    %v2693 = vld [vmem:[%s5 + $0x80] sm:$0xff]
    %v2694 = vld [vmem:[%s5 + $0x88] sm:$0xff]
    %v2695 = vld [vmem:[%s5 + $0x90] sm:$0xff]
    %v2696 = vld [vmem:[%s5 + $0x98] sm:$0xff]
    %v2697 = vld [vmem:[%s5 + $0xa0] sm:$0xff]
    %v2698 = vld [vmem:[%s5 + $0xa8] sm:$0xff]
    %v2699 = vld [vmem:[%s5 + $0xb0] sm:$0xff]
    %v2700 = vld [vmem:[%s5 + $0xb8] sm:$0xff]
    %v2701 = vld [vmem:[%s5 + $0xc0] sm:$0xff]
    %v2702 = vld [vmem:[%s5 + $0xc8] sm:$0xff]
    %v2703 = vld [vmem:[%s5 + $0xd0] sm:$0xff]
    %v2704 = vld [vmem:[%s5 + $0xd8] sm:$0xff]
    %v2705 = vld [vmem:[%s5 + $0xe0] sm:$0xff]
    %v2706 = vld [vmem:[%s5 + $0xe8] sm:$0xff]
    %v2707 = vld [vmem:[%s5 + $0xf0] sm:$0xff]
    %v2708 = vld [vmem:[%s5 + $0xf8] sm:$0xff]
    %v2709 = vld [vmem:[%s5 + $0x100] sm:$0xff]
    %v2710 = vld [vmem:[%s5 + $0x108] sm:$0xff]
    %v2711 = vld [vmem:[%s5 + $0x110] sm:$0xff]
    %v2712 = vld [vmem:[%s5 + $0x118] sm:$0xff]
    %v2713 = vld [vmem:[%s5 + $0x120] sm:$0xff]
    %v2714 = vld [vmem:[%s5 + $0x128] sm:$0xff]
    %v2715 = vld [vmem:[%s5 + $0x130] sm:$0xff]
    %v2716 = vld [vmem:[%s5 + $0x138] sm:$0xff]
    %v2717 = vld [vmem:[%s5 + $0x140] sm:$0xff]
    %v2718 = vld [vmem:[%s5 + $0x148] sm:$0xff]
    %v2719 = vld [vmem:[%s5 + $0x150] sm:$0xff]
    %v2720 = vld [vmem:[%s5 + $0x158] sm:$0xff]
    %v2721 = vld [vmem:[%s5 + $0x160] sm:$0xff]
    %v2722 = vld [vmem:[%s5 + $0x168] sm:$0xff]
    %v2723 = vld [vmem:[%s5 + $0x170] sm:$0xff]
    %v2724 = vld [vmem:[%s5 + $0x178] sm:$0xff]
    %v2725 = vld [vmem:[%s5 + $0x180] sm:$0xff]
    %v2726 = vld [vmem:[%s5 + $0x188] sm:$0xff]
    %v2727 = vld [vmem:[%s5 + $0x190] sm:$0xff]
    %v2728 = vld [vmem:[%s5 + $0x198] sm:$0xff]
    %v2729 = vld [vmem:[%s5 + $0x1a0] sm:$0xff]
    %v2730 = vld [vmem:[%s5 + $0x1a8] sm:$0xff]
    %v2731 = vld [vmem:[%s5 + $0x1b0] sm:$0xff]
    %v2732 = vld [vmem:[%s5 + $0x1b8] sm:$0xff]
    %v2733 = vld [vmem:[%s5 + $0x1c0] sm:$0xff]
    %v2734 = vld [vmem:[%s5 + $0x1c8] sm:$0xff]
    %v2735 = vld [vmem:[%s5 + $0x1d0] sm:$0xff]
    %v2736 = vld [vmem:[%s5 + $0x1d8] sm:$0xff]
    %v2737 = vld [vmem:[%s5 + $0x1e0] sm:$0xff]
    %v2738 = vld [vmem:[%s5 + $0x1e8] sm:$0xff]
    %v2739 = vld [vmem:[%s5 + $0x1f0] sm:$0xff]
    %v2740 = vld [vmem:[%s5 + $0x1f8] sm:$0xff]
    %2741 = vmatprep.subr.mxu0 %v2678
    %2742 = vmatpush1.msra.mxu0 %v2677
    %2743 = vmatprep.subr.mxu0 %v2682
    %2744 = vmatpush1.msra.mxu0 %v2681
    %2745 = vmatprep.subr.mxu0 %v2686
    %2746 = vmatpush1.msra.mxu0 %v2685
    %2747 = vmatprep.subr.mxu0 %v2690
    %2748 = vmatpush1.msra.mxu0 %v2689
    %2749 = vmatprep.subr.mxu0 %v2694
    %2750 = vmatpush1.msra.mxu0 %v2693
    %2751 = vmatprep.subr.mxu0 %v2698
    %2752 = vmatpush1.msra.mxu0 %v2697
    %2753 = vmatprep.subr.mxu0 %v2702
    %2754 = vmatpush1.msra.mxu0 %v2701
    %2755 = vmatprep.subr.mxu0 %v2706
    %2756 = vmatpush1.msra.mxu0 %v2705
    %2757 = vmatprep.subr.mxu0 %v2710
    %2758 = vmatpush1.msra.mxu0 %v2709
    %2759 = vmatprep.subr.mxu0 %v2714
    %2760 = vmatpush1.msra.mxu0 %v2713
    %2761 = vmatprep.subr.mxu0 %v2718
    %2762 = vmatpush1.msra.mxu0 %v2717
    %2763 = vmatprep.subr.mxu0 %v2722
    %2764 = vmatpush1.msra.mxu0 %v2721
    %2765 = vmatprep.subr.mxu0 %v2726
    %2766 = vmatpush1.msra.mxu0 %v2725
    %2767 = vmatprep.subr.mxu0 %v2730
    %2768 = vmatpush1.msra.mxu0 %v2729
    %2769 = vmatprep.subr.mxu0 %v2734
    %2770 = vmatpush1.msra.mxu0 %v2733
    %2771 = vmatprep.subr.mxu0 %v2738
    %2772 = vmatpush1.msra.mxu0 %v2737
    %2773 = vmatprep.subr.mxu0 0.0
    %2774 = vmatpush1.msra.mxu0 0.0
    %2775 = vmatprep.subr.mxu0 0.0
    %2776 = vmatpush1.msra.mxu0 0.0
    %2777 = vmatprep.subr.mxu0 0.0
    %2778 = vmatpush1.msra.mxu0 0.0
    %2779 = vmatprep.subr.mxu0 0.0
    %2780 = vmatpush1.msra.mxu0 0.0
    %2781 = vmatprep.subr.mxu0 0.0
    %2782 = vmatpush1.msra.mxu0 0.0
    %2783 = vmatprep.subr.mxu0 0.0
    %2784 = vmatpush1.msra.mxu0 0.0
    %2785 = vmatprep.subr.mxu0 0.0
    %2786 = vmatpush1.msra.mxu0 0.0
    %2787 = vmatprep.subr.mxu0 0.0
    %2788 = vmatpush1.msra.mxu0 0.0
    %2789 = vmatprep.subr.mxu0 0.0
    %2790 = vmatpush1.msra.mxu0 0.0
    %2791 = vmatprep.subr.mxu0 0.0
    %2792 = vmatpush1.msra.mxu0 0.0
    %2793 = vmatprep.subr.mxu0 0.0
    %2794 = vmatpush1.msra.mxu0 0.0
    %2795 = vmatprep.subr.mxu0 0.0
    %2796 = vmatpush1.msra.mxu0 0.0
    %2797 = vmatprep.subr.mxu0 0.0
    %2798 = vmatpush1.msra.mxu0 0.0
    %2799 = vmatprep.subr.mxu0 0.0
    %2800 = vmatpush1.msra.mxu0 0.0
    %2801 = vmatprep.subr.mxu0 0.0
    %2802 = vmatpush1.msra.mxu0 0.0
    %2803 = vmatprep.subr.mxu0 0.0
    %2804 = vmatpush1.msra.mxu0 0.0
    %2805 = vmatprep.mubr.f32.mxu0 0.0
    %2806 = vmatmul.mubr.f32.gmra.mrb[0].mxu0 0.0
    %v2807 = vpop.f32.mrb[0].mxu0
    %v2808 = vadd.f32 0.0, %v2807
    %v2809 = vpop.f32.mrb[0].mxu0
    %v2810 = vadd.f32 0.0, %v2809
    %2811 = vdwg.mxu0
    %2812 = vmatprep.subr.mxu0 %v2680
    %2813 = vmatpush1.msra.mxu0 %v2679
    %2814 = vmatprep.subr.mxu0 %v2684
    %2815 = vmatpush1.msra.mxu0 %v2683
    %2816 = vmatprep.subr.mxu0 %v2688
    %2817 = vmatpush1.msra.mxu0 %v2687
    %2818 = vmatprep.subr.mxu0 %v2692
    %2819 = vmatpush1.msra.mxu0 %v2691
    %2820 = vmatprep.subr.mxu0 %v2696
    %2821 = vmatpush1.msra.mxu0 %v2695
    %2822 = vmatprep.subr.mxu0 %v2700
    %2823 = vmatpush1.msra.mxu0 %v2699
    %2824 = vmatprep.subr.mxu0 %v2704
    %2825 = vmatpush1.msra.mxu0 %v2703
    %2826 = vmatprep.subr.mxu0 %v2708
    %2827 = vmatpush1.msra.mxu0 %v2707
    %2828 = vmatprep.subr.mxu0 %v2712
    %2829 = vmatpush1.msra.mxu0 %v2711
    %2830 = vmatprep.subr.mxu0 %v2716
    %2831 = vmatpush1.msra.mxu0 %v2715
    %2832 = vmatprep.subr.mxu0 %v2720
    %2833 = vmatpush1.msra.mxu0 %v2719
    %2834 = vmatprep.subr.mxu0 %v2724
    %2835 = vmatpush1.msra.mxu0 %v2723
    %2836 = vmatprep.subr.mxu0 %v2728
    %2837 = vmatpush1.msra.mxu0 %v2727
    %2838 = vmatprep.subr.mxu0 %v2732
    %2839 = vmatpush1.msra.mxu0 %v2731
    %2840 = vmatprep.subr.mxu0 %v2736
    %2841 = vmatpush1.msra.mxu0 %v2735
    %2842 = vmatprep.subr.mxu0 %v2740
    %2843 = vmatpush1.msra.mxu0 %v2739
    %2844 = vmatprep.subr.mxu0 0.0
    %2845 = vmatpush1.msra.mxu0 0.0
    %2846 = vmatprep.subr.mxu0 0.0
    %2847 = vmatpush1.msra.mxu0 0.0
    %2848 = vmatprep.subr.mxu0 0.0
    %2849 = vmatpush1.msra.mxu0 0.0
    %2850 = vmatprep.subr.mxu0 0.0
    %2851 = vmatpush1.msra.mxu0 0.0
    %2852 = vmatprep.subr.mxu0 0.0
    %2853 = vmatpush1.msra.mxu0 0.0
    %2854 = vmatprep.subr.mxu0 0.0
    %2855 = vmatpush1.msra.mxu0 0.0
    %2856 = vmatprep.subr.mxu0 0.0
    %2857 = vmatpush1.msra.mxu0 0.0
    %2858 = vmatprep.subr.mxu0 0.0
    %2859 = vmatpush1.msra.mxu0 0.0
    %2860 = vmatprep.subr.mxu0 0.0
    %2861 = vmatpush1.msra.mxu0 0.0
    %2862 = vmatprep.subr.mxu0 0.0
    %2863 = vmatpush1.msra.mxu0 0.0
    %2864 = vmatprep.subr.mxu0 0.0
    %2865 = vmatpush1.msra.mxu0 0.0
    %2866 = vmatprep.subr.mxu0 0.0
    %2867 = vmatpush1.msra.mxu0 0.0
    %2868 = vmatprep.subr.mxu0 0.0
    %2869 = vmatpush1.msra.mxu0 0.0
    %2870 = vmatprep.subr.mxu0 0.0
    %2871 = vmatpush1.msra.mxu0 0.0
    %2872 = vmatprep.subr.mxu0 0.0
    %2873 = vmatpush1.msra.mxu0 0.0
    %2874 = vmatprep.subr.mxu0 0.0
    %2875 = vmatpush1.msra.mxu0 0.0
    %2876 = vmatprep.mubr.f32.mxu0 0.0
    %2877 = vmatmul.mubr.f32.gmra.mrb[0].mxu0 0.0
    %v2878 = vpop.f32.mrb[0].mxu0
    %v2879 = vadd.f32 0.0, %v2878
    %v2880 = vpop.f32.mrb[0].mxu0
    %v2881 = vadd.f32 0.0, %v2880
    %2882 = vdwg.mxu0
    %v2883 = vadd.f32 %v2673, %v2808
    %v2884 = vadd.f32 %v2674, %v2810
    %v2885 = vadd.f32 %v2675, %v2879
    %v2886 = vadd.f32 %v2676, %v2881
    %v2887 = vxor.u32 %v2883, 2147483648
    %v2888 = vxor.u32 %v2884, 2147483648
    %v2889 = vxor.u32 %v2885, 2147483648
    %v2890 = vmul.f32 %v2887, 1.442695
    %v2891 = vpow.pop %v2890
    %v2892 = vmul.f32 %v2888, 1.442695
    %v2893 = vpow.pop %v2892
    %v2894 = vmul.f32 %v2889, 1.442695
    %v2895 = vpow.pop %v2894
    %v2896 = vadd.f32 %v2891, 1.0
    %v2897 = vadd.f32 %v2893, 1.0
    %v2898 = vadd.f32 %v2895, 1.0
    %v2899 = vrcp.pop %v2896
    %v2900 = vmul.f32 1.0, %v2899
    %v2901 = vrcp.pop %v2897
    %v2902 = vmul.f32 1.0, %v2901
    %v2903 = vrcp.pop %v2898
    %v2904 = vmul.f32 1.0, %v2903
    %v2905 = vtanh.pop %v2886
    %v2906 = vmul.f32 %v2902, 0.0
    %v2907 = vmul.f32 %v2900, %v2905
    %v2908 = vadd.f32 %v2906, %v2907
    %v2909 = vtanh.pop %v2908
    %v2910 = vmul.f32 %v2904, %v2909
    %2911 = vst [vmem:[#allocation3] sm:$0xff] %v2910
    %v2912 = vld [vmem:[#allocation2 + $0x20] sm:$0xff]
    %v2913 = vld [vmem:[#allocation2 + $0x28] sm:$0xff]
    %v2914 = vld [vmem:[#allocation2 + $0x30] sm:$0xff]
    %v2915 = vld [vmem:[#allocation2 + $0x38] sm:$0xff]
    %v2916 = vld [vmem:[%s5] sm:$0xff]
    %v2917 = vld [vmem:[%s5 + $0x8] sm:$0xff]
    %v2918 = vld [vmem:[%s5 + $0x10] sm:$0xff]
    %v2919 = vld [vmem:[%s5 + $0x18] sm:$0xff]
    %v2920 = vld [vmem:[%s5 + $0x20] sm:$0xff]
    %v2921 = vld [vmem:[%s5 + $0x28] sm:$0xff]
    %v2922 = vld [vmem:[%s5 + $0x30] sm:$0xff]
    %v2923 = vld [vmem:[%s5 + $0x38] sm:$0xff]
    %v2924 = vld [vmem:[%s5 + $0x40] sm:$0xff]
    %v2925 = vld [vmem:[%s5 + $0x48] sm:$0xff]
    %v2926 = vld [vmem:[%s5 + $0x50] sm:$0xff]
    %v2927 = vld [vmem:[%s5 + $0x58] sm:$0xff]
    %v2928 = vld [vmem:[%s5 + $0x60] sm:$0xff]
    %v2929 = vld [vmem:[%s5 + $0x68] sm:$0xff]
    %v2930 = vld [vmem:[%s5 + $0x70] sm:$0xff]
    %v2931 = vld [vmem:[%s5 + $0x78] sm:$0xff]
    %v2932 = vld [vmem:[%s5 + $0x80] sm:$0xff]
    %v2933 = vld [vmem:[%s5 + $0x88] sm:$0xff]
    %v2934 = vld [vmem:[%s5 + $0x90] sm:$0xff]
    %v2935 = vld [vmem:[%s5 + $0x98] sm:$0xff]
    %v2936 = vld [vmem:[%s5 + $0xa0] sm:$0xff]
    %v2937 = vld [vmem:[%s5 + $0xa8] sm:$0xff]
    %v2938 = vld [vmem:[%s5 + $0xb0] sm:$0xff]
    %v2939 = vld [vmem:[%s5 + $0xb8] sm:$0xff]
    %v2940 = vld [vmem:[%s5 + $0xc0] sm:$0xff]
    %v2941 = vld [vmem:[%s5 + $0xc8] sm:$0xff]
    %v2942 = vld [vmem:[%s5 + $0xd0] sm:$0xff]
    %v2943 = vld [vmem:[%s5 + $0xd8] sm:$0xff]
    %v2944 = vld [vmem:[%s5 + $0xe0] sm:$0xff]
    %v2945 = vld [vmem:[%s5 + $0xe8] sm:$0xff]
    %v2946 = vld [vmem:[%s5 + $0xf0] sm:$0xff]
    %v2947 = vld [vmem:[%s5 + $0xf8] sm:$0xff]
    %v2948 = vld [vmem:[%s5 + $0x100] sm:$0xff]
    %v2949 = vld [vmem:[%s5 + $0x108] sm:$0xff]
    %v2950 = vld [vmem:[%s5 + $0x110] sm:$0xff]
    %v2951 = vld [vmem:[%s5 + $0x118] sm:$0xff]
    %v2952 = vld [vmem:[%s5 + $0x120] sm:$0xff]
    %v2953 = vld [vmem:[%s5 + $0x128] sm:$0xff]
    %v2954 = vld [vmem:[%s5 + $0x130] sm:$0xff]
    %v2955 = vld [vmem:[%s5 + $0x138] sm:$0xff]
    %v2956 = vld [vmem:[%s5 + $0x140] sm:$0xff]
    %v2957 = vld [vmem:[%s5 + $0x148] sm:$0xff]
    %v2958 = vld [vmem:[%s5 + $0x150] sm:$0xff]
    %v2959 = vld [vmem:[%s5 + $0x158] sm:$0xff]
    %v2960 = vld [vmem:[%s5 + $0x160] sm:$0xff]
    %v2961 = vld [vmem:[%s5 + $0x168] sm:$0xff]
    %v2962 = vld [vmem:[%s5 + $0x170] sm:$0xff]
    %v2963 = vld [vmem:[%s5 + $0x178] sm:$0xff]
    %v2964 = vld [vmem:[%s5 + $0x180] sm:$0xff]
    %v2965 = vld [vmem:[%s5 + $0x188] sm:$0xff]
    %v2966 = vld [vmem:[%s5 + $0x190] sm:$0xff]
    %v2967 = vld [vmem:[%s5 + $0x198] sm:$0xff]
    %v2968 = vld [vmem:[%s5 + $0x1a0] sm:$0xff]
    %v2969 = vld [vmem:[%s5 + $0x1a8] sm:$0xff]
    %v2970 = vld [vmem:[%s5 + $0x1b0] sm:$0xff]
    %v2971 = vld [vmem:[%s5 + $0x1b8] sm:$0xff]
    %v2972 = vld [vmem:[%s5 + $0x1c0] sm:$0xff]
    %v2973 = vld [vmem:[%s5 + $0x1c8] sm:$0xff]
    %v2974 = vld [vmem:[%s5 + $0x1d0] sm:$0xff]
    %v2975 = vld [vmem:[%s5 + $0x1d8] sm:$0xff]
    %v2976 = vld [vmem:[%s5 + $0x1e0] sm:$0xff]
    %v2977 = vld [vmem:[%s5 + $0x1e8] sm:$0xff]
    %v2978 = vld [vmem:[%s5 + $0x1f0] sm:$0xff]
    %v2979 = vld [vmem:[%s5 + $0x1f8] sm:$0xff]
    %2980 = vmatprep.subr.mxu0 %v2917
    %2981 = vmatpush1.msra.mxu0 %v2916
    %2982 = vmatprep.subr.mxu0 %v2921
    %2983 = vmatpush1.msra.mxu0 %v2920
    %2984 = vmatprep.subr.mxu0 %v2925
    %2985 = vmatpush1.msra.mxu0 %v2924
    %2986 = vmatprep.subr.mxu0 %v2929
    %2987 = vmatpush1.msra.mxu0 %v2928
    %2988 = vmatprep.subr.mxu0 %v2933
    %2989 = vmatpush1.msra.mxu0 %v2932
    %2990 = vmatprep.subr.mxu0 %v2937
    %2991 = vmatpush1.msra.mxu0 %v2936
    %2992 = vmatprep.subr.mxu0 %v2941
    %2993 = vmatpush1.msra.mxu0 %v2940
    %2994 = vmatprep.subr.mxu0 %v2945
    %2995 = vmatpush1.msra.mxu0 %v2944
    %2996 = vmatprep.subr.mxu0 %v2949
    %2997 = vmatpush1.msra.mxu0 %v2948
    %2998 = vmatprep.subr.mxu0 %v2953
    %2999 = vmatpush1.msra.mxu0 %v2952
    %3000 = vmatprep.subr.mxu0 %v2957
    %3001 = vmatpush1.msra.mxu0 %v2956
    %3002 = vmatprep.subr.mxu0 %v2961
    %3003 = vmatpush1.msra.mxu0 %v2960
    %3004 = vmatprep.subr.mxu0 %v2965
    %3005 = vmatpush1.msra.mxu0 %v2964
    %3006 = vmatprep.subr.mxu0 %v2969
    %3007 = vmatpush1.msra.mxu0 %v2968
    %3008 = vmatprep.subr.mxu0 %v2973
    %3009 = vmatpush1.msra.mxu0 %v2972
    %3010 = vmatprep.subr.mxu0 %v2977
    %3011 = vmatpush1.msra.mxu0 %v2976
    %3012 = vmatprep.subr.mxu0 0.0
    %3013 = vmatpush1.msra.mxu0 0.0
    %3014 = vmatprep.subr.mxu0 0.0
    %3015 = vmatpush1.msra.mxu0 0.0
    %3016 = vmatprep.subr.mxu0 0.0
    %3017 = vmatpush1.msra.mxu0 0.0
    %3018 = vmatprep.subr.mxu0 0.0
    %3019 = vmatpush1.msra.mxu0 0.0
    %3020 = vmatprep.subr.mxu0 0.0
    %3021 = vmatpush1.msra.mxu0 0.0
    %3022 = vmatprep.subr.mxu0 0.0
    %3023 = vmatpush1.msra.mxu0 0.0
    %3024 = vmatprep.subr.mxu0 0.0
    %3025 = vmatpush1.msra.mxu0 0.0
    %3026 = vmatprep.subr.mxu0 0.0
    %3027 = vmatpush1.msra.mxu0 0.0
    %3028 = vmatprep.subr.mxu0 0.0
    %3029 = vmatpush1.msra.mxu0 0.0
    %3030 = vmatprep.subr.mxu0 0.0
    %3031 = vmatpush1.msra.mxu0 0.0
    %3032 = vmatprep.subr.mxu0 0.0
    %3033 = vmatpush1.msra.mxu0 0.0
    %3034 = vmatprep.subr.mxu0 0.0
    %3035 = vmatpush1.msra.mxu0 0.0
    %3036 = vmatprep.subr.mxu0 0.0
    %3037 = vmatpush1.msra.mxu0 0.0
    %3038 = vmatprep.subr.mxu0 0.0
    %3039 = vmatpush1.msra.mxu0 0.0
    %3040 = vmatprep.subr.mxu0 0.0
    %3041 = vmatpush1.msra.mxu0 0.0
    %3042 = vmatprep.subr.mxu0 0.0
    %3043 = vmatpush1.msra.mxu0 0.0
    %3044 = vmatprep.mubr.f32.mxu0 0.0
    %3045 = vmatmul.mubr.f32.gmra.mrb[0].mxu0 %v2910
    %v3046 = vpop.f32.mrb[0].mxu0
    %v3047 = vadd.f32 0.0, %v3046
    %v3048 = vpop.f32.mrb[0].mxu0
    %v3049 = vadd.f32 0.0, %v3048
    %3050 = vdwg.mxu0
    %3051 = vmatprep.subr.mxu0 %v2919
    %3052 = vmatpush1.msra.mxu0 %v2918
    %3053 = vmatprep.subr.mxu0 %v2923
    %3054 = vmatpush1.msra.mxu0 %v2922
    %3055 = vmatprep.subr.mxu0 %v2927
    %3056 = vmatpush1.msra.mxu0 %v2926
    %3057 = vmatprep.subr.mxu0 %v2931
    %3058 = vmatpush1.msra.mxu0 %v2930
    %3059 = vmatprep.subr.mxu0 %v2935
    %3060 = vmatpush1.msra.mxu0 %v2934
    %3061 = vmatprep.subr.mxu0 %v2939
    %3062 = vmatpush1.msra.mxu0 %v2938
    %3063 = vmatprep.subr.mxu0 %v2943
    %3064 = vmatpush1.msra.mxu0 %v2942
    %3065 = vmatprep.subr.mxu0 %v2947
    %3066 = vmatpush1.msra.mxu0 %v2946
    %3067 = vmatprep.subr.mxu0 %v2951
    %3068 = vmatpush1.msra.mxu0 %v2950
    %3069 = vmatprep.subr.mxu0 %v2955
    %3070 = vmatpush1.msra.mxu0 %v2954
    %3071 = vmatprep.subr.mxu0 %v2959
    %3072 = vmatpush1.msra.mxu0 %v2958
    %3073 = vmatprep.subr.mxu0 %v2963
    %3074 = vmatpush1.msra.mxu0 %v2962
    %3075 = vmatprep.subr.mxu0 %v2967
    %3076 = vmatpush1.msra.mxu0 %v2966
    %3077 = vmatprep.subr.mxu0 %v2971
    %3078 = vmatpush1.msra.mxu0 %v2970
    %3079 = vmatprep.subr.mxu0 %v2975
    %3080 = vmatpush1.msra.mxu0 %v2974
    %3081 = vmatprep.subr.mxu0 %v2979
    %3082 = vmatpush1.msra.mxu0 %v2978
    %3083 = vmatprep.subr.mxu0 0.0
    %3084 = vmatpush1.msra.mxu0 0.0
    %3085 = vmatprep.subr.mxu0 0.0
    %3086 = vmatpush1.msra.mxu0 0.0
    %3087 = vmatprep.subr.mxu0 0.0
    %3088 = vmatpush1.msra.mxu0 0.0
    %3089 = vmatprep.subr.mxu0 0.0
    %3090 = vmatpush1.msra.mxu0 0.0
    %3091 = vmatprep.subr.mxu0 0.0
    %3092 = vmatpush1.msra.mxu0 0.0
    %3093 = vmatprep.subr.mxu0 0.0
    %3094 = vmatpush1.msra.mxu0 0.0
    %3095 = vmatprep.subr.mxu0 0.0
    %3096 = vmatpush1.msra.mxu0 0.0
    %3097 = vmatprep.subr.mxu0 0.0
    %3098 = vmatpush1.msra.mxu0 0.0
    %3099 = vmatprep.subr.mxu0 0.0
    %3100 = vmatpush1.msra.mxu0 0.0
    %3101 = vmatprep.subr.mxu0 0.0
    %3102 = vmatpush1.msra.mxu0 0.0
    %3103 = vmatprep.subr.mxu0 0.0
    %3104 = vmatpush1.msra.mxu0 0.0
    %3105 = vmatprep.subr.mxu0 0.0
    %3106 = vmatpush1.msra.mxu0 0.0
    %3107 = vmatprep.subr.mxu0 0.0
    %3108 = vmatpush1.msra.mxu0 0.0
    %3109 = vmatprep.subr.mxu0 0.0
    %3110 = vmatpush1.msra.mxu0 0.0
    %3111 = vmatprep.subr.mxu0 0.0
    %3112 = vmatpush1.msra.mxu0 0.0
    %3113 = vmatprep.subr.mxu0 0.0
    %3114 = vmatpush1.msra.mxu0 0.0
    %3115 = vmatprep.mubr.f32.mxu0 0.0
    %3116 = vmatmul.mubr.f32.gmra.mrb[0].mxu0 %v2910
    %v3117 = vpop.f32.mrb[0].mxu0
    %v3118 = vadd.f32 0.0, %v3117
    %v3119 = vpop.f32.mrb[0].mxu0
    %v3120 = vadd.f32 0.0, %v3119
    %3121 = vdwg.mxu0
    %v3122 = vadd.f32 %v2912, %v3047
    %v3123 = vadd.f32 %v2913, %v3049
    %v3124 = vadd.f32 %v2914, %v3118
    %v3125 = vadd.f32 %v2915, %v3120
    %v3126 = vxor.u32 %v3122, 2147483648
    %v3127 = vxor.u32 %v3123, 2147483648
    %v3128 = vxor.u32 %v3124, 2147483648
    %v3129 = vmul.f32 %v3126, 1.442695
    %v3130 = vpow.pop %v3129
    %v3131 = vmul.f32 %v3127, 1.442695
    %v3132 = vpow.pop %v3131
    %v3133 = vmul.f32 %v3128, 1.442695
    %v3134 = vpow.pop %v3133
    %v3135 = vadd.f32 %v3130, 1.0
    %v3136 = vadd.f32 %v3132, 1.0
    %v3137 = vadd.f32 %v3134, 1.0
    %v3138 = vrcp.pop %v3135
    %v3139 = vmul.f32 1.0, %v3138
    %v3140 = vrcp.pop %v3136
    %v3141 = vmul.f32 1.0, %v3140
    %v3142 = vrcp.pop %v3137
    %v3143 = vmul.f32 1.0, %v3142
    %v3144 = vtanh.pop %v3125
    %v3145 = vmul.f32 %v3141, %v2908
    %v3146 = vmul.f32 %v3139, %v3144
    %v3147 = vadd.f32 %v3145, %v3146
    %v3148 = vtanh.pop %v3147
    %v3149 = vmul.f32 %v3143, %v3148
    %3150 = vst [vmem:[#allocation3 + $0x8] sm:$0xff] %v3149
    %v3151 = vld [vmem:[#allocation2 + $0x40] sm:$0xff]
    %v3152 = vld [vmem:[#allocation2 + $0x48] sm:$0xff]
    %v3153 = vld [vmem:[#allocation2 + $0x50] sm:$0xff]
    %v3154 = vld [vmem:[#allocation2 + $0x58] sm:$0xff]
    %v3155 = vld [vmem:[%s5] sm:$0xff]
    %v3156 = vld [vmem:[%s5 + $0x8] sm:$0xff]
    %v3157 = vld [vmem:[%s5 + $0x10] sm:$0xff]
    %v3158 = vld [vmem:[%s5 + $0x18] sm:$0xff]
    %v3159 = vld [vmem:[%s5 + $0x20] sm:$0xff]
    %v3160 = vld [vmem:[%s5 + $0x28] sm:$0xff]
    %v3161 = vld [vmem:[%s5 + $0x30] sm:$0xff]
    %v3162 = vld [vmem:[%s5 + $0x38] sm:$0xff]
    %v3163 = vld [vmem:[%s5 + $0x40] sm:$0xff]
    %v3164 = vld [vmem:[%s5 + $0x48] sm:$0xff]
    %v3165 = vld [vmem:[%s5 + $0x50] sm:$0xff]
    %v3166 = vld [vmem:[%s5 + $0x58] sm:$0xff]
    %v3167 = vld [vmem:[%s5 + $0x60] sm:$0xff]
    %v3168 = vld [vmem:[%s5 + $0x68] sm:$0xff]
    %v3169 = vld [vmem:[%s5 + $0x70] sm:$0xff]
    %v3170 = vld [vmem:[%s5 + $0x78] sm:$0xff]
    %v3171 = vld [vmem:[%s5 + $0x80] sm:$0xff]
    %v3172 = vld [vmem:[%s5 + $0x88] sm:$0xff]
    %v3173 = vld [vmem:[%s5 + $0x90] sm:$0xff]
    %v3174 = vld [vmem:[%s5 + $0x98] sm:$0xff]
    %v3175 = vld [vmem:[%s5 + $0xa0] sm:$0xff]
    %v3176 = vld [vmem:[%s5 + $0xa8] sm:$0xff]
    %v3177 = vld [vmem:[%s5 + $0xb0] sm:$0xff]
    %v3178 = vld [vmem:[%s5 + $0xb8] sm:$0xff]
    %v3179 = vld [vmem:[%s5 + $0xc0] sm:$0xff]
    %v3180 = vld [vmem:[%s5 + $0xc8] sm:$0xff]
    %v3181 = vld [vmem:[%s5 + $0xd0] sm:$0xff]
    %v3182 = vld [vmem:[%s5 + $0xd8] sm:$0xff]
    %v3183 = vld [vmem:[%s5 + $0xe0] sm:$0xff]
    %v3184 = vld [vmem:[%s5 + $0xe8] sm:$0xff]
    %v3185 = vld [vmem:[%s5 + $0xf0] sm:$0xff]
    %v3186 = vld [vmem:[%s5 + $0xf8] sm:$0xff]
    %v3187 = vld [vmem:[%s5 + $0x100] sm:$0xff]
    %v3188 = vld [vmem:[%s5 + $0x108] sm:$0xff]
    %v3189 = vld [vmem:[%s5 + $0x110] sm:$0xff]
    %v3190 = vld [vmem:[%s5 + $0x118] sm:$0xff]
    %v3191 = vld [vmem:[%s5 + $0x120] sm:$0xff]
    %v3192 = vld [vmem:[%s5 + $0x128] sm:$0xff]
    %v3193 = vld [vmem:[%s5 + $0x130] sm:$0xff]
    %v3194 = vld [vmem:[%s5 + $0x138] sm:$0xff]
    %v3195 = vld [vmem:[%s5 + $0x140] sm:$0xff]
    %v3196 = vld [vmem:[%s5 + $0x148] sm:$0xff]
    %v3197 = vld [vmem:[%s5 + $0x150] sm:$0xff]
    %v3198 = vld [vmem:[%s5 + $0x158] sm:$0xff]
    %v3199 = vld [vmem:[%s5 + $0x160] sm:$0xff]
    %v3200 = vld [vmem:[%s5 + $0x168] sm:$0xff]
    %v3201 = vld [vmem:[%s5 + $0x170] sm:$0xff]
    %v3202 = vld [vmem:[%s5 + $0x178] sm:$0xff]
    %v3203 = vld [vmem:[%s5 + $0x180] sm:$0xff]
    %v3204 = vld [vmem:[%s5 + $0x188] sm:$0xff]
    %v3205 = vld [vmem:[%s5 + $0x190] sm:$0xff]
    %v3206 = vld [vmem:[%s5 + $0x198] sm:$0xff]
    %v3207 = vld [vmem:[%s5 + $0x1a0] sm:$0xff]
    %v3208 = vld [vmem:[%s5 + $0x1a8] sm:$0xff]
    %v3209 = vld [vmem:[%s5 + $0x1b0] sm:$0xff]
    %v3210 = vld [vmem:[%s5 + $0x1b8] sm:$0xff]
    %v3211 = vld [vmem:[%s5 + $0x1c0] sm:$0xff]
    %v3212 = vld [vmem:[%s5 + $0x1c8] sm:$0xff]
    %v3213 = vld [vmem:[%s5 + $0x1d0] sm:$0xff]
    %v3214 = vld [vmem:[%s5 + $0x1d8] sm:$0xff]
    %v3215 = vld [vmem:[%s5 + $0x1e0] sm:$0xff]
    %v3216 = vld [vmem:[%s5 + $0x1e8] sm:$0xff]
    %v3217 = vld [vmem:[%s5 + $0x1f0] sm:$0xff]
    %v3218 = vld [vmem:[%s5 + $0x1f8] sm:$0xff]
    %3219 = vmatprep.subr.mxu0 %v3156
    %3220 = vmatpush1.msra.mxu0 %v3155
    %3221 = vmatprep.subr.mxu0 %v3160
    %3222 = vmatpush1.msra.mxu0 %v3159
    %3223 = vmatprep.subr.mxu0 %v3164
    %3224 = vmatpush1.msra.mxu0 %v3163
    %3225 = vmatprep.subr.mxu0 %v3168
    %3226 = vmatpush1.msra.mxu0 %v3167
    %3227 = vmatprep.subr.mxu0 %v3172
    %3228 = vmatpush1.msra.mxu0 %v3171
    %3229 = vmatprep.subr.mxu0 %v3176
    %3230 = vmatpush1.msra.mxu0 %v3175
    %3231 = vmatprep.subr.mxu0 %v3180
    %3232 = vmatpush1.msra.mxu0 %v3179
    %3233 = vmatprep.subr.mxu0 %v3184
    %3234 = vmatpush1.msra.mxu0 %v3183
    %3235 = vmatprep.subr.mxu0 %v3188
    %3236 = vmatpush1.msra.mxu0 %v3187
    %3237 = vmatprep.subr.mxu0 %v3192
    %3238 = vmatpush1.msra.mxu0 %v3191
    %3239 = vmatprep.subr.mxu0 %v3196
    %3240 = vmatpush1.msra.mxu0 %v3195
    %3241 = vmatprep.subr.mxu0 %v3200
    %3242 = vmatpush1.msra.mxu0 %v3199
    %3243 = vmatprep.subr.mxu0 %v3204
    %3244 = vmatpush1.msra.mxu0 %v3203
    %3245 = vmatprep.subr.mxu0 %v3208
    %3246 = vmatpush1.msra.mxu0 %v3207
    %3247 = vmatprep.subr.mxu0 %v3212
    %3248 = vmatpush1.msra.mxu0 %v3211
    %3249 = vmatprep.subr.mxu0 %v3216
    %3250 = vmatpush1.msra.mxu0 %v3215
    %3251 = vmatprep.subr.mxu0 0.0
    %3252 = vmatpush1.msra.mxu0 0.0
    %3253 = vmatprep.subr.mxu0 0.0
    %3254 = vmatpush1.msra.mxu0 0.0
    %3255 = vmatprep.subr.mxu0 0.0
    %3256 = vmatpush1.msra.mxu0 0.0
    %3257 = vmatprep.subr.mxu0 0.0
    %3258 = vmatpush1.msra.mxu0 0.0
    %3259 = vmatprep.subr.mxu0 0.0
    %3260 = vmatpush1.msra.mxu0 0.0
    %3261 = vmatprep.subr.mxu0 0.0
    %3262 = vmatpush1.msra.mxu0 0.0
    %3263 = vmatprep.subr.mxu0 0.0
    %3264 = vmatpush1.msra.mxu0 0.0
    %3265 = vmatprep.subr.mxu0 0.0
    %3266 = vmatpush1.msra.mxu0 0.0
    %3267 = vmatprep.subr.mxu0 0.0
    %3268 = vmatpush1.msra.mxu0 0.0
    %3269 = vmatprep.subr.mxu0 0.0
    %3270 = vmatpush1.msra.mxu0 0.0
    %3271 = vmatprep.subr.mxu0 0.0
    %3272 = vmatpush1.msra.mxu0 0.0
    %3273 = vmatprep.subr.mxu0 0.0
    %3274 = vmatpush1.msra.mxu0 0.0
    %3275 = vmatprep.subr.mxu0 0.0
    %3276 = vmatpush1.msra.mxu0 0.0
    %3277 = vmatprep.subr.mxu0 0.0
    %3278 = vmatpush1.msra.mxu0 0.0
    %3279 = vmatprep.subr.mxu0 0.0
    %3280 = vmatpush1.msra.mxu0 0.0
    %3281 = vmatprep.subr.mxu0 0.0
    %3282 = vmatpush1.msra.mxu0 0.0
    %3283 = vmatprep.mubr.f32.mxu0 0.0
    %3284 = vmatmul.mubr.f32.gmra.mrb[0].mxu0 %v3149
    %v3285 = vpop.f32.mrb[0].mxu0
    %v3286 = vadd.f32 0.0, %v3285
    %v3287 = vpop.f32.mrb[0].mxu0
    %v3288 = vadd.f32 0.0, %v3287
    %3289 = vdwg.mxu0
    %3290 = vmatprep.subr.mxu0 %v3158
    %3291 = vmatpush1.msra.mxu0 %v3157
    %3292 = vmatprep.subr.mxu0 %v3162
    %3293 = vmatpush1.msra.mxu0 %v3161
    %3294 = vmatprep.subr.mxu0 %v3166
    %3295 = vmatpush1.msra.mxu0 %v3165
    %3296 = vmatprep.subr.mxu0 %v3170
    %3297 = vmatpush1.msra.mxu0 %v3169
    %3298 = vmatprep.subr.mxu0 %v3174
    %3299 = vmatpush1.msra.mxu0 %v3173
    %3300 = vmatprep.subr.mxu0 %v3178
    %3301 = vmatpush1.msra.mxu0 %v3177
    %3302 = vmatprep.subr.mxu0 %v3182
    %3303 = vmatpush1.msra.mxu0 %v3181
    %3304 = vmatprep.subr.mxu0 %v3186
    %3305 = vmatpush1.msra.mxu0 %v3185
    %3306 = vmatprep.subr.mxu0 %v3190
    %3307 = vmatpush1.msra.mxu0 %v3189
    %3308 = vmatprep.subr.mxu0 %v3194
    %3309 = vmatpush1.msra.mxu0 %v3193
    %3310 = vmatprep.subr.mxu0 %v3198
    %3311 = vmatpush1.msra.mxu0 %v3197
    %3312 = vmatprep.subr.mxu0 %v3202
    %3313 = vmatpush1.msra.mxu0 %v3201
    %3314 = vmatprep.subr.mxu0 %v3206
    %3315 = vmatpush1.msra.mxu0 %v3205
    %3316 = vmatprep.subr.mxu0 %v3210
    %3317 = vmatpush1.msra.mxu0 %v3209
    %3318 = vmatprep.subr.mxu0 %v3214
    %3319 = vmatpush1.msra.mxu0 %v3213
    %3320 = vmatprep.subr.mxu0 %v3218
    %3321 = vmatpush1.msra.mxu0 %v3217
    %3322 = vmatprep.subr.mxu0 0.0
    %3323 = vmatpush1.msra.mxu0 0.0
    %3324 = vmatprep.subr.mxu0 0.0
    %3325 = vmatpush1.msra.mxu0 0.0
    %3326 = vmatprep.subr.mxu0 0.0
    %3327 = vmatpush1.msra.mxu0 0.0
    %3328 = vmatprep.subr.mxu0 0.0
    %3329 = vmatpush1.msra.mxu0 0.0
    %3330 = vmatprep.subr.mxu0 0.0
    %3331 = vmatpush1.msra.mxu0 0.0
    %3332 = vmatprep.subr.mxu0 0.0
    %3333 = vmatpush1.msra.mxu0 0.0
    %3334 = vmatprep.subr.mxu0 0.0
    %3335 = vmatpush1.msra.mxu0 0.0
    %3336 = vmatprep.subr.mxu0 0.0
    %3337 = vmatpush1.msra.mxu0 0.0
    %3338 = vmatprep.subr.mxu0 0.0
    %3339 = vmatpush1.msra.mxu0 0.0
    %3340 = vmatprep.subr.mxu0 0.0
    %3341 = vmatpush1.msra.mxu0 0.0
    %3342 = vmatprep.subr.mxu0 0.0
    %3343 = vmatpush1.msra.mxu0 0.0
    %3344 = vmatprep.subr.mxu0 0.0
    %3345 = vmatpush1.msra.mxu0 0.0
    %3346 = vmatprep.subr.mxu0 0.0
    %3347 = vmatpush1.msra.mxu0 0.0
    %3348 = vmatprep.subr.mxu0 0.0
    %3349 = vmatpush1.msra.mxu0 0.0
    %3350 = vmatprep.subr.mxu0 0.0
    %3351 = vmatpush1.msra.mxu0 0.0
    %3352 = vmatprep.subr.mxu0 0.0
    %3353 = vmatpush1.msra.mxu0 0.0
    %3354 = vmatprep.mubr.f32.mxu0 0.0
    %3355 = vmatmul.mubr.f32.gmra.mrb[0].mxu0 %v3149
    %v3356 = vpop.f32.mrb[0].mxu0
    %v3357 = vadd.f32 0.0, %v3356
    %v3358 = vpop.f32.mrb[0].mxu0
    %v3359 = vadd.f32 0.0, %v3358
    %3360 = vdwg.mxu0
    %v3361 = vadd.f32 %v3151, %v3286
    %v3362 = vadd.f32 %v3152, %v3288
    %v3363 = vadd.f32 %v3153, %v3357
    %v3364 = vadd.f32 %v3154, %v3359
    %v3365 = vxor.u32 %v3361, 2147483648
    %v3366 = vxor.u32 %v3362, 2147483648
    %v3367 = vxor.u32 %v3363, 2147483648
    %v3368 = vmul.f32 %v3365, 1.442695
    %v3369 = vpow.pop %v3368
    %v3370 = vmul.f32 %v3366, 1.442695
    %v3371 = vpow.pop %v3370
    %v3372 = vmul.f32 %v3367, 1.442695
    %v3373 = vpow.pop %v3372
    %v3374 = vadd.f32 %v3369, 1.0
    %v3375 = vadd.f32 %v3371, 1.0
    %v3376 = vadd.f32 %v3373, 1.0
    %v3377 = vrcp.pop %v3374
    %v3378 = vmul.f32 1.0, %v3377
    %v3379 = vrcp.pop %v3375
    %v3380 = vmul.f32 1.0, %v3379
    %v3381 = vrcp.pop %v3376
    %v3382 = vmul.f32 1.0, %v3381
    %v3383 = vtanh.pop %v3364
    %v3384 = vmul.f32 %v3380, %v3147
    %v3385 = vmul.f32 %v3378, %v3383
    %v3386 = vadd.f32 %v3384, %v3385
    %v3387 = vtanh.pop %v3386
    %v3388 = vmul.f32 %v3382, %v3387
    %3389 = vst [vmem:[#allocation3 + $0x10] sm:$0xff] %v3388
    %v3390 = vld [vmem:[#allocation2 + $0x60] sm:$0xff]
    %v3391 = vld [vmem:[#allocation2 + $0x68] sm:$0xff]
    %v3392 = vld [vmem:[#allocation2 + $0x70] sm:$0xff]
    %v3393 = vld [vmem:[#allocation2 + $0x78] sm:$0xff]
    %v3394 = vld [vmem:[%s5] sm:$0xff]
    %v3395 = vld [vmem:[%s5 + $0x8] sm:$0xff]
    %v3396 = vld [vmem:[%s5 + $0x10] sm:$0xff]
    %v3397 = vld [vmem:[%s5 + $0x18] sm:$0xff]
    %v3398 = vld [vmem:[%s5 + $0x20] sm:$0xff]
    %v3399 = vld [vmem:[%s5 + $0x28] sm:$0xff]
    %v3400 = vld [vmem:[%s5 + $0x30] sm:$0xff]
    %v3401 = vld [vmem:[%s5 + $0x38] sm:$0xff]
    %v3402 = vld [vmem:[%s5 + $0x40] sm:$0xff]
    %v3403 = vld [vmem:[%s5 + $0x48] sm:$0xff]
    %v3404 = vld [vmem:[%s5 + $0x50] sm:$0xff]
    %v3405 = vld [vmem:[%s5 + $0x58] sm:$0xff]
    %v3406 = vld [vmem:[%s5 + $0x60] sm:$0xff]
    %v3407 = vld [vmem:[%s5 + $0x68] sm:$0xff]
    %v3408 = vld [vmem:[%s5 + $0x70] sm:$0xff]
    %v3409 = vld [vmem:[%s5 + $0x78] sm:$0xff]
    %v3410 = vld [vmem:[%s5 + $0x80] sm:$0xff]
    %v3411 = vld [vmem:[%s5 + $0x88] sm:$0xff]
    %v3412 = vld [vmem:[%s5 + $0x90] sm:$0xff]
    %v3413 = vld [vmem:[%s5 + $0x98] sm:$0xff]
    %v3414 = vld [vmem:[%s5 + $0xa0] sm:$0xff]
    %v3415 = vld [vmem:[%s5 + $0xa8] sm:$0xff]
    %v3416 = vld [vmem:[%s5 + $0xb0] sm:$0xff]
    %v3417 = vld [vmem:[%s5 + $0xb8] sm:$0xff]
    %v3418 = vld [vmem:[%s5 + $0xc0] sm:$0xff]
    %v3419 = vld [vmem:[%s5 + $0xc8] sm:$0xff]
    %v3420 = vld [vmem:[%s5 + $0xd0] sm:$0xff]
    %v3421 = vld [vmem:[%s5 + $0xd8] sm:$0xff]
    %v3422 = vld [vmem:[%s5 + $0xe0] sm:$0xff]
    %v3423 = vld [vmem:[%s5 + $0xe8] sm:$0xff]
    %v3424 = vld [vmem:[%s5 + $0xf0] sm:$0xff]
    %v3425 = vld [vmem:[%s5 + $0xf8] sm:$0xff]
    %v3426 = vld [vmem:[%s5 + $0x100] sm:$0xff]
    %v3427 = vld [vmem:[%s5 + $0x108] sm:$0xff]
    %v3428 = vld [vmem:[%s5 + $0x110] sm:$0xff]
    %v3429 = vld [vmem:[%s5 + $0x118] sm:$0xff]
    %v3430 = vld [vmem:[%s5 + $0x120] sm:$0xff]
    %v3431 = vld [vmem:[%s5 + $0x128] sm:$0xff]
    %v3432 = vld [vmem:[%s5 + $0x130] sm:$0xff]
    %v3433 = vld [vmem:[%s5 + $0x138] sm:$0xff]
    %v3434 = vld [vmem:[%s5 + $0x140] sm:$0xff]
    %v3435 = vld [vmem:[%s5 + $0x148] sm:$0xff]
    %v3436 = vld [vmem:[%s5 + $0x150] sm:$0xff]
    %v3437 = vld [vmem:[%s5 + $0x158] sm:$0xff]
    %v3438 = vld [vmem:[%s5 + $0x160] sm:$0xff]
    %v3439 = vld [vmem:[%s5 + $0x168] sm:$0xff]
    %v3440 = vld [vmem:[%s5 + $0x170] sm:$0xff]
    %v3441 = vld [vmem:[%s5 + $0x178] sm:$0xff]
    %v3442 = vld [vmem:[%s5 + $0x180] sm:$0xff]
    %v3443 = vld [vmem:[%s5 + $0x188] sm:$0xff]
    %v3444 = vld [vmem:[%s5 + $0x190] sm:$0xff]
    %v3445 = vld [vmem:[%s5 + $0x198] sm:$0xff]
    %v3446 = vld [vmem:[%s5 + $0x1a0] sm:$0xff]
    %v3447 = vld [vmem:[%s5 + $0x1a8] sm:$0xff]
    %v3448 = vld [vmem:[%s5 + $0x1b0] sm:$0xff]
    %v3449 = vld [vmem:[%s5 + $0x1b8] sm:$0xff]
    %v3450 = vld [vmem:[%s5 + $0x1c0] sm:$0xff]
    %v3451 = vld [vmem:[%s5 + $0x1c8] sm:$0xff]
    %v3452 = vld [vmem:[%s5 + $0x1d0] sm:$0xff]
    %v3453 = vld [vmem:[%s5 + $0x1d8] sm:$0xff]
    %v3454 = vld [vmem:[%s5 + $0x1e0] sm:$0xff]
    %v3455 = vld [vmem:[%s5 + $0x1e8] sm:$0xff]
    %v3456 = vld [vmem:[%s5 + $0x1f0] sm:$0xff]
    %v3457 = vld [vmem:[%s5 + $0x1f8] sm:$0xff]
    %3458 = vmatprep.subr.mxu0 %v3395
    %3459 = vmatpush1.msra.mxu0 %v3394
    %3460 = vmatprep.subr.mxu0 %v3399
    %3461 = vmatpush1.msra.mxu0 %v3398
    %3462 = vmatprep.subr.mxu0 %v3403
    %3463 = vmatpush1.msra.mxu0 %v3402
    %3464 = vmatprep.subr.mxu0 %v3407
    %3465 = vmatpush1.msra.mxu0 %v3406
    %3466 = vmatprep.subr.mxu0 %v3411
    %3467 = vmatpush1.msra.mxu0 %v3410
    %3468 = vmatprep.subr.mxu0 %v3415
    %3469 = vmatpush1.msra.mxu0 %v3414
    %3470 = vmatprep.subr.mxu0 %v3419
    %3471 = vmatpush1.msra.mxu0 %v3418
    %3472 = vmatprep.subr.mxu0 %v3423
    %3473 = vmatpush1.msra.mxu0 %v3422
    %3474 = vmatprep.subr.mxu0 %v3427
    %3475 = vmatpush1.msra.mxu0 %v3426
    %3476 = vmatprep.subr.mxu0 %v3431
    %3477 = vmatpush1.msra.mxu0 %v3430
    %3478 = vmatprep.subr.mxu0 %v3435
    %3479 = vmatpush1.msra.mxu0 %v3434
    %3480 = vmatprep.subr.mxu0 %v3439
    %3481 = vmatpush1.msra.mxu0 %v3438
    %3482 = vmatprep.subr.mxu0 %v3443
    %3483 = vmatpush1.msra.mxu0 %v3442
    %3484 = vmatprep.subr.mxu0 %v3447
    %3485 = vmatpush1.msra.mxu0 %v3446
    %3486 = vmatprep.subr.mxu0 %v3451
    %3487 = vmatpush1.msra.mxu0 %v3450
    %3488 = vmatprep.subr.mxu0 %v3455
    %3489 = vmatpush1.msra.mxu0 %v3454
    %3490 = vmatprep.subr.mxu0 0.0
    %3491 = vmatpush1.msra.mxu0 0.0
    %3492 = vmatprep.subr.mxu0 0.0
    %3493 = vmatpush1.msra.mxu0 0.0
    %3494 = vmatprep.subr.mxu0 0.0
    %3495 = vmatpush1.msra.mxu0 0.0
    %3496 = vmatprep.subr.mxu0 0.0
    %3497 = vmatpush1.msra.mxu0 0.0
    %3498 = vmatprep.subr.mxu0 0.0
    %3499 = vmatpush1.msra.mxu0 0.0
    %3500 = vmatprep.subr.mxu0 0.0
    %3501 = vmatpush1.msra.mxu0 0.0
    %3502 = vmatprep.subr.mxu0 0.0
    %3503 = vmatpush1.msra.mxu0 0.0
    %3504 = vmatprep.subr.mxu0 0.0
    %3505 = vmatpush1.msra.mxu0 0.0
    %3506 = vmatprep.subr.mxu0 0.0
    %3507 = vmatpush1.msra.mxu0 0.0
    %3508 = vmatprep.subr.mxu0 0.0
    %3509 = vmatpush1.msra.mxu0 0.0
    %3510 = vmatprep.subr.mxu0 0.0
    %3511 = vmatpush1.msra.mxu0 0.0
    %3512 = vmatprep.subr.mxu0 0.0
    %3513 = vmatpush1.msra.mxu0 0.0
    %3514 = vmatprep.subr.mxu0 0.0
    %3515 = vmatpush1.msra.mxu0 0.0
    %3516 = vmatprep.subr.mxu0 0.0
    %3517 = vmatpush1.msra.mxu0 0.0
    %3518 = vmatprep.subr.mxu0 0.0
    %3519 = vmatpush1.msra.mxu0 0.0
    %3520 = vmatprep.subr.mxu0 0.0
    %3521 = vmatpush1.msra.mxu0 0.0
    %3522 = vmatprep.mubr.f32.mxu0 0.0
    %3523 = vmatmul.mubr.f32.gmra.mrb[0].mxu0 %v3388
    %v3524 = vpop.f32.mrb[0].mxu0
    %v3525 = vadd.f32 0.0, %v3524
    %v3526 = vpop.f32.mrb[0].mxu0
    %v3527 = vadd.f32 0.0, %v3526
    %3528 = vdwg.mxu0
    %3529 = vmatprep.subr.mxu0 %v3397
    %3530 = vmatpush1.msra.mxu0 %v3396
    %3531 = vmatprep.subr.mxu0 %v3401
    %3532 = vmatpush1.msra.mxu0 %v3400
    %3533 = vmatprep.subr.mxu0 %v3405
    %3534 = vmatpush1.msra.mxu0 %v3404
    %3535 = vmatprep.subr.mxu0 %v3409
    %3536 = vmatpush1.msra.mxu0 %v3408
    %3537 = vmatprep.subr.mxu0 %v3413
    %3538 = vmatpush1.msra.mxu0 %v3412
    %3539 = vmatprep.subr.mxu0 %v3417
    %3540 = vmatpush1.msra.mxu0 %v3416
    %3541 = vmatprep.subr.mxu0 %v3421
    %3542 = vmatpush1.msra.mxu0 %v3420
    %3543 = vmatprep.subr.mxu0 %v3425
    %3544 = vmatpush1.msra.mxu0 %v3424
    %3545 = vmatprep.subr.mxu0 %v3429
    %3546 = vmatpush1.msra.mxu0 %v3428
    %3547 = vmatprep.subr.mxu0 %v3433
    %3548 = vmatpush1.msra.mxu0 %v3432
    %3549 = vmatprep.subr.mxu0 %v3437
    %3550 = vmatpush1.msra.mxu0 %v3436
    %3551 = vmatprep.subr.mxu0 %v3441
    %3552 = vmatpush1.msra.mxu0 %v3440
    %3553 = vmatprep.subr.mxu0 %v3445
    %3554 = vmatpush1.msra.mxu0 %v3444
    %3555 = vmatprep.subr.mxu0 %v3449
    %3556 = vmatpush1.msra.mxu0 %v3448
    %3557 = vmatprep.subr.mxu0 %v3453
    %3558 = vmatpush1.msra.mxu0 %v3452
    %3559 = vmatprep.subr.mxu0 %v3457
    %3560 = vmatpush1.msra.mxu0 %v3456
    %3561 = vmatprep.subr.mxu0 0.0
    %3562 = vmatpush1.msra.mxu0 0.0
    %3563 = vmatprep.subr.mxu0 0.0
    %3564 = vmatpush1.msra.mxu0 0.0
    %3565 = vmatprep.subr.mxu0 0.0
    %3566 = vmatpush1.msra.mxu0 0.0
    %3567 = vmatprep.subr.mxu0 0.0
    %3568 = vmatpush1.msra.mxu0 0.0
    %3569 = vmatprep.subr.mxu0 0.0
    %3570 = vmatpush1.msra.mxu0 0.0
    %3571 = vmatprep.subr.mxu0 0.0
    %3572 = vmatpush1.msra.mxu0 0.0
    %3573 = vmatprep.subr.mxu0 0.0
    %3574 = vmatpush1.msra.mxu0 0.0
    %3575 = vmatprep.subr.mxu0 0.0
    %3576 = vmatpush1.msra.mxu0 0.0
    %3577 = vmatprep.subr.mxu0 0.0
    %3578 = vmatpush1.msra.mxu0 0.0
    %3579 = vmatprep.subr.mxu0 0.0
    %3580 = vmatpush1.msra.mxu0 0.0
    %3581 = vmatprep.subr.mxu0 0.0
    %3582 = vmatpush1.msra.mxu0 0.0
    %3583 = vmatprep.subr.mxu0 0.0
    %3584 = vmatpush1.msra.mxu0 0.0
    %3585 = vmatprep.subr.mxu0 0.0
    %3586 = vmatpush1.msra.mxu0 0.0
    %3587 = vmatprep.subr.mxu0 0.0
    %3588 = vmatpush1.msra.mxu0 0.0
    %3589 = vmatprep.subr.mxu0 0.0
    %3590 = vmatpush1.msra.mxu0 0.0
    %3591 = vmatprep.subr.mxu0 0.0
    %3592 = vmatpush1.msra.mxu0 0.0
    %3593 = vmatprep.mubr.f32.mxu0 0.0
    %3594 = vmatmul.mubr.f32.gmra.mrb[0].mxu0 %v3388
    %v3595 = vpop.f32.mrb[0].mxu0
    %v3596 = vadd.f32 0.0, %v3595
    %v3597 = vpop.f32.mrb[0].mxu0
    %v3598 = vadd.f32 0.0, %v3597
    %3599 = vdwg.mxu0
    %v3600 = vadd.f32 %v3390, %v3525
    %v3601 = vadd.f32 %v3391, %v3527
    %v3602 = vadd.f32 %v3392, %v3596
    %v3603 = vadd.f32 %v3393, %v3598
    %v3604 = vxor.u32 %v3600, 2147483648
    %v3605 = vxor.u32 %v3601, 2147483648
    %v3606 = vxor.u32 %v3602, 2147483648
    %v3607 = vmul.f32 %v3604, 1.442695
    %v3608 = vpow.pop %v3607
    %v3609 = vmul.f32 %v3605, 1.442695
    %v3610 = vpow.pop %v3609
    %v3611 = vmul.f32 %v3606, 1.442695
    %v3612 = vpow.pop %v3611
    %v3613 = vadd.f32 %v3608, 1.0
    %v3614 = vadd.f32 %v3610, 1.0
    %v3615 = vadd.f32 %v3612, 1.0
    %v3616 = vrcp.pop %v3613
    %v3617 = vmul.f32 1.0, %v3616
    %v3618 = vrcp.pop %v3614
    %v3619 = vmul.f32 1.0, %v3618
    %v3620 = vrcp.pop %v3615
    %v3621 = vmul.f32 1.0, %v3620
    %v3622 = vtanh.pop %v3603
    %v3623 = vmul.f32 %v3619, %v3386
    %v3624 = vmul.f32 %v3617, %v3622
    %v3625 = vadd.f32 %v3623, %v3624
    %v3626 = vtanh.pop %v3625
    %v3627 = vmul.f32 %v3621, %v3626
    %3628 = vst [vmem:[#allocation3 + $0x18] sm:$0xff] %v3627
    %v3629 = vld [vmem:[#allocation2 + $0x80] sm:$0xff]
    %v3630 = vld [vmem:[#allocation2 + $0x88] sm:$0xff]
    %v3631 = vld [vmem:[#allocation2 + $0x90] sm:$0xff]
    %v3632 = vld [vmem:[#allocation2 + $0x98] sm:$0xff]
    %v3633 = vld [vmem:[%s5] sm:$0xff]
    %v3634 = vld [vmem:[%s5 + $0x8] sm:$0xff]
    %v3635 = vld [vmem:[%s5 + $0x10] sm:$0xff]
    %v3636 = vld [vmem:[%s5 + $0x18] sm:$0xff]
    %v3637 = vld [vmem:[%s5 + $0x20] sm:$0xff]
    %v3638 = vld [vmem:[%s5 + $0x28] sm:$0xff]
    %v3639 = vld [vmem:[%s5 + $0x30] sm:$0xff]
    %v3640 = vld [vmem:[%s5 + $0x38] sm:$0xff]
    %v3641 = vld [vmem:[%s5 + $0x40] sm:$0xff]
    %v3642 = vld [vmem:[%s5 + $0x48] sm:$0xff]
    %v3643 = vld [vmem:[%s5 + $0x50] sm:$0xff]
    %v3644 = vld [vmem:[%s5 + $0x58] sm:$0xff]
    %v3645 = vld [vmem:[%s5 + $0x60] sm:$0xff]
    %v3646 = vld [vmem:[%s5 + $0x68] sm:$0xff]
    %v3647 = vld [vmem:[%s5 + $0x70] sm:$0xff]
    %v3648 = vld [vmem:[%s5 + $0x78] sm:$0xff]
    %v3649 = vld [vmem:[%s5 + $0x80] sm:$0xff]
    %v3650 = vld [vmem:[%s5 + $0x88] sm:$0xff]
    %v3651 = vld [vmem:[%s5 + $0x90] sm:$0xff]
    %v3652 = vld [vmem:[%s5 + $0x98] sm:$0xff]
    %v3653 = vld [vmem:[%s5 + $0xa0] sm:$0xff]
    %v3654 = vld [vmem:[%s5 + $0xa8] sm:$0xff]
    %v3655 = vld [vmem:[%s5 + $0xb0] sm:$0xff]
    %v3656 = vld [vmem:[%s5 + $0xb8] sm:$0xff]
    %v3657 = vld [vmem:[%s5 + $0xc0] sm:$0xff]
    %v3658 = vld [vmem:[%s5 + $0xc8] sm:$0xff]
    %v3659 = vld [vmem:[%s5 + $0xd0] sm:$0xff]
    %v3660 = vld [vmem:[%s5 + $0xd8] sm:$0xff]
    %v3661 = vld [vmem:[%s5 + $0xe0] sm:$0xff]
    %v3662 = vld [vmem:[%s5 + $0xe8] sm:$0xff]
    %v3663 = vld [vmem:[%s5 + $0xf0] sm:$0xff]
    %v3664 = vld [vmem:[%s5 + $0xf8] sm:$0xff]
    %v3665 = vld [vmem:[%s5 + $0x100] sm:$0xff]
    %v3666 = vld [vmem:[%s5 + $0x108] sm:$0xff]
    %v3667 = vld [vmem:[%s5 + $0x110] sm:$0xff]
    %v3668 = vld [vmem:[%s5 + $0x118] sm:$0xff]
    %v3669 = vld [vmem:[%s5 + $0x120] sm:$0xff]
    %v3670 = vld [vmem:[%s5 + $0x128] sm:$0xff]
    %v3671 = vld [vmem:[%s5 + $0x130] sm:$0xff]
    %v3672 = vld [vmem:[%s5 + $0x138] sm:$0xff]
    %v3673 = vld [vmem:[%s5 + $0x140] sm:$0xff]
    %v3674 = vld [vmem:[%s5 + $0x148] sm:$0xff]
    %v3675 = vld [vmem:[%s5 + $0x150] sm:$0xff]
    %v3676 = vld [vmem:[%s5 + $0x158] sm:$0xff]
    %v3677 = vld [vmem:[%s5 + $0x160] sm:$0xff]
    %v3678 = vld [vmem:[%s5 + $0x168] sm:$0xff]
    %v3679 = vld [vmem:[%s5 + $0x170] sm:$0xff]
    %v3680 = vld [vmem:[%s5 + $0x178] sm:$0xff]
    %v3681 = vld [vmem:[%s5 + $0x180] sm:$0xff]
    %v3682 = vld [vmem:[%s5 + $0x188] sm:$0xff]
    %v3683 = vld [vmem:[%s5 + $0x190] sm:$0xff]
    %v3684 = vld [vmem:[%s5 + $0x198] sm:$0xff]
    %v3685 = vld [vmem:[%s5 + $0x1a0] sm:$0xff]
    %v3686 = vld [vmem:[%s5 + $0x1a8] sm:$0xff]
    %v3687 = vld [vmem:[%s5 + $0x1b0] sm:$0xff]
    %v3688 = vld [vmem:[%s5 + $0x1b8] sm:$0xff]
    %v3689 = vld [vmem:[%s5 + $0x1c0] sm:$0xff]
    %v3690 = vld [vmem:[%s5 + $0x1c8] sm:$0xff]
    %v3691 = vld [vmem:[%s5 + $0x1d0] sm:$0xff]
    %v3692 = vld [vmem:[%s5 + $0x1d8] sm:$0xff]
    %v3693 = vld [vmem:[%s5 + $0x1e0] sm:$0xff]
    %v3694 = vld [vmem:[%s5 + $0x1e8] sm:$0xff]
    %v3695 = vld [vmem:[%s5 + $0x1f0] sm:$0xff]
    %v3696 = vld [vmem:[%s5 + $0x1f8] sm:$0xff]
    %3697 = vmatprep.subr.mxu0 %v3634
    %3698 = vmatpush1.msra.mxu0 %v3633
    %3699 = vmatprep.subr.mxu0 %v3638
    %3700 = vmatpush1.msra.mxu0 %v3637
    %3701 = vmatprep.subr.mxu0 %v3642
    %3702 = vmatpush1.msra.mxu0 %v3641
    %3703 = vmatprep.subr.mxu0 %v3646
    %3704 = vmatpush1.msra.mxu0 %v3645
    %3705 = vmatprep.subr.mxu0 %v3650
    %3706 = vmatpush1.msra.mxu0 %v3649
    %3707 = vmatprep.subr.mxu0 %v3654
    %3708 = vmatpush1.msra.mxu0 %v3653
    %3709 = vmatprep.subr.mxu0 %v3658
    %3710 = vmatpush1.msra.mxu0 %v3657
    %3711 = vmatprep.subr.mxu0 %v3662
    %3712 = vmatpush1.msra.mxu0 %v3661
    %3713 = vmatprep.subr.mxu0 %v3666
    %3714 = vmatpush1.msra.mxu0 %v3665
    %3715 = vmatprep.subr.mxu0 %v3670
    %3716 = vmatpush1.msra.mxu0 %v3669
    %3717 = vmatprep.subr.mxu0 %v3674
    %3718 = vmatpush1.msra.mxu0 %v3673
    %3719 = vmatprep.subr.mxu0 %v3678
    %3720 = vmatpush1.msra.mxu0 %v3677
    %3721 = vmatprep.subr.mxu0 %v3682
    %3722 = vmatpush1.msra.mxu0 %v3681
    %3723 = vmatprep.subr.mxu0 %v3686
    %3724 = vmatpush1.msra.mxu0 %v3685
    %3725 = vmatprep.subr.mxu0 %v3690
    %3726 = vmatpush1.msra.mxu0 %v3689
    %3727 = vmatprep.subr.mxu0 %v3694
    %3728 = vmatpush1.msra.mxu0 %v3693
    %3729 = vmatprep.subr.mxu0 0.0
    %3730 = vmatpush1.msra.mxu0 0.0
    %3731 = vmatprep.subr.mxu0 0.0
    %3732 = vmatpush1.msra.mxu0 0.0
    %3733 = vmatprep.subr.mxu0 0.0
    %3734 = vmatpush1.msra.mxu0 0.0
    %3735 = vmatprep.subr.mxu0 0.0
    %3736 = vmatpush1.msra.mxu0 0.0
    %3737 = vmatprep.subr.mxu0 0.0
    %3738 = vmatpush1.msra.mxu0 0.0
    %3739 = vmatprep.subr.mxu0 0.0
    %3740 = vmatpush1.msra.mxu0 0.0
    %3741 = vmatprep.subr.mxu0 0.0
    %3742 = vmatpush1.msra.mxu0 0.0
    %3743 = vmatprep.subr.mxu0 0.0
    %3744 = vmatpush1.msra.mxu0 0.0
    %3745 = vmatprep.subr.mxu0 0.0
    %3746 = vmatpush1.msra.mxu0 0.0
    %3747 = vmatprep.subr.mxu0 0.0
    %3748 = vmatpush1.msra.mxu0 0.0
    %3749 = vmatprep.subr.mxu0 0.0
    %3750 = vmatpush1.msra.mxu0 0.0
    %3751 = vmatprep.subr.mxu0 0.0
    %3752 = vmatpush1.msra.mxu0 0.0
    %3753 = vmatprep.subr.mxu0 0.0
    %3754 = vmatpush1.msra.mxu0 0.0
    %3755 = vmatprep.subr.mxu0 0.0
    %3756 = vmatpush1.msra.mxu0 0.0
    %3757 = vmatprep.subr.mxu0 0.0
    %3758 = vmatpush1.msra.mxu0 0.0
    %3759 = vmatprep.subr.mxu0 0.0
    %3760 = vmatpush1.msra.mxu0 0.0
    %3761 = vmatprep.mubr.f32.mxu0 0.0
    %3762 = vmatmul.mubr.f32.gmra.mrb[0].mxu0 %v3627
    %v3763 = vpop.f32.mrb[0].mxu0
    %v3764 = vadd.f32 0.0, %v3763
    %v3765 = vpop.f32.mrb[0].mxu0
    %v3766 = vadd.f32 0.0, %v3765
    %3767 = vdwg.mxu0
    %3768 = vmatprep.subr.mxu0 %v3636
    %3769 = vmatpush1.msra.mxu0 %v3635
    %3770 = vmatprep.subr.mxu0 %v3640
    %3771 = vmatpush1.msra.mxu0 %v3639
    %3772 = vmatprep.subr.mxu0 %v3644
    %3773 = vmatpush1.msra.mxu0 %v3643
    %3774 = vmatprep.subr.mxu0 %v3648
    %3775 = vmatpush1.msra.mxu0 %v3647
    %3776 = vmatprep.subr.mxu0 %v3652
    %3777 = vmatpush1.msra.mxu0 %v3651
    %3778 = vmatprep.subr.mxu0 %v3656
    %3779 = vmatpush1.msra.mxu0 %v3655
    %3780 = vmatprep.subr.mxu0 %v3660
    %3781 = vmatpush1.msra.mxu0 %v3659
    %3782 = vmatprep.subr.mxu0 %v3664
    %3783 = vmatpush1.msra.mxu0 %v3663
    %3784 = vmatprep.subr.mxu0 %v3668
    %3785 = vmatpush1.msra.mxu0 %v3667
    %3786 = vmatprep.subr.mxu0 %v3672
    %3787 = vmatpush1.msra.mxu0 %v3671
    %3788 = vmatprep.subr.mxu0 %v3676
    %3789 = vmatpush1.msra.mxu0 %v3675
    %3790 = vmatprep.subr.mxu0 %v3680
    %3791 = vmatpush1.msra.mxu0 %v3679
    %3792 = vmatprep.subr.mxu0 %v3684
    %3793 = vmatpush1.msra.mxu0 %v3683
    %3794 = vmatprep.subr.mxu0 %v3688
    %3795 = vmatpush1.msra.mxu0 %v3687
    %3796 = vmatprep.subr.mxu0 %v3692
    %3797 = vmatpush1.msra.mxu0 %v3691
    %3798 = vmatprep.subr.mxu0 %v3696
    %3799 = vmatpush1.msra.mxu0 %v3695
    %3800 = vmatprep.subr.mxu0 0.0
    %3801 = vmatpush1.msra.mxu0 0.0
    %3802 = vmatprep.subr.mxu0 0.0
    %3803 = vmatpush1.msra.mxu0 0.0
    %3804 = vmatprep.subr.mxu0 0.0
    %3805 = vmatpush1.msra.mxu0 0.0
    %3806 = vmatprep.subr.mxu0 0.0
    %3807 = vmatpush1.msra.mxu0 0.0
    %3808 = vmatprep.subr.mxu0 0.0
    %3809 = vmatpush1.msra.mxu0 0.0
    %3810 = vmatprep.subr.mxu0 0.0
    %3811 = vmatpush1.msra.mxu0 0.0
    %3812 = vmatprep.subr.mxu0 0.0
    %3813 = vmatpush1.msra.mxu0 0.0
    %3814 = vmatprep.subr.mxu0 0.0
    %3815 = vmatpush1.msra.mxu0 0.0
    %3816 = vmatprep.subr.mxu0 0.0
    %3817 = vmatpush1.msra.mxu0 0.0
    %3818 = vmatprep.subr.mxu0 0.0
    %3819 = vmatpush1.msra.mxu0 0.0
    %3820 = vmatprep.subr.mxu0 0.0
    %3821 = vmatpush1.msra.mxu0 0.0
    %3822 = vmatprep.subr.mxu0 0.0
    %3823 = vmatpush1.msra.mxu0 0.0
    %3824 = vmatprep.subr.mxu0 0.0
    %3825 = vmatpush1.msra.mxu0 0.0
    %3826 = vmatprep.subr.mxu0 0.0
    %3827 = vmatpush1.msra.mxu0 0.0
    %3828 = vmatprep.subr.mxu0 0.0
    %3829 = vmatpush1.msra.mxu0 0.0
    %3830 = vmatprep.subr.mxu0 0.0
    %3831 = vmatpush1.msra.mxu0 0.0
    %3832 = vmatprep.mubr.f32.mxu0 0.0
    %3833 = vmatmul.mubr.f32.gmra.mrb[0].mxu0 %v3627
    %v3834 = vpop.f32.mrb[0].mxu0
    %v3835 = vadd.f32 0.0, %v3834
    %v3836 = vpop.f32.mrb[0].mxu0
    %v3837 = vadd.f32 0.0, %v3836
    %3838 = vdwg.mxu0
    %v3839 = vadd.f32 %v3629, %v3764
    %v3840 = vadd.f32 %v3630, %v3766
    %v3841 = vadd.f32 %v3631, %v3835
    %v3842 = vadd.f32 %v3632, %v3837
    %v3843 = vxor.u32 %v3839, 2147483648
    %v3844 = vxor.u32 %v3840, 2147483648
    %v3845 = vxor.u32 %v3841, 2147483648
    %v3846 = vmul.f32 %v3843, 1.442695
    %v3847 = vpow.pop %v3846
    %v3848 = vmul.f32 %v3844, 1.442695
    %v3849 = vpow.pop %v3848
    %v3850 = vmul.f32 %v3845, 1.442695
    %v3851 = vpow.pop %v3850
    %v3852 = vadd.f32 %v3847, 1.0
    %v3853 = vadd.f32 %v3849, 1.0
    %v3854 = vadd.f32 %v3851, 1.0
    %v3855 = vrcp.pop %v3852
    %v3856 = vmul.f32 1.0, %v3855
    %v3857 = vrcp.pop %v3853
    %v3858 = vmul.f32 1.0, %v3857
    %v3859 = vrcp.pop %v3854
    %v3860 = vmul.f32 1.0, %v3859
    %v3861 = vtanh.pop %v3842
    %v3862 = vmul.f32 %v3858, %v3625
    %v3863 = vmul.f32 %v3856, %v3861
    %v3864 = vadd.f32 %v3862, %v3863
    %v3865 = vtanh.pop %v3864
    %v3866 = vmul.f32 %v3860, %v3865
    %3867 = vst [vmem:[#allocation3 + $0x20] sm:$0xff] %v3866
    %v3868 = vld [vmem:[#allocation2 + $0xa0] sm:$0xff]
    %v3869 = vld [vmem:[#allocation2 + $0xa8] sm:$0xff]
    %v3870 = vld [vmem:[#allocation2 + $0xb0] sm:$0xff]
    %v3871 = vld [vmem:[#allocation2 + $0xb8] sm:$0xff]
    %v3872 = vld [vmem:[%s5] sm:$0xff]
    %v3873 = vld [vmem:[%s5 + $0x8] sm:$0xff]
    %v3874 = vld [vmem:[%s5 + $0x10] sm:$0xff]
    %v3875 = vld [vmem:[%s5 + $0x18] sm:$0xff]
    %v3876 = vld [vmem:[%s5 + $0x20] sm:$0xff]
    %v3877 = vld [vmem:[%s5 + $0x28] sm:$0xff]
    %v3878 = vld [vmem:[%s5 + $0x30] sm:$0xff]
    %v3879 = vld [vmem:[%s5 + $0x38] sm:$0xff]
    %v3880 = vld [vmem:[%s5 + $0x40] sm:$0xff]
    %v3881 = vld [vmem:[%s5 + $0x48] sm:$0xff]
    %v3882 = vld [vmem:[%s5 + $0x50] sm:$0xff]
    %v3883 = vld [vmem:[%s5 + $0x58] sm:$0xff]
    %v3884 = vld [vmem:[%s5 + $0x60] sm:$0xff]
    %v3885 = vld [vmem:[%s5 + $0x68] sm:$0xff]
    %v3886 = vld [vmem:[%s5 + $0x70] sm:$0xff]
    %v3887 = vld [vmem:[%s5 + $0x78] sm:$0xff]
    %v3888 = vld [vmem:[%s5 + $0x80] sm:$0xff]
    %v3889 = vld [vmem:[%s5 + $0x88] sm:$0xff]
    %v3890 = vld [vmem:[%s5 + $0x90] sm:$0xff]
    %v3891 = vld [vmem:[%s5 + $0x98] sm:$0xff]
    %v3892 = vld [vmem:[%s5 + $0xa0] sm:$0xff]
    %v3893 = vld [vmem:[%s5 + $0xa8] sm:$0xff]
    %v3894 = vld [vmem:[%s5 + $0xb0] sm:$0xff]
    %v3895 = vld [vmem:[%s5 + $0xb8] sm:$0xff]
    %v3896 = vld [vmem:[%s5 + $0xc0] sm:$0xff]
    %v3897 = vld [vmem:[%s5 + $0xc8] sm:$0xff]
    %v3898 = vld [vmem:[%s5 + $0xd0] sm:$0xff]
    %v3899 = vld [vmem:[%s5 + $0xd8] sm:$0xff]
    %v3900 = vld [vmem:[%s5 + $0xe0] sm:$0xff]
    %v3901 = vld [vmem:[%s5 + $0xe8] sm:$0xff]
    %v3902 = vld [vmem:[%s5 + $0xf0] sm:$0xff]
    %v3903 = vld [vmem:[%s5 + $0xf8] sm:$0xff]
    %v3904 = vld [vmem:[%s5 + $0x100] sm:$0xff]
    %v3905 = vld [vmem:[%s5 + $0x108] sm:$0xff]
    %v3906 = vld [vmem:[%s5 + $0x110] sm:$0xff]
    %v3907 = vld [vmem:[%s5 + $0x118] sm:$0xff]
    %v3908 = vld [vmem:[%s5 + $0x120] sm:$0xff]
    %v3909 = vld [vmem:[%s5 + $0x128] sm:$0xff]
    %v3910 = vld [vmem:[%s5 + $0x130] sm:$0xff]
    %v3911 = vld [vmem:[%s5 + $0x138] sm:$0xff]
    %v3912 = vld [vmem:[%s5 + $0x140] sm:$0xff]
    %v3913 = vld [vmem:[%s5 + $0x148] sm:$0xff]
    %v3914 = vld [vmem:[%s5 + $0x150] sm:$0xff]
    %v3915 = vld [vmem:[%s5 + $0x158] sm:$0xff]
    %v3916 = vld [vmem:[%s5 + $0x160] sm:$0xff]
    %v3917 = vld [vmem:[%s5 + $0x168] sm:$0xff]
    %v3918 = vld [vmem:[%s5 + $0x170] sm:$0xff]
    %v3919 = vld [vmem:[%s5 + $0x178] sm:$0xff]
    %v3920 = vld [vmem:[%s5 + $0x180] sm:$0xff]
    %v3921 = vld [vmem:[%s5 + $0x188] sm:$0xff]
    %v3922 = vld [vmem:[%s5 + $0x190] sm:$0xff]
    %v3923 = vld [vmem:[%s5 + $0x198] sm:$0xff]
    %v3924 = vld [vmem:[%s5 + $0x1a0] sm:$0xff]
    %v3925 = vld [vmem:[%s5 + $0x1a8] sm:$0xff]
    %v3926 = vld [vmem:[%s5 + $0x1b0] sm:$0xff]
    %v3927 = vld [vmem:[%s5 + $0x1b8] sm:$0xff]
    %v3928 = vld [vmem:[%s5 + $0x1c0] sm:$0xff]
    %v3929 = vld [vmem:[%s5 + $0x1c8] sm:$0xff]
    %v3930 = vld [vmem:[%s5 + $0x1d0] sm:$0xff]
    %v3931 = vld [vmem:[%s5 + $0x1d8] sm:$0xff]
    %v3932 = vld [vmem:[%s5 + $0x1e0] sm:$0xff]
    %v3933 = vld [vmem:[%s5 + $0x1e8] sm:$0xff]
    %v3934 = vld [vmem:[%s5 + $0x1f0] sm:$0xff]
    %v3935 = vld [vmem:[%s5 + $0x1f8] sm:$0xff]
    %3936 = vmatprep.subr.mxu0 %v3873
    %3937 = vmatpush1.msra.mxu0 %v3872
    %3938 = vmatprep.subr.mxu0 %v3877
    %3939 = vmatpush1.msra.mxu0 %v3876
    %3940 = vmatprep.subr.mxu0 %v3881
    %3941 = vmatpush1.msra.mxu0 %v3880
    %3942 = vmatprep.subr.mxu0 %v3885
    %3943 = vmatpush1.msra.mxu0 %v3884
    %3944 = vmatprep.subr.mxu0 %v3889
    %3945 = vmatpush1.msra.mxu0 %v3888
    %3946 = vmatprep.subr.mxu0 %v3893
    %3947 = vmatpush1.msra.mxu0 %v3892
    %3948 = vmatprep.subr.mxu0 %v3897
    %3949 = vmatpush1.msra.mxu0 %v3896
    %3950 = vmatprep.subr.mxu0 %v3901
    %3951 = vmatpush1.msra.mxu0 %v3900
    %3952 = vmatprep.subr.mxu0 %v3905
    %3953 = vmatpush1.msra.mxu0 %v3904
    %3954 = vmatprep.subr.mxu0 %v3909
    %3955 = vmatpush1.msra.mxu0 %v3908
    %3956 = vmatprep.subr.mxu0 %v3913
    %3957 = vmatpush1.msra.mxu0 %v3912
    %3958 = vmatprep.subr.mxu0 %v3917
    %3959 = vmatpush1.msra.mxu0 %v3916
    %3960 = vmatprep.subr.mxu0 %v3921
    %3961 = vmatpush1.msra.mxu0 %v3920
    %3962 = vmatprep.subr.mxu0 %v3925
    %3963 = vmatpush1.msra.mxu0 %v3924
    %3964 = vmatprep.subr.mxu0 %v3929
    %3965 = vmatpush1.msra.mxu0 %v3928
    %3966 = vmatprep.subr.mxu0 %v3933
    %3967 = vmatpush1.msra.mxu0 %v3932
    %3968 = vmatprep.subr.mxu0 0.0
    %3969 = vmatpush1.msra.mxu0 0.0
    %3970 = vmatprep.subr.mxu0 0.0
    %3971 = vmatpush1.msra.mxu0 0.0
    %3972 = vmatprep.subr.mxu0 0.0
    %3973 = vmatpush1.msra.mxu0 0.0
    %3974 = vmatprep.subr.mxu0 0.0
    %3975 = vmatpush1.msra.mxu0 0.0
    %3976 = vmatprep.subr.mxu0 0.0
    %3977 = vmatpush1.msra.mxu0 0.0
    %3978 = vmatprep.subr.mxu0 0.0
    %3979 = vmatpush1.msra.mxu0 0.0
    %3980 = vmatprep.subr.mxu0 0.0
    %3981 = vmatpush1.msra.mxu0 0.0
    %3982 = vmatprep.subr.mxu0 0.0
    %3983 = vmatpush1.msra.mxu0 0.0
    %3984 = vmatprep.subr.mxu0 0.0
    %3985 = vmatpush1.msra.mxu0 0.0
    %3986 = vmatprep.subr.mxu0 0.0
    %3987 = vmatpush1.msra.mxu0 0.0
    %3988 = vmatprep.subr.mxu0 0.0
    %3989 = vmatpush1.msra.mxu0 0.0
    %3990 = vmatprep.subr.mxu0 0.0
    %3991 = vmatpush1.msra.mxu0 0.0
    %3992 = vmatprep.subr.mxu0 0.0
    %3993 = vmatpush1.msra.mxu0 0.0
    %3994 = vmatprep.subr.mxu0 0.0
    %3995 = vmatpush1.msra.mxu0 0.0
    %3996 = vmatprep.subr.mxu0 0.0
    %3997 = vmatpush1.msra.mxu0 0.0
    %3998 = vmatprep.subr.mxu0 0.0
    %3999 = vmatpush1.msra.mxu0 0.0
    %4000 = vmatprep.mubr.f32.mxu0 0.0
    %4001 = vmatmul.mubr.f32.gmra.mrb[0].mxu0 %v3866
    %v4002 = vpop.f32.mrb[0].mxu0
    %v4003 = vadd.f32 0.0, %v4002
    %v4004 = vpop.f32.mrb[0].mxu0
    %v4005 = vadd.f32 0.0, %v4004
    %4006 = vdwg.mxu0
    %4007 = vmatprep.subr.mxu0 %v3875
    %4008 = vmatpush1.msra.mxu0 %v3874
    %4009 = vmatprep.subr.mxu0 %v3879
    %4010 = vmatpush1.msra.mxu0 %v3878
    %4011 = vmatprep.subr.mxu0 %v3883
    %4012 = vmatpush1.msra.mxu0 %v3882
    %4013 = vmatprep.subr.mxu0 %v3887
    %4014 = vmatpush1.msra.mxu0 %v3886
    %4015 = vmatprep.subr.mxu0 %v3891
    %4016 = vmatpush1.msra.mxu0 %v3890
    %4017 = vmatprep.subr.mxu0 %v3895
    %4018 = vmatpush1.msra.mxu0 %v3894
    %4019 = vmatprep.subr.mxu0 %v3899
    %4020 = vmatpush1.msra.mxu0 %v3898
    %4021 = vmatprep.subr.mxu0 %v3903
    %4022 = vmatpush1.msra.mxu0 %v3902
    %4023 = vmatprep.subr.mxu0 %v3907
    %4024 = vmatpush1.msra.mxu0 %v3906
    %4025 = vmatprep.subr.mxu0 %v3911
    %4026 = vmatpush1.msra.mxu0 %v3910
    %4027 = vmatprep.subr.mxu0 %v3915
    %4028 = vmatpush1.msra.mxu0 %v3914
    %4029 = vmatprep.subr.mxu0 %v3919
    %4030 = vmatpush1.msra.mxu0 %v3918
    %4031 = vmatprep.subr.mxu0 %v3923
    %4032 = vmatpush1.msra.mxu0 %v3922
    %4033 = vmatprep.subr.mxu0 %v3927
    %4034 = vmatpush1.msra.mxu0 %v3926
    %4035 = vmatprep.subr.mxu0 %v3931
    %4036 = vmatpush1.msra.mxu0 %v3930
    %4037 = vmatprep.subr.mxu0 %v3935
    %4038 = vmatpush1.msra.mxu0 %v3934
    %4039 = vmatprep.subr.mxu0 0.0
    %4040 = vmatpush1.msra.mxu0 0.0
    %4041 = vmatprep.subr.mxu0 0.0
    %4042 = vmatpush1.msra.mxu0 0.0
    %4043 = vmatprep.subr.mxu0 0.0
    %4044 = vmatpush1.msra.mxu0 0.0
    %4045 = vmatprep.subr.mxu0 0.0
    %4046 = vmatpush1.msra.mxu0 0.0
    %4047 = vmatprep.subr.mxu0 0.0
    %4048 = vmatpush1.msra.mxu0 0.0
    %4049 = vmatprep.subr.mxu0 0.0
    %4050 = vmatpush1.msra.mxu0 0.0
    %4051 = vmatprep.subr.mxu0 0.0
    %4052 = vmatpush1.msra.mxu0 0.0
    %4053 = vmatprep.subr.mxu0 0.0
    %4054 = vmatpush1.msra.mxu0 0.0
    %4055 = vmatprep.subr.mxu0 0.0
    %4056 = vmatpush1.msra.mxu0 0.0
    %4057 = vmatprep.subr.mxu0 0.0
    %4058 = vmatpush1.msra.mxu0 0.0
    %4059 = vmatprep.subr.mxu0 0.0
    %4060 = vmatpush1.msra.mxu0 0.0
    %4061 = vmatprep.subr.mxu0 0.0
    %4062 = vmatpush1.msra.mxu0 0.0
    %4063 = vmatprep.subr.mxu0 0.0
    %4064 = vmatpush1.msra.mxu0 0.0
    %4065 = vmatprep.subr.mxu0 0.0
    %4066 = vmatpush1.msra.mxu0 0.0
    %4067 = vmatprep.subr.mxu0 0.0
    %4068 = vmatpush1.msra.mxu0 0.0
    %4069 = vmatprep.subr.mxu0 0.0
    %4070 = vmatpush1.msra.mxu0 0.0
    %4071 = vmatprep.mubr.f32.mxu0 0.0
    %4072 = vmatmul.mubr.f32.gmra.mrb[0].mxu0 %v3866
    %v4073 = vpop.f32.mrb[0].mxu0
    %v4074 = vadd.f32 0.0, %v4073
    %v4075 = vpop.f32.mrb[0].mxu0
    %v4076 = vadd.f32 0.0, %v4075
    %4077 = vdwg.mxu0
    %v4078 = vadd.f32 %v3868, %v4003
    %v4079 = vadd.f32 %v3869, %v4005
    %v4080 = vadd.f32 %v3870, %v4074
    %v4081 = vadd.f32 %v3871, %v4076
    %v4082 = vxor.u32 %v4078, 2147483648
    %v4083 = vxor.u32 %v4079, 2147483648
    %v4084 = vxor.u32 %v4080, 2147483648
    %v4085 = vmul.f32 %v4082, 1.442695
    %v4086 = vpow.pop %v4085
    %v4087 = vmul.f32 %v4083, 1.442695
    %v4088 = vpow.pop %v4087
    %v4089 = vmul.f32 %v4084, 1.442695
    %v4090 = vpow.pop %v4089
    %v4091 = vadd.f32 %v4086, 1.0
    %v4092 = vadd.f32 %v4088, 1.0
    %v4093 = vadd.f32 %v4090, 1.0
    %v4094 = vrcp.pop %v4091
    %v4095 = vmul.f32 1.0, %v4094
    %v4096 = vrcp.pop %v4092
    %v4097 = vmul.f32 1.0, %v4096
    %v4098 = vrcp.pop %v4093
    %v4099 = vmul.f32 1.0, %v4098
    %v4100 = vtanh.pop %v4081
    %v4101 = vmul.f32 %v4097, %v3864
    %v4102 = vmul.f32 %v4095, %v4100
    %v4103 = vadd.f32 %v4101, %v4102
    %v4104 = vtanh.pop %v4103
    %v4105 = vmul.f32 %v4099, %v4104
    %4106 = vst [vmem:[#allocation3 + $0x28] sm:$0xff] %v4105
    %v4107 = vld [vmem:[#allocation2 + $0xc0] sm:$0xff]
    %v4108 = vld [vmem:[#allocation2 + $0xc8] sm:$0xff]
    %v4109 = vld [vmem:[#allocation2 + $0xd0] sm:$0xff]
    %v4110 = vld [vmem:[#allocation2 + $0xd8] sm:$0xff]
    %v4111 = vld [vmem:[%s5] sm:$0xff]
    %v4112 = vld [vmem:[%s5 + $0x8] sm:$0xff]
    %v4113 = vld [vmem:[%s5 + $0x10] sm:$0xff]
    %v4114 = vld [vmem:[%s5 + $0x18] sm:$0xff]
    %v4115 = vld [vmem:[%s5 + $0x20] sm:$0xff]
    %v4116 = vld [vmem:[%s5 + $0x28] sm:$0xff]
    %v4117 = vld [vmem:[%s5 + $0x30] sm:$0xff]
    %v4118 = vld [vmem:[%s5 + $0x38] sm:$0xff]
    %v4119 = vld [vmem:[%s5 + $0x40] sm:$0xff]
    %v4120 = vld [vmem:[%s5 + $0x48] sm:$0xff]
    %v4121 = vld [vmem:[%s5 + $0x50] sm:$0xff]
    %v4122 = vld [vmem:[%s5 + $0x58] sm:$0xff]
    %v4123 = vld [vmem:[%s5 + $0x60] sm:$0xff]
    %v4124 = vld [vmem:[%s5 + $0x68] sm:$0xff]
    %v4125 = vld [vmem:[%s5 + $0x70] sm:$0xff]
    %v4126 = vld [vmem:[%s5 + $0x78] sm:$0xff]
    %v4127 = vld [vmem:[%s5 + $0x80] sm:$0xff]
    %v4128 = vld [vmem:[%s5 + $0x88] sm:$0xff]
    %v4129 = vld [vmem:[%s5 + $0x90] sm:$0xff]
    %v4130 = vld [vmem:[%s5 + $0x98] sm:$0xff]
    %v4131 = vld [vmem:[%s5 + $0xa0] sm:$0xff]
    %v4132 = vld [vmem:[%s5 + $0xa8] sm:$0xff]
    %v4133 = vld [vmem:[%s5 + $0xb0] sm:$0xff]
    %v4134 = vld [vmem:[%s5 + $0xb8] sm:$0xff]
    %v4135 = vld [vmem:[%s5 + $0xc0] sm:$0xff]
    %v4136 = vld [vmem:[%s5 + $0xc8] sm:$0xff]
    %v4137 = vld [vmem:[%s5 + $0xd0] sm:$0xff]
    %v4138 = vld [vmem:[%s5 + $0xd8] sm:$0xff]
    %v4139 = vld [vmem:[%s5 + $0xe0] sm:$0xff]
    %v4140 = vld [vmem:[%s5 + $0xe8] sm:$0xff]
    %v4141 = vld [vmem:[%s5 + $0xf0] sm:$0xff]
    %v4142 = vld [vmem:[%s5 + $0xf8] sm:$0xff]
    %v4143 = vld [vmem:[%s5 + $0x100] sm:$0xff]
    %v4144 = vld [vmem:[%s5 + $0x108] sm:$0xff]
    %v4145 = vld [vmem:[%s5 + $0x110] sm:$0xff]
    %v4146 = vld [vmem:[%s5 + $0x118] sm:$0xff]
    %v4147 = vld [vmem:[%s5 + $0x120] sm:$0xff]
    %v4148 = vld [vmem:[%s5 + $0x128] sm:$0xff]
    %v4149 = vld [vmem:[%s5 + $0x130] sm:$0xff]
    %v4150 = vld [vmem:[%s5 + $0x138] sm:$0xff]
    %v4151 = vld [vmem:[%s5 + $0x140] sm:$0xff]
    %v4152 = vld [vmem:[%s5 + $0x148] sm:$0xff]
    %v4153 = vld [vmem:[%s5 + $0x150] sm:$0xff]
    %v4154 = vld [vmem:[%s5 + $0x158] sm:$0xff]
    %v4155 = vld [vmem:[%s5 + $0x160] sm:$0xff]
    %v4156 = vld [vmem:[%s5 + $0x168] sm:$0xff]
    %v4157 = vld [vmem:[%s5 + $0x170] sm:$0xff]
    %v4158 = vld [vmem:[%s5 + $0x178] sm:$0xff]
    %v4159 = vld [vmem:[%s5 + $0x180] sm:$0xff]
    %v4160 = vld [vmem:[%s5 + $0x188] sm:$0xff]
    %v4161 = vld [vmem:[%s5 + $0x190] sm:$0xff]
    %v4162 = vld [vmem:[%s5 + $0x198] sm:$0xff]
    %v4163 = vld [vmem:[%s5 + $0x1a0] sm:$0xff]
    %v4164 = vld [vmem:[%s5 + $0x1a8] sm:$0xff]
    %v4165 = vld [vmem:[%s5 + $0x1b0] sm:$0xff]
    %v4166 = vld [vmem:[%s5 + $0x1b8] sm:$0xff]
    %v4167 = vld [vmem:[%s5 + $0x1c0] sm:$0xff]
    %v4168 = vld [vmem:[%s5 + $0x1c8] sm:$0xff]
    %v4169 = vld [vmem:[%s5 + $0x1d0] sm:$0xff]
    %v4170 = vld [vmem:[%s5 + $0x1d8] sm:$0xff]
    %v4171 = vld [vmem:[%s5 + $0x1e0] sm:$0xff]
    %v4172 = vld [vmem:[%s5 + $0x1e8] sm:$0xff]
    %v4173 = vld [vmem:[%s5 + $0x1f0] sm:$0xff]
    %v4174 = vld [vmem:[%s5 + $0x1f8] sm:$0xff]
    %4175 = vmatprep.subr.mxu0 %v4112
    %4176 = vmatpush1.msra.mxu0 %v4111
    %4177 = vmatprep.subr.mxu0 %v4116
    %4178 = vmatpush1.msra.mxu0 %v4115
    %4179 = vmatprep.subr.mxu0 %v4120
    %4180 = vmatpush1.msra.mxu0 %v4119
    %4181 = vmatprep.subr.mxu0 %v4124
    %4182 = vmatpush1.msra.mxu0 %v4123
    %4183 = vmatprep.subr.mxu0 %v4128
    %4184 = vmatpush1.msra.mxu0 %v4127
    %4185 = vmatprep.subr.mxu0 %v4132
    %4186 = vmatpush1.msra.mxu0 %v4131
    %4187 = vmatprep.subr.mxu0 %v4136
    %4188 = vmatpush1.msra.mxu0 %v4135
    %4189 = vmatprep.subr.mxu0 %v4140
    %4190 = vmatpush1.msra.mxu0 %v4139
    %4191 = vmatprep.subr.mxu0 %v4144
    %4192 = vmatpush1.msra.mxu0 %v4143
    %4193 = vmatprep.subr.mxu0 %v4148
    %4194 = vmatpush1.msra.mxu0 %v4147
    %4195 = vmatprep.subr.mxu0 %v4152
    %4196 = vmatpush1.msra.mxu0 %v4151
    %4197 = vmatprep.subr.mxu0 %v4156
    %4198 = vmatpush1.msra.mxu0 %v4155
    %4199 = vmatprep.subr.mxu0 %v4160
    %4200 = vmatpush1.msra.mxu0 %v4159
    %4201 = vmatprep.subr.mxu0 %v4164
    %4202 = vmatpush1.msra.mxu0 %v4163
    %4203 = vmatprep.subr.mxu0 %v4168
    %4204 = vmatpush1.msra.mxu0 %v4167
    %4205 = vmatprep.subr.mxu0 %v4172
    %4206 = vmatpush1.msra.mxu0 %v4171
    %4207 = vmatprep.subr.mxu0 0.0
    %4208 = vmatpush1.msra.mxu0 0.0
    %4209 = vmatprep.subr.mxu0 0.0
    %4210 = vmatpush1.msra.mxu0 0.0
    %4211 = vmatprep.subr.mxu0 0.0
    %4212 = vmatpush1.msra.mxu0 0.0
    %4213 = vmatprep.subr.mxu0 0.0
    %4214 = vmatpush1.msra.mxu0 0.0
    %4215 = vmatprep.subr.mxu0 0.0
    %4216 = vmatpush1.msra.mxu0 0.0
    %4217 = vmatprep.subr.mxu0 0.0
    %4218 = vmatpush1.msra.mxu0 0.0
    %4219 = vmatprep.subr.mxu0 0.0
    %4220 = vmatpush1.msra.mxu0 0.0
    %4221 = vmatprep.subr.mxu0 0.0
    %4222 = vmatpush1.msra.mxu0 0.0
    %4223 = vmatprep.subr.mxu0 0.0
    %4224 = vmatpush1.msra.mxu0 0.0
    %4225 = vmatprep.subr.mxu0 0.0
    %4226 = vmatpush1.msra.mxu0 0.0
    %4227 = vmatprep.subr.mxu0 0.0
    %4228 = vmatpush1.msra.mxu0 0.0
    %4229 = vmatprep.subr.mxu0 0.0
    %4230 = vmatpush1.msra.mxu0 0.0
    %4231 = vmatprep.subr.mxu0 0.0
    %4232 = vmatpush1.msra.mxu0 0.0
    %4233 = vmatprep.subr.mxu0 0.0
    %4234 = vmatpush1.msra.mxu0 0.0
    %4235 = vmatprep.subr.mxu0 0.0
    %4236 = vmatpush1.msra.mxu0 0.0
    %4237 = vmatprep.subr.mxu0 0.0
    %4238 = vmatpush1.msra.mxu0 0.0
    %4239 = vmatprep.mubr.f32.mxu0 0.0
    %4240 = vmatmul.mubr.f32.gmra.mrb[0].mxu0 %v4105
    %v4241 = vpop.f32.mrb[0].mxu0
    %v4242 = vadd.f32 0.0, %v4241
    %v4243 = vpop.f32.mrb[0].mxu0
    %v4244 = vadd.f32 0.0, %v4243
    %4245 = vdwg.mxu0
    %4246 = vmatprep.subr.mxu0 %v4114
    %4247 = vmatpush1.msra.mxu0 %v4113
    %4248 = vmatprep.subr.mxu0 %v4118
    %4249 = vmatpush1.msra.mxu0 %v4117
    %4250 = vmatprep.subr.mxu0 %v4122
    %4251 = vmatpush1.msra.mxu0 %v4121
    %4252 = vmatprep.subr.mxu0 %v4126
    %4253 = vmatpush1.msra.mxu0 %v4125
    %4254 = vmatprep.subr.mxu0 %v4130
    %4255 = vmatpush1.msra.mxu0 %v4129
    %4256 = vmatprep.subr.mxu0 %v4134
    %4257 = vmatpush1.msra.mxu0 %v4133
    %4258 = vmatprep.subr.mxu0 %v4138
    %4259 = vmatpush1.msra.mxu0 %v4137
    %4260 = vmatprep.subr.mxu0 %v4142
    %4261 = vmatpush1.msra.mxu0 %v4141
    %4262 = vmatprep.subr.mxu0 %v4146
    %4263 = vmatpush1.msra.mxu0 %v4145
    %4264 = vmatprep.subr.mxu0 %v4150
    %4265 = vmatpush1.msra.mxu0 %v4149
    %4266 = vmatprep.subr.mxu0 %v4154
    %4267 = vmatpush1.msra.mxu0 %v4153
    %4268 = vmatprep.subr.mxu0 %v4158
    %4269 = vmatpush1.msra.mxu0 %v4157
    %4270 = vmatprep.subr.mxu0 %v4162
    %4271 = vmatpush1.msra.mxu0 %v4161
    %4272 = vmatprep.subr.mxu0 %v4166
    %4273 = vmatpush1.msra.mxu0 %v4165
    %4274 = vmatprep.subr.mxu0 %v4170
    %4275 = vmatpush1.msra.mxu0 %v4169
    %4276 = vmatprep.subr.mxu0 %v4174
    %4277 = vmatpush1.msra.mxu0 %v4173
    %4278 = vmatprep.subr.mxu0 0.0
    %4279 = vmatpush1.msra.mxu0 0.0
    %4280 = vmatprep.subr.mxu0 0.0
    %4281 = vmatpush1.msra.mxu0 0.0
    %4282 = vmatprep.subr.mxu0 0.0
    %4283 = vmatpush1.msra.mxu0 0.0
    %4284 = vmatprep.subr.mxu0 0.0
    %4285 = vmatpush1.msra.mxu0 0.0
    %4286 = vmatprep.subr.mxu0 0.0
    %4287 = vmatpush1.msra.mxu0 0.0
    %4288 = vmatprep.subr.mxu0 0.0
    %4289 = vmatpush1.msra.mxu0 0.0
    %4290 = vmatprep.subr.mxu0 0.0
    %4291 = vmatpush1.msra.mxu0 0.0
    %4292 = vmatprep.subr.mxu0 0.0
    %4293 = vmatpush1.msra.mxu0 0.0
    %4294 = vmatprep.subr.mxu0 0.0
    %4295 = vmatpush1.msra.mxu0 0.0
    %4296 = vmatprep.subr.mxu0 0.0
    %4297 = vmatpush1.msra.mxu0 0.0
    %4298 = vmatprep.subr.mxu0 0.0
    %4299 = vmatpush1.msra.mxu0 0.0
    %4300 = vmatprep.subr.mxu0 0.0
    %4301 = vmatpush1.msra.mxu0 0.0
    %4302 = vmatprep.subr.mxu0 0.0
    %4303 = vmatpush1.msra.mxu0 0.0
    %4304 = vmatprep.subr.mxu0 0.0
    %4305 = vmatpush1.msra.mxu0 0.0
    %4306 = vmatprep.subr.mxu0 0.0
    %4307 = vmatpush1.msra.mxu0 0.0
    %4308 = vmatprep.subr.mxu0 0.0
    %4309 = vmatpush1.msra.mxu0 0.0
    %4310 = vmatprep.mubr.f32.mxu0 0.0
    %4311 = vmatmul.mubr.f32.gmra.mrb[0].mxu0 %v4105
    %v4312 = vpop.f32.mrb[0].mxu0
    %v4313 = vadd.f32 0.0, %v4312
    %v4314 = vpop.f32.mrb[0].mxu0
    %v4315 = vadd.f32 0.0, %v4314
    %4316 = vdwg.mxu0
    %v4317 = vadd.f32 %v4107, %v4242
    %v4318 = vadd.f32 %v4108, %v4244
    %v4319 = vadd.f32 %v4109, %v4313
    %v4320 = vadd.f32 %v4110, %v4315
    %v4321 = vxor.u32 %v4317, 2147483648
    %v4322 = vxor.u32 %v4318, 2147483648
    %v4323 = vxor.u32 %v4319, 2147483648
    %v4324 = vmul.f32 %v4321, 1.442695
    %v4325 = vpow.pop %v4324
    %v4326 = vmul.f32 %v4322, 1.442695
    %v4327 = vpow.pop %v4326
    %v4328 = vmul.f32 %v4323, 1.442695
    %v4329 = vpow.pop %v4328
    %v4330 = vadd.f32 %v4325, 1.0
    %v4331 = vadd.f32 %v4327, 1.0
    %v4332 = vadd.f32 %v4329, 1.0
    %v4333 = vrcp.pop %v4330
    %v4334 = vmul.f32 1.0, %v4333
    %v4335 = vrcp.pop %v4331
    %v4336 = vmul.f32 1.0, %v4335
    %v4337 = vrcp.pop %v4332
    %v4338 = vmul.f32 1.0, %v4337
    %v4339 = vtanh.pop %v4320
    %v4340 = vmul.f32 %v4336, %v4103
    %v4341 = vmul.f32 %v4334, %v4339
    %v4342 = vadd.f32 %v4340, %v4341
    %v4343 = vtanh.pop %v4342
    %v4344 = vmul.f32 %v4338, %v4343
    %4345 = vst [vmem:[#allocation3 + $0x30] sm:$0xff] %v4344
    %v4346 = vld [vmem:[#allocation2 + $0xe0] sm:$0xff]
    %v4347 = vld [vmem:[#allocation2 + $0xe8] sm:$0xff]
    %v4348 = vld [vmem:[#allocation2 + $0xf0] sm:$0xff]
    %v4349 = vld [vmem:[#allocation2 + $0xf8] sm:$0xff]
    %v4350 = vld [vmem:[%s5] sm:$0xff]
    %v4351 = vld [vmem:[%s5 + $0x8] sm:$0xff]
    %v4352 = vld [vmem:[%s5 + $0x10] sm:$0xff]
    %v4353 = vld [vmem:[%s5 + $0x18] sm:$0xff]
    %v4354 = vld [vmem:[%s5 + $0x20] sm:$0xff]
    %v4355 = vld [vmem:[%s5 + $0x28] sm:$0xff]
    %v4356 = vld [vmem:[%s5 + $0x30] sm:$0xff]
    %v4357 = vld [vmem:[%s5 + $0x38] sm:$0xff]
    %v4358 = vld [vmem:[%s5 + $0x40] sm:$0xff]
    %v4359 = vld [vmem:[%s5 + $0x48] sm:$0xff]
    %v4360 = vld [vmem:[%s5 + $0x50] sm:$0xff]
    %v4361 = vld [vmem:[%s5 + $0x58] sm:$0xff]
    %v4362 = vld [vmem:[%s5 + $0x60] sm:$0xff]
    %v4363 = vld [vmem:[%s5 + $0x68] sm:$0xff]
    %v4364 = vld [vmem:[%s5 + $0x70] sm:$0xff]
    %v4365 = vld [vmem:[%s5 + $0x78] sm:$0xff]
    %v4366 = vld [vmem:[%s5 + $0x80] sm:$0xff]
    %v4367 = vld [vmem:[%s5 + $0x88] sm:$0xff]
    %v4368 = vld [vmem:[%s5 + $0x90] sm:$0xff]
    %v4369 = vld [vmem:[%s5 + $0x98] sm:$0xff]
    %v4370 = vld [vmem:[%s5 + $0xa0] sm:$0xff]
    %v4371 = vld [vmem:[%s5 + $0xa8] sm:$0xff]
    %v4372 = vld [vmem:[%s5 + $0xb0] sm:$0xff]
    %v4373 = vld [vmem:[%s5 + $0xb8] sm:$0xff]
    %v4374 = vld [vmem:[%s5 + $0xc0] sm:$0xff]
    %v4375 = vld [vmem:[%s5 + $0xc8] sm:$0xff]
    %v4376 = vld [vmem:[%s5 + $0xd0] sm:$0xff]
    %v4377 = vld [vmem:[%s5 + $0xd8] sm:$0xff]
    %v4378 = vld [vmem:[%s5 + $0xe0] sm:$0xff]
    %v4379 = vld [vmem:[%s5 + $0xe8] sm:$0xff]
    %v4380 = vld [vmem:[%s5 + $0xf0] sm:$0xff]
    %v4381 = vld [vmem:[%s5 + $0xf8] sm:$0xff]
    %v4382 = vld [vmem:[%s5 + $0x100] sm:$0xff]
    %v4383 = vld [vmem:[%s5 + $0x108] sm:$0xff]
    %v4384 = vld [vmem:[%s5 + $0x110] sm:$0xff]
    %v4385 = vld [vmem:[%s5 + $0x118] sm:$0xff]
    %v4386 = vld [vmem:[%s5 + $0x120] sm:$0xff]
    %v4387 = vld [vmem:[%s5 + $0x128] sm:$0xff]
    %v4388 = vld [vmem:[%s5 + $0x130] sm:$0xff]
    %v4389 = vld [vmem:[%s5 + $0x138] sm:$0xff]
    %v4390 = vld [vmem:[%s5 + $0x140] sm:$0xff]
    %v4391 = vld [vmem:[%s5 + $0x148] sm:$0xff]
    %v4392 = vld [vmem:[%s5 + $0x150] sm:$0xff]
    %v4393 = vld [vmem:[%s5 + $0x158] sm:$0xff]
    %v4394 = vld [vmem:[%s5 + $0x160] sm:$0xff]
    %v4395 = vld [vmem:[%s5 + $0x168] sm:$0xff]
    %v4396 = vld [vmem:[%s5 + $0x170] sm:$0xff]
    %v4397 = vld [vmem:[%s5 + $0x178] sm:$0xff]
    %v4398 = vld [vmem:[%s5 + $0x180] sm:$0xff]
    %v4399 = vld [vmem:[%s5 + $0x188] sm:$0xff]
    %v4400 = vld [vmem:[%s5 + $0x190] sm:$0xff]
    %v4401 = vld [vmem:[%s5 + $0x198] sm:$0xff]
    %v4402 = vld [vmem:[%s5 + $0x1a0] sm:$0xff]
    %v4403 = vld [vmem:[%s5 + $0x1a8] sm:$0xff]
    %v4404 = vld [vmem:[%s5 + $0x1b0] sm:$0xff]
    %v4405 = vld [vmem:[%s5 + $0x1b8] sm:$0xff]
    %v4406 = vld [vmem:[%s5 + $0x1c0] sm:$0xff]
    %v4407 = vld [vmem:[%s5 + $0x1c8] sm:$0xff]
    %v4408 = vld [vmem:[%s5 + $0x1d0] sm:$0xff]
    %v4409 = vld [vmem:[%s5 + $0x1d8] sm:$0xff]
    %v4410 = vld [vmem:[%s5 + $0x1e0] sm:$0xff]
    %v4411 = vld [vmem:[%s5 + $0x1e8] sm:$0xff]
    %v4412 = vld [vmem:[%s5 + $0x1f0] sm:$0xff]
    %v4413 = vld [vmem:[%s5 + $0x1f8] sm:$0xff]
    %4414 = vmatprep.subr.mxu0 %v4351
    %4415 = vmatpush1.msra.mxu0 %v4350
    %4416 = vmatprep.subr.mxu0 %v4355
    %4417 = vmatpush1.msra.mxu0 %v4354
    %4418 = vmatprep.subr.mxu0 %v4359
    %4419 = vmatpush1.msra.mxu0 %v4358
    %4420 = vmatprep.subr.mxu0 %v4363
    %4421 = vmatpush1.msra.mxu0 %v4362
    %4422 = vmatprep.subr.mxu0 %v4367
    %4423 = vmatpush1.msra.mxu0 %v4366
    %4424 = vmatprep.subr.mxu0 %v4371
    %4425 = vmatpush1.msra.mxu0 %v4370
    %4426 = vmatprep.subr.mxu0 %v4375
    %4427 = vmatpush1.msra.mxu0 %v4374
    %4428 = vmatprep.subr.mxu0 %v4379
    %4429 = vmatpush1.msra.mxu0 %v4378
    %4430 = vmatprep.subr.mxu0 %v4383
    %4431 = vmatpush1.msra.mxu0 %v4382
    %4432 = vmatprep.subr.mxu0 %v4387
    %4433 = vmatpush1.msra.mxu0 %v4386
    %4434 = vmatprep.subr.mxu0 %v4391
    %4435 = vmatpush1.msra.mxu0 %v4390
    %4436 = vmatprep.subr.mxu0 %v4395
    %4437 = vmatpush1.msra.mxu0 %v4394
    %4438 = vmatprep.subr.mxu0 %v4399
    %4439 = vmatpush1.msra.mxu0 %v4398
    %4440 = vmatprep.subr.mxu0 %v4403
    %4441 = vmatpush1.msra.mxu0 %v4402
    %4442 = vmatprep.subr.mxu0 %v4407
    %4443 = vmatpush1.msra.mxu0 %v4406
    %4444 = vmatprep.subr.mxu0 %v4411
    %4445 = vmatpush1.msra.mxu0 %v4410
    %4446 = vmatprep.subr.mxu0 0.0
    %4447 = vmatpush1.msra.mxu0 0.0
    %4448 = vmatprep.subr.mxu0 0.0
    %4449 = vmatpush1.msra.mxu0 0.0
    %4450 = vmatprep.subr.mxu0 0.0
    %4451 = vmatpush1.msra.mxu0 0.0
    %4452 = vmatprep.subr.mxu0 0.0
    %4453 = vmatpush1.msra.mxu0 0.0
    %4454 = vmatprep.subr.mxu0 0.0
    %4455 = vmatpush1.msra.mxu0 0.0
    %4456 = vmatprep.subr.mxu0 0.0
    %4457 = vmatpush1.msra.mxu0 0.0
    %4458 = vmatprep.subr.mxu0 0.0
    %4459 = vmatpush1.msra.mxu0 0.0
    %4460 = vmatprep.subr.mxu0 0.0
    %4461 = vmatpush1.msra.mxu0 0.0
    %4462 = vmatprep.subr.mxu0 0.0
    %4463 = vmatpush1.msra.mxu0 0.0
    %4464 = vmatprep.subr.mxu0 0.0
    %4465 = vmatpush1.msra.mxu0 0.0
    %4466 = vmatprep.subr.mxu0 0.0
    %4467 = vmatpush1.msra.mxu0 0.0
    %4468 = vmatprep.subr.mxu0 0.0
    %4469 = vmatpush1.msra.mxu0 0.0
    %4470 = vmatprep.subr.mxu0 0.0
    %4471 = vmatpush1.msra.mxu0 0.0
    %4472 = vmatprep.subr.mxu0 0.0
    %4473 = vmatpush1.msra.mxu0 0.0
    %4474 = vmatprep.subr.mxu0 0.0
    %4475 = vmatpush1.msra.mxu0 0.0
    %4476 = vmatprep.subr.mxu0 0.0
    %4477 = vmatpush1.msra.mxu0 0.0
    %4478 = vmatprep.mubr.f32.mxu0 0.0
    %4479 = vmatmul.mubr.f32.gmra.mrb[0].mxu0 %v4344
    %v4480 = vpop.f32.mrb[0].mxu0
    %v4481 = vadd.f32 0.0, %v4480
    %v4482 = vpop.f32.mrb[0].mxu0
    %v4483 = vadd.f32 0.0, %v4482
    %4484 = vdwg.mxu0
    %4485 = vmatprep.subr.mxu0 %v4353
    %4486 = vmatpush1.msra.mxu0 %v4352
    %4487 = vmatprep.subr.mxu0 %v4357
    %4488 = vmatpush1.msra.mxu0 %v4356
    %4489 = vmatprep.subr.mxu0 %v4361
    %4490 = vmatpush1.msra.mxu0 %v4360
    %4491 = vmatprep.subr.mxu0 %v4365
    %4492 = vmatpush1.msra.mxu0 %v4364
    %4493 = vmatprep.subr.mxu0 %v4369
    %4494 = vmatpush1.msra.mxu0 %v4368
    %4495 = vmatprep.subr.mxu0 %v4373
    %4496 = vmatpush1.msra.mxu0 %v4372
    %4497 = vmatprep.subr.mxu0 %v4377
    %4498 = vmatpush1.msra.mxu0 %v4376
    %4499 = vmatprep.subr.mxu0 %v4381
    %4500 = vmatpush1.msra.mxu0 %v4380
    %4501 = vmatprep.subr.mxu0 %v4385
    %4502 = vmatpush1.msra.mxu0 %v4384
    %4503 = vmatprep.subr.mxu0 %v4389
    %4504 = vmatpush1.msra.mxu0 %v4388
    %4505 = vmatprep.subr.mxu0 %v4393
    %4506 = vmatpush1.msra.mxu0 %v4392
    %4507 = vmatprep.subr.mxu0 %v4397
    %4508 = vmatpush1.msra.mxu0 %v4396
    %4509 = vmatprep.subr.mxu0 %v4401
    %4510 = vmatpush1.msra.mxu0 %v4400
    %4511 = vmatprep.subr.mxu0 %v4405
    %4512 = vmatpush1.msra.mxu0 %v4404
    %4513 = vmatprep.subr.mxu0 %v4409
    %4514 = vmatpush1.msra.mxu0 %v4408
    %4515 = vmatprep.subr.mxu0 %v4413
    %4516 = vmatpush1.msra.mxu0 %v4412
    %4517 = vmatprep.subr.mxu0 0.0
    %4518 = vmatpush1.msra.mxu0 0.0
    %4519 = vmatprep.subr.mxu0 0.0
    %4520 = vmatpush1.msra.mxu0 0.0
    %4521 = vmatprep.subr.mxu0 0.0
    %4522 = vmatpush1.msra.mxu0 0.0
    %4523 = vmatprep.subr.mxu0 0.0
    %4524 = vmatpush1.msra.mxu0 0.0
    %4525 = vmatprep.subr.mxu0 0.0
    %4526 = vmatpush1.msra.mxu0 0.0
    %4527 = vmatprep.subr.mxu0 0.0
    %4528 = vmatpush1.msra.mxu0 0.0
    %4529 = vmatprep.subr.mxu0 0.0
    %4530 = vmatpush1.msra.mxu0 0.0
    %4531 = vmatprep.subr.mxu0 0.0
    %4532 = vmatpush1.msra.mxu0 0.0
    %4533 = vmatprep.subr.mxu0 0.0
    %4534 = vmatpush1.msra.mxu0 0.0
    %4535 = vmatprep.subr.mxu0 0.0
    %4536 = vmatpush1.msra.mxu0 0.0
    %4537 = vmatprep.subr.mxu0 0.0
    %4538 = vmatpush1.msra.mxu0 0.0
    %4539 = vmatprep.subr.mxu0 0.0
    %4540 = vmatpush1.msra.mxu0 0.0
    %4541 = vmatprep.subr.mxu0 0.0
    %4542 = vmatpush1.msra.mxu0 0.0
    %4543 = vmatprep.subr.mxu0 0.0
    %4544 = vmatpush1.msra.mxu0 0.0
    %4545 = vmatprep.subr.mxu0 0.0
    %4546 = vmatpush1.msra.mxu0 0.0
    %4547 = vmatprep.subr.mxu0 0.0
    %4548 = vmatpush1.msra.mxu0 0.0
    %4549 = vmatprep.mubr.f32.mxu0 0.0
    %4550 = vmatmul.mubr.f32.gmra.mrb[0].mxu0 %v4344
    %v4551 = vpop.f32.mrb[0].mxu0
    %v4552 = vadd.f32 0.0, %v4551
    %v4553 = vpop.f32.mrb[0].mxu0
    %v4554 = vadd.f32 0.0, %v4553
    %4555 = vdwg.mxu0
    %v4556 = vadd.f32 %v4346, %v4481
    %v4557 = vadd.f32 %v4347, %v4483
    %v4558 = vadd.f32 %v4348, %v4552
    %v4559 = vadd.f32 %v4349, %v4554
    %v4560 = vxor.u32 %v4556, 2147483648
    %v4561 = vxor.u32 %v4557, 2147483648
    %v4562 = vxor.u32 %v4558, 2147483648
    %v4563 = vmul.f32 %v4560, 1.442695
    %v4564 = vpow.pop %v4563
    %v4565 = vmul.f32 %v4561, 1.442695
    %v4566 = vpow.pop %v4565
    %v4567 = vmul.f32 %v4562, 1.442695
    %v4568 = vpow.pop %v4567
    %v4569 = vadd.f32 %v4564, 1.0
    %v4570 = vadd.f32 %v4566, 1.0
    %v4571 = vadd.f32 %v4568, 1.0
    %v4572 = vrcp.pop %v4569
    %v4573 = vmul.f32 1.0, %v4572
    %v4574 = vrcp.pop %v4570
    %v4575 = vmul.f32 1.0, %v4574
    %v4576 = vrcp.pop %v4571
    %v4577 = vmul.f32 1.0, %v4576
    %v4578 = vtanh.pop %v4559
    %v4579 = vmul.f32 %v4575, %v4342
    %v4580 = vmul.f32 %v4573, %v4578
    %v4581 = vadd.f32 %v4579, %v4580
    %v4582 = vtanh.pop %v4581
    %v4583 = vmul.f32 %v4577, %v4582
    %4584 = vst [vmem:[#allocation3 + $0x38] sm:$0xff] %v4583
    %s4585 = scalar_lea.vmem [#allocation10], 8
    %4586 = vst [vmem:[%s4585] sm:$0xff] %v4583
    %s4587 = scalar_lea.vmem [#allocation11], 8
    %4588 = vst [vmem:[%s4587] sm:$0xff] %v4581
    %v4589 = vld [vmem:[#allocation3] sm:$0xff]
    %v4590 = vld [vmem:[#allocation3 + $0x8] sm:$0xff]
    %v4591 = vld [vmem:[#allocation3 + $0x10] sm:$0xff]
    %v4592 = vld [vmem:[#allocation3 + $0x18] sm:$0xff]
    %v4593 = vld [vmem:[#allocation3 + $0x20] sm:$0xff]
    %v4594 = vld [vmem:[#allocation3 + $0x28] sm:$0xff]
    %v4595 = vld [vmem:[#allocation3 + $0x30] sm:$0xff]
    %v4596 = vld [vmem:[#allocation3 + $0x38] sm:$0xff]
    %v4597 = vld [vmem:[%s7] sm:$0xff]
    %v4598 = vld [vmem:[%s7 + $0x8] sm:$0xff]
    %v4599 = vld [vmem:[%s7 + $0x10] sm:$0xff]
    %v4600 = vld [vmem:[%s7 + $0x18] sm:$0xff]
    %v4601 = vld [vmem:[%s7 + $0x20] sm:$0xff]
    %v4602 = vld [vmem:[%s7 + $0x28] sm:$0xff]
    %v4603 = vld [vmem:[%s7 + $0x30] sm:$0xff]
    %v4604 = vld [vmem:[%s7 + $0x38] sm:$0xff]
    %v4605 = vld [vmem:[%s7 + $0x40] sm:$0xff]
    %v4606 = vld [vmem:[%s7 + $0x48] sm:$0xff]
    %v4607 = vld [vmem:[%s7 + $0x50] sm:$0xff]
    %v4608 = vld [vmem:[%s7 + $0x58] sm:$0xff]
    %v4609 = vld [vmem:[%s7 + $0x60] sm:$0xff]
    %v4610 = vld [vmem:[%s7 + $0x68] sm:$0xff]
    %v4611 = vld [vmem:[%s7 + $0x70] sm:$0xff]
    %v4612 = vld [vmem:[%s7 + $0x78] sm:$0xff]
    %v4613 = vld [vmem:[%s8] sm:$0x1]
    %v4615 = vlaneseq
    %v4616 = vshrl.u32 %v4615, 7
    %v4617 = vsub.s32 0, %v4616
    %v4618 = vrot.slane %v4613, %v4617
    %4620 = vmatprep.subr.mxu0 0.0
    %4621 = vmatpush1.msra.mxu0 %v4597
    %4622 = vmatprep.subr.mxu0 0.0
    %4623 = vmatpush1.msra.mxu0 %v4598
    %4624 = vmatprep.subr.mxu0 0.0
    %4625 = vmatpush1.msra.mxu0 %v4599
    %4626 = vmatprep.subr.mxu0 0.0
    %4627 = vmatpush1.msra.mxu0 %v4600
    %4628 = vmatprep.subr.mxu0 0.0
    %4629 = vmatpush1.msra.mxu0 %v4601
    %4630 = vmatprep.subr.mxu0 0.0
    %4631 = vmatpush1.msra.mxu0 %v4602
    %4632 = vmatprep.subr.mxu0 0.0
    %4633 = vmatpush1.msra.mxu0 %v4603
    %4634 = vmatprep.subr.mxu0 0.0
    %4635 = vmatpush1.msra.mxu0 %v4604
    %4636 = vmatprep.subr.mxu0 0.0
    %4637 = vmatpush1.msra.mxu0 %v4605
    %4638 = vmatprep.subr.mxu0 0.0
    %4639 = vmatpush1.msra.mxu0 %v4606
    %4640 = vmatprep.subr.mxu0 0.0
    %4641 = vmatpush1.msra.mxu0 %v4607
    %4642 = vmatprep.subr.mxu0 0.0
    %4643 = vmatpush1.msra.mxu0 %v4608
    %4644 = vmatprep.subr.mxu0 0.0
    %4645 = vmatpush1.msra.mxu0 %v4609
    %4646 = vmatprep.subr.mxu0 0.0
    %4647 = vmatpush1.msra.mxu0 %v4610
    %4648 = vmatprep.subr.mxu0 0.0
    %4649 = vmatpush1.msra.mxu0 %v4611
    %4650 = vmatprep.subr.mxu0 0.0
    %4651 = vmatpush1.msra.mxu0 %v4612
    %4652 = vmatprep.subr.mxu0 0.0
    %4653 = vmatpush1.msra.mxu0 0.0
    %4654 = vmatprep.subr.mxu0 0.0
    %4655 = vmatpush1.msra.mxu0 0.0
    %4656 = vmatprep.subr.mxu0 0.0
    %4657 = vmatpush1.msra.mxu0 0.0
    %4658 = vmatprep.subr.mxu0 0.0
    %4659 = vmatpush1.msra.mxu0 0.0
    %4660 = vmatprep.subr.mxu0 0.0
    %4661 = vmatpush1.msra.mxu0 0.0
    %4662 = vmatprep.subr.mxu0 0.0
    %4663 = vmatpush1.msra.mxu0 0.0
    %4664 = vmatprep.subr.mxu0 0.0
    %4665 = vmatpush1.msra.mxu0 0.0
    %4666 = vmatprep.subr.mxu0 0.0
    %4667 = vmatpush1.msra.mxu0 0.0
    %4668 = vmatprep.subr.mxu0 0.0
    %4669 = vmatpush1.msra.mxu0 0.0
    %4670 = vmatprep.subr.mxu0 0.0
    %4671 = vmatpush1.msra.mxu0 0.0
    %4672 = vmatprep.subr.mxu0 0.0
    %4673 = vmatpush1.msra.mxu0 0.0
    %4674 = vmatprep.subr.mxu0 0.0
    %4675 = vmatpush1.msra.mxu0 0.0
    %4676 = vmatprep.subr.mxu0 0.0
    %4677 = vmatpush1.msra.mxu0 0.0
    %4678 = vmatprep.subr.mxu0 0.0
    %4679 = vmatpush1.msra.mxu0 0.0
    %4680 = vmatprep.subr.mxu0 0.0
    %4681 = vmatpush1.msra.mxu0 0.0
    %4682 = vmatprep.subr.mxu0 0.0
    %4683 = vmatpush1.msra.mxu0 0.0
    %4684 = vmatprep.mubr.f32.mxu0 0.0
    %4685 = vmatmul.mubr.f32.gmra.mrb[0].mxu0 %v4589
    %v4686 = vpop.f32.mrb[0].mxu0
    %v4687 = vadd.f32 %v4618, %v4686
    %v4688 = vpop.f32.mrb[0].mxu0
    %4689 = vmatprep.mubr.f32.mxu0 0.0
    %4690 = vmatmul.mubr.f32.gmra.mrb[0].mxu0 %v4590
    %v4691 = vpop.f32.mrb[0].mxu0
    %v4692 = vadd.f32 %v4618, %v4691
    %v4693 = vpop.f32.mrb[0].mxu0
    %4694 = vmatprep.mubr.f32.mxu0 0.0
    %4695 = vmatmul.mubr.f32.gmra.mrb[0].mxu0 %v4591
    %v4696 = vpop.f32.mrb[0].mxu0
    %v4697 = vadd.f32 %v4618, %v4696
    %v4698 = vpop.f32.mrb[0].mxu0
    %4699 = vmatprep.mubr.f32.mxu0 0.0
    %4700 = vmatmul.mubr.f32.gmra.mrb[0].mxu0 %v4592
    %v4701 = vpop.f32.mrb[0].mxu0
    %v4702 = vadd.f32 %v4618, %v4701
    %v4703 = vpop.f32.mrb[0].mxu0
    %4704 = vmatprep.mubr.f32.mxu0 0.0
    %4705 = vmatmul.mubr.f32.gmra.mrb[0].mxu0 %v4593
    %v4706 = vpop.f32.mrb[0].mxu0
    %v4707 = vadd.f32 %v4618, %v4706
    %v4708 = vpop.f32.mrb[0].mxu0
    %4709 = vmatprep.mubr.f32.mxu0 0.0
    %4710 = vmatmul.mubr.f32.gmra.mrb[0].mxu0 %v4594
    %v4711 = vpop.f32.mrb[0].mxu0
    %v4712 = vadd.f32 %v4618, %v4711
    %v4713 = vpop.f32.mrb[0].mxu0
    %4714 = vmatprep.mubr.f32.mxu0 0.0
    %4715 = vmatmul.mubr.f32.gmra.mrb[0].mxu0 %v4595
    %v4716 = vpop.f32.mrb[0].mxu0
    %v4717 = vadd.f32 %v4618, %v4716
    %v4718 = vpop.f32.mrb[0].mxu0
    %4719 = vmatprep.mubr.f32.mxu0 0.0
    %4720 = vmatmul.mubr.f32.gmra.mrb[0].mxu0 %v4596
    %v4721 = vpop.f32.mrb[0].mxu0
    %v4722 = vadd.f32 %v4618, %v4721
    %v4723 = vpop.f32.mrb[0].mxu0
    %4724 = vdwg.mxu0
    %4725 = vst [vmem:[%s9] sm:$0xff] %v4687
    %4726 = vst [vmem:[%s9 + $0x8] sm:$0xff] %v4692
    %4727 = vst [vmem:[%s9 + $0x10] sm:$0xff] %v4697
    %4728 = vst [vmem:[%s9 + $0x18] sm:$0xff] %v4702
    %4729 = vst [vmem:[%s9 + $0x20] sm:$0xff] %v4707
    %4730 = vst [vmem:[%s9 + $0x28] sm:$0xff] %v4712
    %4731 = vst [vmem:[%s9 + $0x30] sm:$0xff] %v4717
    %4732 = vst [vmem:[%s9 + $0x38] sm:$0xff] %v4722
    // Predicated region
    $region50: #{_lambda_.1} parent=1 // pred_check
      _
    $region51: #{_lambda_.1} parent=1 // pred_check_branch
      %4734 = sbr.rel (0) target = $region53
    $region52: #{_lambda_.1} parent=1 // pred_region
      _
    $region53: #{_lambda_.1} parent=1 // pred_fallthru
      _
    // Predicated region
    $region54: #{_lambda_.1} parent=1 // pred_check
      _
    $region55: #{_lambda_.1} parent=1 // pred_check_branch
      %4736 = sbr.rel (0) target = $region57
    $region56: #{_lambda_.1} parent=1 // pred_region
      %s4738 = ssub.s32 256, 256
      %4739 = vsyncadd [#allocation6], %s4738
      %s4740 = sshll.u32 [#allocation10], 4
      %s4741 = int_to_ptr.vmem [resolvable:$true] %s4740
      %4746 = dma.vmem_to_hbm [thread:$0]  %s4741, 256, %s10, [#allocation6], 128, 128, 8
    $region57: #{_lambda_.1} parent=1 // pred_fallthru
      _
    // Predicated region
    $region58: #{_lambda_.1} parent=1 // pred_check
      _
    $region59: #{_lambda_.1} parent=1 // pred_check_branch
      %4748 = sbr.rel (0) target = $region61
    $region60: #{_lambda_.1} parent=1 // pred_region
      %s4750 = ssub.s32 256, 256
      %4751 = vsyncadd [#allocation12], %s4750
      %s4752 = sshll.u32 [#allocation11], 4
      %s4753 = int_to_ptr.vmem [resolvable:$true] %s4752
      %4758 = dma.vmem_to_hbm [thread:$0]  %s4753, 256, %s11, [#allocation12], 128, 128, 8
    $region61: #{_lambda_.1} parent=1 // pred_fallthru
      _
    // Predicated region
    $region62: #{_lambda_.1} parent=1 // pred_check
      _
    $region63: #{_lambda_.1} parent=1 // pred_check_branch
      %4760 = sbr.rel (0) target = $region65
    $region64: #{_lambda_.1} parent=1 // pred_region
      _
    $region65: #{_lambda_.1} parent=1 // pred_fallthru
      _
    // Predicated region
    $region66: #{_lambda_.1} parent=1 // pred_check
      _
    $region67: #{_lambda_.1} parent=1 // pred_check_branch
      %4762 = sbr.rel (0) target = $region69
    $region68: #{_lambda_.1} parent=1 // pred_region
      %4763 = dma.done [#allocation6], 256
    $region69: #{_lambda_.1} parent=1 // pred_fallthru
      _
    // Predicated region
    $region70: #{_lambda_.1} parent=1 // pred_check
      _
    $region71: #{_lambda_.1} parent=1 // pred_check_branch
      %4765 = sbr.rel (0) target = $region73
    $region72: #{_lambda_.1} parent=1 // pred_region
      %4766 = dma.done [#allocation12], 256
    $region73: #{_lambda_.1} parent=1 // pred_fallthru
      _
    %4767 = vsyncpa [#allocation5], 1
    %4768 = vsyncpa [#allocation8], 1
    %4769 = vsyncpa [#allocation6], 1
    %4770 = vsyncpa [#allocation12], 1

</llo_original>
